<compile_context>
chip_gen: v7x
topology: tpu7x:2x2x1
jax: 0.10.0
libtpu: 0.0.40
codegen_flags: <defaults>
</compile_context>

<pallas_src>
import functools
import math

import jax
import jax.numpy as jnp
from jax.experimental import pallas as pl
from jax.experimental.pallas import tpu as pltpu


# ============================================================================
# Decoder Pallas kernel: TB (batch,time) slabs, all pred_steps, per grid block
# ============================================================================
def _decoder_kernel(x_ref, rt_ref, rec_ref, send_ref, rect_ref,
                    w1s_ref, w1r_ref, b1_ref, w2_ref, b2_ref,
                    exp_ref, col_ref,
                    wo1x_ref, wo1a_ref, bo1_ref,
                    wo2_ref, bo2_ref, wo3_ref, bo3_ref,
                    out_ref, *, pred_steps, matmul_dtype):
    f32 = jnp.float32
    cdt = matmul_dtype                     # MXU operand dtype (bf16 on v6e/v7x)

    x = x_ref[...].astype(f32)             # [TB*N, D]  node states (recurrent)
    rec = rec_ref[...]                     # [TB*E, TB*N]  block-diag rel_rec
    send = send_ref[...]                   # [TB*E, TB*N]  block-diag rel_send
    rect = rect_ref[...]                   # [TB*N, TB*E]  block-diag rel_rec^T

    # Weights / biases (loop-invariant, loaded once per grid block).
    w1s = w1s_ref[...]                     # [D, ETu*mh]   sender half of msg_fc1
    w1r = w1r_ref[...]                     # [D, ETu*mh]   receiver half
    b1 = b1_ref[...]
    w2 = w2_ref[...]                       # [ETu*mh, ETu*mo]  block-diag msg_fc2
    b2 = b2_ref[...]
    wo1x = wo1x_ref[...]                   # [D, nh]   x half of out_fc1
    wo1a = wo1a_ref[...]                   # [mo, nh]  agg half of out_fc1
    bo1 = bo1_ref[...]
    wo2 = wo2_ref[...]
    bo2 = bo2_ref[...]
    wo3 = wo3_ref[...]
    bo3 = bo3_ref[...]
    col = col_ref[...]                     # [ETu*mo, mo]

    # rel_type weighting expanded once (loop-invariant across pred steps):
    # rt_rep[r, t*mo+j] == rel_type[r, t]
    rt_rep = jnp.dot(rt_ref[...], exp_ref[...], preferred_element_type=f32)

    # Fused pred_steps recurrence (static unroll; state never leaves VMEM).
    for s in range(pred_steps):
        # one-hot gathers: exact in f32
        senders = jnp.dot(send, x, preferred_element_type=f32)      # [TB*E, D]
        receivers = jnp.dot(rec, x, preferred_element_type=f32)     # [TB*E, D]

        # all edge-type msg_fc1 at once, concat-free (split weights)
        h = (jnp.dot(senders.astype(cdt), w1s, preferred_element_type=f32)
             + jnp.dot(receivers.astype(cdt), w1r, preferred_element_type=f32)
             + b1)
        h = jnp.maximum(h, 0.0)                                      # [TB*E, ETu*mh]
        # all edge-type msg_fc2 at once (block-diagonal weight)
        m = jnp.maximum(
            jnp.dot(h.astype(cdt), w2, preferred_element_type=f32) + b2, 0.0)
        # TODO(synk): dropout omitted — module default do_prob=0.0 makes it a no-op.

        # per-edge-type weighting + sum over types, via constant collapse matmul
        msgs = jnp.dot(m * rt_rep, col, preferred_element_type=f32)  # [TB*E, mo]

        # aggregate at receivers with precomputed (block-diag) rel_rec^T
        agg = jnp.dot(rect, msgs, preferred_element_type=f32)        # [TB*N, mo]

        # output MLP, concat-free (split out_fc1)
        h1 = jnp.maximum(
            jnp.dot(x.astype(cdt), wo1x, preferred_element_type=f32)
            + jnp.dot(agg.astype(cdt), wo1a, preferred_element_type=f32)
            + bo1, 0.0)
        h2 = jnp.maximum(
            jnp.dot(h1.astype(cdt), wo2, preferred_element_type=f32) + bo2, 0.0)
        pred = jnp.dot(h2.astype(cdt), wo3, preferred_element_type=f32) + bo3

        x = x + pred                                                 # residual, f32
        # NOTE: store stays D(=4)-lane wide; flattening to an N*D-lane row would
        # require an in-kernel relayout that costs more than the masked stores
        # at this fixed module size (n_in_node=4).
        out_ref[s, :, :] = x.astype(out_ref.dtype)


def _round_up(v, m):
    return -(-v // m) * m


# ============================================================================
# MLPDecoder.forward (Pallas-backed), jit'ed so all glue fuses.
# ============================================================================
@functools.partial(jax.jit,
                   static_argnames=("pred_steps", "skip_first",
                                    "matmul_dtype", "slab_block"))
def mlp_decoder_forward(params, inputs, rel_type, rel_rec, rel_send,
                        pred_steps, skip_first=False,
                        matmul_dtype=jnp.bfloat16, slab_block=8):
    """inputs [B,N,T,D], rel_type [B,E,ET] -> [B,N,T-1,D] (PyTorch layout)."""
    (w1, b1, w2, b2, wo1, bo1, wo2, bo2, wo3, bo3) = params
    f32 = jnp.float32
    B, N, T, D = inputs.shape
    E, ET = rel_type.shape[1], rel_type.shape[2]
    mh, mo, nh = w1.shape[-1], w2.shape[-1], wo1.shape[-1]
    assert pred_steps <= T

    start = 1 if skip_first else 0
    etu = ET - start
    assert etu >= 1, "need at least one active edge type"
    used = list(range(start, ET))

    # ---- host-side weight packing (traced once under jit) -------------------
    w1s = jnp.concatenate([w1[t][:D, :] for t in used], axis=1)      # [D, etu*mh]
    w1r = jnp.concatenate([w1[t][D:, :] for t in used], axis=1)      # [D, etu*mh]
    b1c = jnp.concatenate([b1[t] for t in used], axis=0).reshape(1, etu * mh)
    w2bd = jnp.zeros((etu * mh, etu * mo), f32)
    for k, t in enumerate(used):                                     # block-diag msg_fc2
        w2bd = w2bd.at[k * mh:(k + 1) * mh, k * mo:(k + 1) * mo].set(w2[t])
    b2c = jnp.concatenate([b2[t] for t in used], axis=0).reshape(1, etu * mo)
    # rel_type weighting as two constant matmuls (no in-kernel lane slicing):
    expand = jnp.kron(jnp.eye(etu, dtype=f32), jnp.ones((1, mo), f32))    # [etu, etu*mo]
    collapse = jnp.kron(jnp.ones((etu, 1), f32), jnp.eye(mo, dtype=f32))  # [etu*mo, mo]
    wo1x, wo1a = wo1[:D, :], wo1[D:, :]

    cdt = matmul_dtype  # MXU operand dtype; accumulation / epilogue stay f32.
    w1s_c, w1r_c, w2bd_c, wo1x_c, wo1a_c, wo2_c, wo3_c = (
        a.astype(cdt) for a in (w1s, w1r, w2bd, wo1x, wo1a, wo2, wo3))
    b1c, b2c, bo1_c, bo2_c, bo3_c = (
        a.astype(f32) for a in (b1c, b2c, bo1, bo2, bo3))

    # ---- time-major slabs ----------------------------------------------------
    x = jnp.transpose(inputs.astype(f32), (0, 2, 1, 3))     # [B, T, N, D]
    x0 = x[:, 0::pred_steps]                                # [B, Tp, N, D]
    Tp = x0.shape[1]
    BT = B * Tp
    rt_used = rel_type[..., start:].astype(f32)             # [B, E, etu]
    rt_bt = jnp.broadcast_to(rt_used[:, None], (B, Tp, E, etu)).reshape(BT, E, etu)
    x_bt = x0.reshape(BT, N, D)

    # ---- slab batching per grid step ----------------------------------------
    # TB slabs fused per grid block so the edge MLP sees TB*E rows and the
    # output MLP TB*N rows.  TB is rounded so both row counts are sublane (8)
    # aligned, and capped so >= 2 "parallel" grid blocks remain (v7x megacore)
    # whenever BT allows it.
    align_n = 8 // math.gcd(N, 8)
    align_e = 8 // math.gcd(E, 8)
    align = (align_n * align_e) // math.gcd(align_n, align_e)
    tb = _round_up(max(1, slab_block), align)
    if BT > align:
        tb = min(tb, _round_up(-(-BT // 2), align))
    grid = -(-BT // tb)
    btp = grid * tb
    if btp != BT:   # pad with zero slabs; padded rows are dropped afterwards
        x_bt = jnp.concatenate([x_bt, jnp.zeros((btp - BT, N, D), f32)], axis=0)
        rt_bt = jnp.concatenate([rt_bt, jnp.zeros((btp - BT, E, etu), f32)], axis=0)
    x_rows = x_bt.reshape(btp * N, D)
    rt_rows = rt_bt.reshape(btp * E, etu)

    # Block-diagonal incidence matrices (host constants): gathers become plain
    # MXU matmuls over TB slabs at once; rel_rec^T is precomputed (no in-kernel
    # transpose).
    eye_tb = jnp.eye(tb, dtype=f32)
    rec_bd = jnp.kron(eye_tb, rel_rec.astype(f32))          # [tb*E, tb*N]
    send_bd = jnp.kron(eye_tb, rel_send.astype(f32))        # [tb*E, tb*N]
    rect_bd = jnp.kron(eye_tb, rel_rec.astype(f32).T)       # [tb*N, tb*E]

    r_n, r_e = tb * N, tb * E
    kernel = functools.partial(_decoder_kernel, pred_steps=pred_steps,
                               matmul_dtype=cdt)

    def _const(shape):
        # Constant index_map -> Pallas fetches these once (no per-step re-DMA).
        return pl.BlockSpec(shape, lambda i, _n=len(shape): (0,) * _n)

    out = pl.pallas_call(
        kernel,
        grid=(grid,),
        in_specs=[
            pl.BlockSpec((r_n, D), lambda i: (i, 0)),       # node states (TB slabs)
            pl.BlockSpec((r_e, etu), lambda i: (i, 0)),     # rel_type (used types)
            _const((r_e, r_n)), _const((r_e, r_n)), _const((r_n, r_e)),
            _const((D, etu * mh)), _const((D, etu * mh)), _const((1, etu * mh)),
            _const((etu * mh, etu * mo)), _const((1, etu * mo)),
            _const((etu, etu * mo)), _const((etu * mo, mo)),
            _const((D, nh)), _const((mo, nh)), _const((1, nh)),
            _const((nh, nh)), _const((1, nh)),
            _const((nh, D)), _const((1, D)),
        ],
        out_specs=pl.BlockSpec((pred_steps, r_n, D), lambda i: (0, i, 0)),
        out_shape=jax.ShapeDtypeStruct((pred_steps, btp * N, D), f32),
        compiler_params=pltpu.CompilerParams(
            dimension_semantics=("parallel",)),
    )(x_rows, rt_rows, rec_bd, send_bd, rect_bd,
      w1s_c, w1r_c, b1c, w2bd_c, b2c, expand, collapse,
      wo1x_c, wo1a_c, bo1_c, wo2_c, bo2_c, wo3_c, bo3_c)

    # ---- un-flatten + interleave (pure glue, fused under jit) ----------------
    out = out.reshape(pred_steps, btp, N, D)[:, :BT]
    out = out.reshape(pred_steps, B, Tp, N, D)
    out = jnp.transpose(out, (1, 2, 0, 3, 4)).reshape(B, Tp * pred_steps, N, D)
    out = out[:, :T - 1]                                    # [B, T-1, N, D]
    return jnp.transpose(out, (0, 2, 1, 3))                 # [B, N, T-1, D]


# ============================================================================
# Encoder Pallas kernel: whole MLPEncoder in one block (BN couples the batch).
# ============================================================================
def _encoder_kernel(x_ref, rec_ref, send_ref, rect_ref,
                    w1a_ref, b1a_ref, w1b_ref, b1b_ref, g1_ref, be1_ref,
                    w2s_ref, w2r_ref, b2a_ref, w2b_ref, b2b_ref, g2_ref, be2_ref,
                    w3a_ref, b3a_ref, w3b_ref, b3b_ref, g3_ref, be3_ref,
                    w4s_ref, w4r_ref, w4k_ref, b4a_ref, w4b_ref, b4b_ref,
                    g4_ref, be4_ref,
                    wo_ref, bo_ref,
                    out_ref, *, inv_n, matmul_dtype):
    f32 = jnp.float32
    cdt = matmul_dtype

    def mm(a, b):
        return jnp.dot(a.astype(cdt), b.astype(cdt), preferred_element_type=f32)

    def elu(v):
        return jnp.where(v > 0.0, v, jnp.exp(v) - 1.0)

    # TODO(synk): BatchNorm1d implemented in training mode (batch statistics),
    # matching a freshly-constructed nn.Module; eval mode would use constant
    # running stats instead.
    def bn(v, gamma, beta):
        mu = jnp.mean(v, axis=0, keepdims=True)
        var = jnp.mean(jnp.square(v - mu), axis=0, keepdims=True)
        return (v - mu) * jax.lax.rsqrt(var + 1e-5) * gamma + beta

    x = x_ref[...].astype(f32)                               # [B*N, T*D]
    rec = rec_ref[...]                                       # [B*E, B*N]
    send = send_ref[...]                                     # [B*E, B*N]
    rect = rect_ref[...]                                     # [B*N, B*E]

    # MLP 1 (per-node)
    h = elu(mm(x, w1a_ref[...]) + b1a_ref[...])
    h = elu(mm(h, w1b_ref[...]) + b1b_ref[...])
    h1 = bn(h, g1_ref[...], be1_ref[...])                    # [B*N, H]

    # node2edge #1 — exact one-hot gathers in f32 (block-diag over the batch)
    snd = jnp.dot(send, h1, preferred_element_type=f32)      # [B*E, H]
    rcv = jnp.dot(rec, h1, preferred_element_type=f32)       # [B*E, H]

    # MLP 2 (per-edge), fc1 split [senders | receivers] -> no lane concat
    h = elu(mm(snd, w2s_ref[...]) + mm(rcv, w2r_ref[...]) + b2a_ref[...])
    h = elu(mm(h, w2b_ref[...]) + b2b_ref[...])
    x_skip = bn(h, g2_ref[...], be2_ref[...])                # [B*E, H]

    # edge2node: rel_rec^T @ edges / N (precomputed transpose)
    nodes = jnp.dot(rect, x_skip, preferred_element_type=f32) * inv_n   # [B*N, H]

    # MLP 3 (per-node)
    h = elu(mm(nodes, w3a_ref[...]) + b3a_ref[...])
    h = elu(mm(h, w3b_ref[...]) + b3b_ref[...])
    h3 = bn(h, g3_ref[...], be3_ref[...])                    # [B*N, H]

    # node2edge #2
    snd2 = jnp.dot(send, h3, preferred_element_type=f32)
    rcv2 = jnp.dot(rec, h3, preferred_element_type=f32)

    # MLP 4 (per-edge), fc1 split [senders | receivers | skip] -> no lane concat
    h = elu(mm(snd2, w4s_ref[...]) + mm(rcv2, w4r_ref[...])
            + mm(x_skip, w4k_ref[...]) + b4a_ref[...])
    h = elu(mm(h, w4b_ref[...]) + b4b_ref[...])
    h4 = bn(h, g4_ref[...], be4_ref[...])                    # [B*E, H]

    # fc_out
    logits = mm(h4, wo_ref[...]) + bo_ref[...]
    out_ref[...] = logits.astype(out_ref.dtype)


@functools.partial(jax.jit, static_argnames=("matmul_dtype",))
def mlp_encoder_forward(enc_params, inputs, rel_rec, rel_send,
                        matmul_dtype=jnp.float32):
    """inputs [B,N,T,D] -> logits [B,E,ET] (training-mode batch norm)."""
    (w1a, b1a, w1b, b1b, g1, be1,
     w2a, b2a, w2b, b2b, g2, be2,
     w3a, b3a, w3b, b3b, g3, be3,
     w4a, b4a, w4b, b4b, g4, be4,
     wo, bo) = enc_params
    f32 = jnp.float32
    B, N, T, D = inputs.shape
    H = w1a.shape[1]
    E = rel_rec.shape[0]
    ET = wo.shape[1]

    x_flat = inputs.astype(f32).reshape(B * N, T * D)        # == view(B, N, -1)
    eye_b = jnp.eye(B, dtype=f32)
    rec_bd = jnp.kron(eye_b, rel_rec.astype(f32))            # [B*E, B*N]
    send_bd = jnp.kron(eye_b, rel_send.astype(f32))          # [B*E, B*N]
    rect_bd = jnp.kron(eye_b, rel_rec.astype(f32).T)         # [B*N, B*E]

    # Split the concat-taking fc1 weights on the host (no in-kernel concat).
    w2s, w2r = w2a[:H, :], w2a[H:, :]
    w4s, w4r, w4k = w4a[:H, :], w4a[H:2 * H, :], w4a[2 * H:, :]

    kernel = functools.partial(_encoder_kernel, inv_n=1.0 / N,
                               matmul_dtype=matmul_dtype)
    args = [x_flat, rec_bd, send_bd, rect_bd,
            w1a, b1a, w1b, b1b, g1, be1,
            w2s, w2r, b2a, w2b, b2b, g2, be2,
            w3a, b3a, w3b, b3b, g3, be3,
            w4s, w4r, w4k, b4a, w4b, b4b, g4, be4,
            wo, bo]
    args = [a.astype(f32) for a in args]

    # Single block, whole (tiny) arrays in VMEM: BN statistics need every
    # batch row at once, and total footprint is a few hundred KiB.
    logits = pl.pallas_call(
        kernel,
        out_shape=jax.ShapeDtypeStruct((B * E, ET), f32),
    )(*args)
    return logits.reshape(B, E, ET)


# ============================================================================
# Gumbel-softmax glue (host-seeded RNG; runs between the two kernels).
# ============================================================================
def sample_gumbel(key, shape, eps=1e-10):
    u = jax.random.uniform(key, shape, jnp.float32)
    return -jnp.log(eps - jnp.log(u + eps))


def my_softmax(x, axis=-1):
    # Faithful to the reference `my_softmax`: transpose(axis, 0),
    # softmax over dim=1 of the transposed tensor, transpose back.
    t = jnp.swapaxes(x, axis, 0)
    s = jax.nn.softmax(t, axis=1)
    return jnp.swapaxes(s, axis, 0)


def gumbel_softmax_from_noise(logits, noise, tau=1.0):
    return my_softmax((logits + noise) / tau, axis=-1)


def graph_model_forward(enc_params, dec_params, x, rel_rec, rel_send,
                        pred_steps, gumbel_noise, tau=0.5,
                        dec_matmul_dtype=jnp.bfloat16):
    """Full GraphModel.forward: encoder -> gumbel_softmax -> decoder."""
    logits = mlp_encoder_forward(enc_params, x, rel_rec, rel_send)
    edges = gumbel_softmax_from_noise(logits, gumbel_noise, tau=tau)
    output = mlp_decoder_forward(dec_params, x, edges, rel_rec, rel_send,
                                 pred_steps=pred_steps, skip_first=False,
                                 matmul_dtype=dec_matmul_dtype)
    return output, logits, edges


# ============================================================================
# Pure-JAX references (mirror the PyTorch module) for correctness checks.
# ============================================================================
def _ref_single_step(x, rel_rec, rel_send, rel_type, params, skip_first):
    (w1, b1, w2, b2, wo1, bo1, wo2, bo2, wo3, bo3) = params
    receivers = jnp.matmul(rel_rec, x)
    senders = jnp.matmul(rel_send, x)
    pre_msg = jnp.concatenate([senders, receivers], axis=-1)
    all_msgs = jnp.zeros(pre_msg.shape[:-1] + (w2.shape[-1],), jnp.float32)
    start = 1 if skip_first else 0
    for i in range(start, w1.shape[0]):
        h = jax.nn.relu(pre_msg @ w1[i] + b1[i])
        m = jax.nn.relu(h @ w2[i] + b2[i])
        all_msgs = all_msgs + m * rel_type[..., i:i + 1]
    agg = jnp.swapaxes(jnp.matmul(jnp.swapaxes(all_msgs, -2, -1), rel_rec), -2, -1)
    aug = jnp.concatenate([x, agg], axis=-1)
    h1 = jax.nn.relu(aug @ wo1 + bo1)
    h2 = jax.nn.relu(h1 @ wo2 + bo2)
    pred = h2 @ wo3 + bo3
    return x + pred


def ref_forward(params, inputs, rel_type, rel_rec, rel_send, pred_steps,
                skip_first=False):
    x = jnp.transpose(inputs, (0, 2, 1, 3))
    B, T, N, D = x.shape
    E, ET = rel_type.shape[1], rel_type.shape[2]
    rt = jnp.broadcast_to(rel_type[:, None], (B, T, E, ET))
    last_pred = x[:, 0::pred_steps]
    curr_rt = rt[:, 0::pred_steps]
    preds = []
    for _ in range(pred_steps):
        last_pred = _ref_single_step(last_pred, rel_rec, rel_send, curr_rt,
                                     params, skip_first)
        preds.append(last_pred)
    Tp = preds[0].shape[1]
    output = jnp.zeros((B, Tp * pred_steps, N, D), jnp.float32)
    for i, p in enumerate(preds):
        output = output.at[:, i::pred_steps].set(p)
    return jnp.transpose(output[:, :T - 1], (0, 2, 1, 3))


def ref_encoder(enc_params, inputs, rel_rec, rel_send):
    (w1a, b1a, w1b, b1b, g1, be1,
     w2a, b2a, w2b, b2b, g2, be2,
     w3a, b3a, w3b, b3b, g3, be3,
     w4a, b4a, w4b, b4b, g4, be4,
     wo, bo) = enc_params
    B, N = inputs.shape[0], inputs.shape[1]

    def elu(v):
        return jnp.where(v > 0.0, v, jnp.exp(v) - 1.0)

    def bn(v, gamma, beta):
        flat = v.reshape(-1, v.shape[-1])
        mu = flat.mean(0, keepdims=True)
        var = jnp.mean(jnp.square(flat - mu), axis=0, keepdims=True)
        out = (flat - mu) / jnp.sqrt(var + 1e-5) * gamma + beta
        return out.reshape(v.shape)

    def mlp(v, wa, ba, wb, bb, gamma, beta):
        h = elu(v @ wa + ba)
        h = elu(h @ wb + bb)
        return bn(h, gamma, beta)

    def node2edge(v):
        receivers = jnp.einsum('en,bnh->beh', rel_rec, v)
        senders = jnp.einsum('en,bnh->beh', rel_send, v)
        return jnp.concatenate([senders, receivers], axis=-1)

    x = inputs.astype(jnp.float32).reshape(B, N, -1)
    x = mlp(x, w1a, b1a, w1b, b1b, g1, be1)
    x = node2edge(x)
    x = mlp(x, w2a, b2a, w2b, b2b, g2, be2)
    x_skip = x
    incoming = jnp.einsum('en,beh->bnh', rel_rec, x)
    x = incoming / incoming.shape[1]
    x = mlp(x, w3a, b3a, w3b, b3b, g3, be3)
    x = node2edge(x)
    x = jnp.concatenate([x, x_skip], axis=-1)
    x = mlp(x, w4a, b4a, w4b, b4b, g4, be4)
    return x @ wo + bo


# ============================================================================
if __name__ == "__main__":
    # GraphModel config: decoder fixed to n_in_node=4, edge_types=2,
    # msg_hid=msg_out=n_hid=16; encoder n_in = T*D = 32, hidden = 32, out = 2.
    B, N, T, D = 4, 5, 8, 4
    ET, MSG_HID, MSG_OUT, N_HID = 2, 16, 16, 16
    ENC_HID = 32
    PRED_STEPS = 2
    E = N * (N - 1)   # fully-connected directed graph minus self-loops

    key = jax.random.PRNGKey(0)
    ks = jax.random.split(key, 24)

    def init(k, shape, fan_in):
        return jax.random.normal(k, shape, jnp.float32) / jnp.sqrt(float(fan_in))

    # ---- decoder params ------------------------------------------------------
    dec_params = (
        init(ks[0], (ET, 2 * D, MSG_HID), 2 * D),         # msg_fc1 W
        init(ks[1], (ET, MSG_HID), 2 * D),                # msg_fc1 b
        init(ks[2], (ET, MSG_HID, MSG_OUT), MSG_HID),     # msg_fc2 W
        init(ks[3], (ET, MSG_OUT), MSG_HID),              # msg_fc2 b
        init(ks[4], (D + MSG_OUT, N_HID), D + MSG_OUT),   # out_fc1 W
        init(ks[5], (1, N_HID), D + MSG_OUT),             # out_fc1 b
        init(ks[6], (N_HID, N_HID), N_HID),               # out_fc2 W
        init(ks[7], (1, N_HID), N_HID),                   # out_fc2 b
        init(ks[8], (N_HID, D), N_HID),                   # out_fc3 W
        init(ks[9], (1, D), N_HID),                       # out_fc3 b
    )

    # ---- encoder params (weights xavier-ish, biases 0.1, BN gamma=1 beta=0) --
    F_in = T * D

    def lin(kw, n_in, n_out):
        return (init(kw, (n_in, n_out), n_in),
                jnp.full((1, n_out), 0.1, jnp.float32))

    ones_h = jnp.ones((1, ENC_HID), jnp.float32)
    zeros_h = jnp.zeros((1, ENC_HID), jnp.float32)
    w1a, b1a = lin(ks[12], F_in, ENC_HID)
    w1b, b1b = lin(ks[13], ENC_HID, ENC_HID)
    w2a, b2a = lin(ks[14], 2 * ENC_HID, ENC_HID)
    w2b, b2b = lin(ks[15], ENC_HID, ENC_HID)
    w3a, b3a = lin(ks[16], ENC_HID, ENC_HID)
    w3b, b3b = lin(ks[17], ENC_HID, ENC_HID)
    w4a, b4a = lin(ks[18], 3 * ENC_HID, ENC_HID)
    w4b, b4b = lin(ks[19], ENC_HID, ENC_HID)
    wo_e, bo_e = lin(ks[20], ENC_HID, ET)
    enc_params = (w1a, b1a, w1b, b1b, ones_h, zeros_h,
                  w2a, b2a, w2b, b2b, ones_h, zeros_h,
                  w3a, b3a, w3b, b3b, ones_h, zeros_h,
                  w4a, b4a, w4b, b4b, ones_h, zeros_h,
                  wo_e, bo_e)

    # ---- graph structure & inputs -------------------------------------------
    pairs = [(i, j) for i in range(N) for j in range(N) if i != j]
    rel_rec = jax.nn.one_hot(jnp.array([i for i, j in pairs]), N, dtype=jnp.float32)
    rel_send = jax.nn.one_hot(jnp.array([j for i, j in pairs]), N, dtype=jnp.float32)

    inputs = jax.random.normal(ks[10], (B, N, T, D), jnp.float32)      # [B, N, T, D]
    rel_type = jax.nn.softmax(
        jax.random.normal(ks[11], (B, E, ET), jnp.float32), axis=-1)   # [B, E, ET]
    gumbel_noise = sample_gumbel(ks[21], (B, E, ET))

    # ---- decoder kernel checks ----------------------------------------------
    ref = jax.block_until_ready(ref_forward(
        dec_params, inputs, rel_type, rel_rec, rel_send, PRED_STEPS,
        skip_first=False))

    out_f32 = jax.block_until_ready(mlp_decoder_forward(
        dec_params, inputs, rel_type, rel_rec, rel_send,
        pred_steps=PRED_STEPS, skip_first=False, matmul_dtype=jnp.float32))
    assert out_f32.shape == (B, N, T - 1, D), out_f32.shape
    err_f32 = float(jnp.max(jnp.abs(out_f32 - ref)))
    assert err_f32 < 1e-2, f"decoder f32 path mismatch vs reference: {err_f32}"

    out_bf16 = jax.block_until_ready(mlp_decoder_forward(
        dec_params, inputs, rel_type, rel_rec, rel_send,
        pred_steps=PRED_STEPS, skip_first=False, matmul_dtype=jnp.bfloat16))
    err_bf16 = float(jnp.max(jnp.abs(out_bf16 - ref)))
    assert err_bf16 < 1e-1, f"decoder bf16 path mismatch vs reference: {err_bf16}"

    out_sf = jax.block_until_ready(mlp_decoder_forward(
        dec_params, inputs, rel_type, rel_rec, rel_send,
        pred_steps=PRED_STEPS, skip_first=True, matmul_dtype=jnp.float32))
    ref_sf = jax.block_until_ready(ref_forward(
        dec_params, inputs, rel_type, rel_rec, rel_send, PRED_STEPS,
        skip_first=True))
    err_sf = float(jnp.max(jnp.abs(out_sf - ref_sf)))
    assert err_sf < 1e-2, f"decoder skip_first path mismatch vs reference: {err_sf}"

    # ---- encoder kernel check ------------------------------------------------
    logits_pl = jax.block_until_ready(
        mlp_encoder_forward(enc_params, inputs, rel_rec, rel_send))
    logits_ref = jax.block_until_ready(
        ref_encoder(enc_params, inputs, rel_rec, rel_send))
    assert logits_pl.shape == (B, E, ET), logits_pl.shape
    err_enc = float(jnp.max(jnp.abs(logits_pl - logits_ref)))
    assert err_enc < 1e-2, f"encoder mismatch vs reference: {err_enc}"

    # ---- full GraphModel forward (encoder -> gumbel softmax -> decoder) ------
    out_gm, logits_gm, edges_gm = graph_model_forward(
        enc_params, dec_params, inputs, rel_rec, rel_send, PRED_STEPS,
        gumbel_noise, tau=0.5, dec_matmul_dtype=jnp.float32)
    out_gm = jax.block_until_ready(out_gm)
    edges_ref = gumbel_softmax_from_noise(logits_ref, gumbel_noise, tau=0.5)
    out_gm_ref = jax.block_until_ready(ref_forward(
        dec_params, inputs, edges_ref, rel_rec, rel_send, PRED_STEPS,
        skip_first=False))
    assert out_gm.shape == (B, N, T - 1, D), out_gm.shape
    err_gm = float(jnp.max(jnp.abs(out_gm - out_gm_ref)))
    assert err_gm < 1e-2, f"GraphModel f32 path mismatch vs reference: {err_gm}"

    # Default (bf16 decoder operands) production path: run + loose check.
    out_gm_bf, _, _ = graph_model_forward(
        enc_params, dec_params, inputs, rel_rec, rel_send, PRED_STEPS,
        gumbel_noise, tau=0.5, dec_matmul_dtype=jnp.bfloat16)
    out_gm_bf = jax.block_until_ready(out_gm_bf)
    err_gm_bf = float(jnp.max(jnp.abs(out_gm_bf - out_gm_ref)))
    assert err_gm_bf < 1e-1, f"GraphModel bf16 path mismatch vs reference: {err_gm_bf}"

    print("KERNEL_OK")
</pallas_src>

<mosaic_0001>
module attributes {stable_mosaic.version = 11 : i64} {
  func.func @_decoder_kernel(%arg0: i32, %arg1: memref<40x4xf32, #tpu.memory_space<vmem>>, %arg2: memref<160x2xf32, #tpu.memory_space<vmem>>, %arg3: memref<160x40xf32, #tpu.memory_space<vmem>>, %arg4: memref<160x40xf32, #tpu.memory_space<vmem>>, %arg5: memref<40x160xf32, #tpu.memory_space<vmem>>, %arg6: memref<4x32xf32, #tpu.memory_space<vmem>>, %arg7: memref<4x32xf32, #tpu.memory_space<vmem>>, %arg8: memref<1x32xf32, #tpu.memory_space<vmem>>, %arg9: memref<32x32xf32, #tpu.memory_space<vmem>>, %arg10: memref<1x32xf32, #tpu.memory_space<vmem>>, %arg11: memref<2x32xf32, #tpu.memory_space<vmem>>, %arg12: memref<32x16xf32, #tpu.memory_space<vmem>>, %arg13: memref<4x16xf32, #tpu.memory_space<vmem>>, %arg14: memref<16x16xf32, #tpu.memory_space<vmem>>, %arg15: memref<1x16xf32, #tpu.memory_space<vmem>>, %arg16: memref<16x16xf32, #tpu.memory_space<vmem>>, %arg17: memref<1x16xf32, #tpu.memory_space<vmem>>, %arg18: memref<16x4xf32, #tpu.memory_space<vmem>>, %arg19: memref<1x4xf32, #tpu.memory_space<vmem>>, %arg20: memref<2x40x4xf32, #tpu.memory_space<vmem>>) attributes {dimension_semantics = [#tpu.dimension_semantics<parallel>], iteration_bounds = array<i64: 2>, scalar_prefetch = 0 : i64, scratch_operands = 0 : i64, tpu.core_type = #tpu.core_type<tc>, window_params = [{transform_indices = @transform_0, window_bounds = array<i64: 40, 4>}, {transform_indices = @transform_1, window_bounds = array<i64: 160, 2>}, {pipeline_mode = #tpu.pipeline_mode<synchronous>, transform_indices = @transform_2, window_bounds = array<i64: 160, 40>}, {pipeline_mode = #tpu.pipeline_mode<synchronous>, transform_indices = @transform_3, window_bounds = array<i64: 160, 40>}, {pipeline_mode = #tpu.pipeline_mode<synchronous>, transform_indices = @transform_4, window_bounds = array<i64: 40, 160>}, {pipeline_mode = #tpu.pipeline_mode<synchronous>, transform_indices = @transform_5, window_bounds = array<i64: 4, 32>}, {pipeline_mode = #tpu.pipeline_mode<synchronous>, transform_indices = @transform_6, window_bounds = array<i64: 4, 32>}, {pipeline_mode = #tpu.pipeline_mode<synchronous>, transform_indices = @transform_7, window_bounds = array<i64: 1, 32>}, {pipeline_mode = #tpu.pipeline_mode<synchronous>, transform_indices = @transform_8, window_bounds = array<i64: 32, 32>}, {pipeline_mode = #tpu.pipeline_mode<synchronous>, transform_indices = @transform_9, window_bounds = array<i64: 1, 32>}, {pipeline_mode = #tpu.pipeline_mode<synchronous>, transform_indices = @transform_10, window_bounds = array<i64: 2, 32>}, {pipeline_mode = #tpu.pipeline_mode<synchronous>, transform_indices = @transform_11, window_bounds = array<i64: 32, 16>}, {pipeline_mode = #tpu.pipeline_mode<synchronous>, transform_indices = @transform_12, window_bounds = array<i64: 4, 16>}, {pipeline_mode = #tpu.pipeline_mode<synchronous>, transform_indices = @transform_13, window_bounds = array<i64: 16, 16>}, {pipeline_mode = #tpu.pipeline_mode<synchronous>, transform_indices = @transform_14, window_bounds = array<i64: 1, 16>}, {pipeline_mode = #tpu.pipeline_mode<synchronous>, transform_indices = @transform_15, window_bounds = array<i64: 16, 16>}, {pipeline_mode = #tpu.pipeline_mode<synchronous>, transform_indices = @transform_16, window_bounds = array<i64: 1, 16>}, {pipeline_mode = #tpu.pipeline_mode<synchronous>, transform_indices = @transform_17, window_bounds = array<i64: 16, 4>}, {pipeline_mode = #tpu.pipeline_mode<synchronous>, transform_indices = @transform_18, window_bounds = array<i64: 1, 4>}, {transform_indices = @transform_19, window_bounds = array<i64: 2, 40, 4>}]} {
    %c0 = arith.constant 0 : index
    %c0_0 = arith.constant 0 : index
    %0 = vector.load %arg1[%c0, %c0_0] : memref<40x4xf32, #tpu.memory_space<vmem>>, vector<40x4xf32>
    %c0_1 = arith.constant 0 : index
    %c0_2 = arith.constant 0 : index
    %1 = vector.load %arg3[%c0_1, %c0_2] : memref<160x40xf32, #tpu.memory_space<vmem>>, vector<160x40xf32>
    %c0_3 = arith.constant 0 : index
    %c0_4 = arith.constant 0 : index
    %2 = vector.load %arg4[%c0_3, %c0_4] : memref<160x40xf32, #tpu.memory_space<vmem>>, vector<160x40xf32>
    %c0_5 = arith.constant 0 : index
    %c0_6 = arith.constant 0 : index
    %3 = vector.load %arg5[%c0_5, %c0_6] : memref<40x160xf32, #tpu.memory_space<vmem>>, vector<40x160xf32>
    %c0_7 = arith.constant 0 : index
    %c0_8 = arith.constant 0 : index
    %4 = vector.load %arg6[%c0_7, %c0_8] : memref<4x32xf32, #tpu.memory_space<vmem>>, vector<4x32xf32>
    %c0_9 = arith.constant 0 : index
    %c0_10 = arith.constant 0 : index
    %5 = vector.load %arg7[%c0_9, %c0_10] : memref<4x32xf32, #tpu.memory_space<vmem>>, vector<4x32xf32>
    %c0_11 = arith.constant 0 : index
    %c0_12 = arith.constant 0 : index
    %6 = vector.load %arg8[%c0_11, %c0_12] : memref<1x32xf32, #tpu.memory_space<vmem>>, vector<1x32xf32>
    %c0_13 = arith.constant 0 : index
    %c0_14 = arith.constant 0 : index
    %7 = vector.load %arg9[%c0_13, %c0_14] : memref<32x32xf32, #tpu.memory_space<vmem>>, vector<32x32xf32>
    %c0_15 = arith.constant 0 : index
    %c0_16 = arith.constant 0 : index
    %8 = vector.load %arg10[%c0_15, %c0_16] : memref<1x32xf32, #tpu.memory_space<vmem>>, vector<1x32xf32>
    %c0_17 = arith.constant 0 : index
    %c0_18 = arith.constant 0 : index
    %9 = vector.load %arg13[%c0_17, %c0_18] : memref<4x16xf32, #tpu.memory_space<vmem>>, vector<4x16xf32>
    %c0_19 = arith.constant 0 : index
    %c0_20 = arith.constant 0 : index
    %10 = vector.load %arg14[%c0_19, %c0_20] : memref<16x16xf32, #tpu.memory_space<vmem>>, vector<16x16xf32>
    %c0_21 = arith.constant 0 : index
    %c0_22 = arith.constant 0 : index
    %11 = vector.load %arg15[%c0_21, %c0_22] : memref<1x16xf32, #tpu.memory_space<vmem>>, vector<1x16xf32>
    %c0_23 = arith.constant 0 : index
    %c0_24 = arith.constant 0 : index
    %12 = vector.load %arg16[%c0_23, %c0_24] : memref<16x16xf32, #tpu.memory_space<vmem>>, vector<16x16xf32>
    %c0_25 = arith.constant 0 : index
    %c0_26 = arith.constant 0 : index
    %13 = vector.load %arg17[%c0_25, %c0_26] : memref<1x16xf32, #tpu.memory_space<vmem>>, vector<1x16xf32>
    %c0_27 = arith.constant 0 : index
    %c0_28 = arith.constant 0 : index
    %14 = vector.load %arg18[%c0_27, %c0_28] : memref<16x4xf32, #tpu.memory_space<vmem>>, vector<16x4xf32>
    %c0_29 = arith.constant 0 : index
    %c0_30 = arith.constant 0 : index
    %15 = vector.load %arg19[%c0_29, %c0_30] : memref<1x4xf32, #tpu.memory_space<vmem>>, vector<1x4xf32>
    %c0_31 = arith.constant 0 : index
    %c0_32 = arith.constant 0 : index
    %16 = vector.load %arg12[%c0_31, %c0_32] : memref<32x16xf32, #tpu.memory_space<vmem>>, vector<32x16xf32>
    %c0_33 = arith.constant 0 : index
    %c0_34 = arith.constant 0 : index
    %17 = vector.load %arg2[%c0_33, %c0_34] : memref<160x2xf32, #tpu.memory_space<vmem>>, vector<160x2xf32>
    %c0_35 = arith.constant 0 : index
    %c0_36 = arith.constant 0 : index
    %18 = vector.load %arg11[%c0_35, %c0_36] : memref<2x32xf32, #tpu.memory_space<vmem>>, vector<2x32xf32>
    %cst = arith.constant dense<0.000000e+00> : vector<160x32xf32>
    %19 = tpu.matmul %17, %18, %cst {dimension_numbers = #tpu.dot_dimension_numbers<[1], [0], [0], [1], [0, 0, 1, 1], [], []>} : vector<160x2xf32>, vector<2x32xf32>, vector<160x32xf32> -> vector<160x32xf32>
    %cst_37 = arith.constant dense<0.000000e+00> : vector<160x4xf32>
    %20 = tpu.matmul %2, %0, %cst_37 {dimension_numbers = #tpu.dot_dimension_numbers<[1], [0], [0], [1], [0, 0, 1, 1], [], []>} : vector<160x40xf32>, vector<40x4xf32>, vector<160x4xf32> -> vector<160x4xf32>
    %cst_38 = arith.constant dense<0.000000e+00> : vector<160x4xf32>
    %21 = tpu.matmul %1, %0, %cst_38 {dimension_numbers = #tpu.dot_dimension_numbers<[1], [0], [0], [1], [0, 0, 1, 1], [], []>} : vector<160x40xf32>, vector<40x4xf32>, vector<160x4xf32> -> vector<160x4xf32>
    %cst_39 = arith.constant dense<0.000000e+00> : vector<160x32xf32>
    %22 = tpu.matmul %20, %4, %cst_39 {dimension_numbers = #tpu.dot_dimension_numbers<[1], [0], [0], [1], [0, 0, 1, 1], [], []>} : vector<160x4xf32>, vector<4x32xf32>, vector<160x32xf32> -> vector<160x32xf32>
    %cst_40 = arith.constant dense<0.000000e+00> : vector<160x32xf32>
    %23 = tpu.matmul %21, %5, %cst_40 {dimension_numbers = #tpu.dot_dimension_numbers<[1], [0], [0], [1], [0, 0, 1, 1], [], []>} : vector<160x4xf32>, vector<4x32xf32>, vector<160x32xf32> -> vector<160x32xf32>
    %24 = arith.addf %22, %23 : vector<160x32xf32>
    %25 = vector.broadcast %6 : vector<1x32xf32> to vector<160x32xf32>
    %26 = arith.addf %24, %25 : vector<160x32xf32>
    %cst_41 = arith.constant 0.000000e+00 : f32
    %27 = vector.broadcast %cst_41 : f32 to vector<160x32xf32>
    %28 = arith.maximumf %26, %27 : vector<160x32xf32>
    %cst_42 = arith.constant dense<0.000000e+00> : vector<160x32xf32>
    %29 = tpu.matmul %28, %7, %cst_42 {dimension_numbers = #tpu.dot_dimension_numbers<[1], [0], [0], [1], [0, 0, 1, 1], [], []>} : vector<160x32xf32>, vector<32x32xf32>, vector<160x32xf32> -> vector<160x32xf32>
    %30 = vector.broadcast %8 : vector<1x32xf32> to vector<160x32xf32>
    %31 = arith.addf %29, %30 : vector<160x32xf32>
    %cst_43 = arith.constant 0.000000e+00 : f32
    %32 = vector.broadcast %cst_43 : f32 to vector<160x32xf32>
    %33 = arith.maximumf %31, %32 : vector<160x32xf32>
    %34 = arith.mulf %33, %19 : vector<160x32xf32>
    %cst_44 = arith.constant dense<0.000000e+00> : vector<160x16xf32>
    %35 = tpu.matmul %34, %16, %cst_44 {dimension_numbers = #tpu.dot_dimension_numbers<[1], [0], [0], [1], [0, 0, 1, 1], [], []>} : vector<160x32xf32>, vector<32x16xf32>, vector<160x16xf32> -> vector<160x16xf32>
    %cst_45 = arith.constant dense<0.000000e+00> : vector<40x16xf32>
    %36 = tpu.matmul %3, %35, %cst_45 {dimension_numbers = #tpu.dot_dimension_numbers<[1], [0], [0], [1], [0, 0, 1, 1], [], []>} : vector<40x160xf32>, vector<160x16xf32>, vector<40x16xf32> -> vector<40x16xf32>
    %cst_46 = arith.constant dense<0.000000e+00> : vector<40x16xf32>
    %37 = tpu.matmul %0, %9, %cst_46 {dimension_numbers = #tpu.dot_dimension_numbers<[1], [0], [0], [1], [0, 0, 1, 1], [], []>} : vector<40x4xf32>, vector<4x16xf32>, vector<40x16xf32> -> vector<40x16xf32>
    %cst_47 = arith.constant dense<0.000000e+00> : vector<40x16xf32>
    %38 = tpu.matmul %36, %10, %cst_47 {dimension_numbers = #tpu.dot_dimension_numbers<[1], [0], [0], [1], [0, 0, 1, 1], [], []>} : vector<40x16xf32>, vector<16x16xf32>, vector<40x16xf32> -> vector<40x16xf32>
    %39 = arith.addf %37, %38 : vector<40x16xf32>
    %40 = vector.broadcast %11 : vector<1x16xf32> to vector<40x16xf32>
    %41 = arith.addf %39, %40 : vector<40x16xf32>
    %cst_48 = arith.constant 0.000000e+00 : f32
    %42 = vector.broadcast %cst_48 : f32 to vector<40x16xf32>
    %43 = arith.maximumf %41, %42 : vector<40x16xf32>
    %cst_49 = arith.constant dense<0.000000e+00> : vector<40x16xf32>
    %44 = tpu.matmul %43, %12, %cst_49 {dimension_numbers = #tpu.dot_dimension_numbers<[1], [0], [0], [1], [0, 0, 1, 1], [], []>} : vector<40x16xf32>, vector<16x16xf32>, vector<40x16xf32> -> vector<40x16xf32>
    %45 = vector.broadcast %13 : vector<1x16xf32> to vector<40x16xf32>
    %46 = arith.addf %44, %45 : vector<40x16xf32>
    %cst_50 = arith.constant 0.000000e+00 : f32
    %47 = vector.broadcast %cst_50 : f32 to vector<40x16xf32>
    %48 = arith.maximumf %46, %47 : vector<40x16xf32>
    %cst_51 = arith.constant dense<0.000000e+00> : vector<40x4xf32>
    %49 = tpu.matmul %48, %14, %cst_51 {dimension_numbers = #tpu.dot_dimension_numbers<[1], [0], [0], [1], [0, 0, 1, 1], [], []>} : vector<40x16xf32>, vector<16x4xf32>, vector<40x4xf32> -> vector<40x4xf32>
    %50 = vector.broadcast %15 : vector<1x4xf32> to vector<40x4xf32>
    %51 = arith.addf %49, %50 : vector<40x4xf32>
    %52 = arith.addf %0, %51 : vector<40x4xf32>
    %c0_52 = arith.constant 0 : index
    %c0_53 = arith.constant 0 : index
    %c0_54 = arith.constant 0 : index
    %53 = vector.load %arg20[%c0_52, %c0_53, %c0_54] : memref<2x40x4xf32, #tpu.memory_space<vmem>>, vector<1x40x4xf32>
    %54 = vector.shape_cast %53 : vector<1x40x4xf32> to vector<40x4xf32>
    %55 = vector.shape_cast %52 : vector<40x4xf32> to vector<1x40x4xf32>
    tpu.vector_store %arg20[%c0_52, %c0_53, %c0_54], %55 {strides = array<i32>} : memref<2x40x4xf32, #tpu.memory_space<vmem>>, vector<1x40x4xf32>,
    %cst_55 = arith.constant dense<0.000000e+00> : vector<160x4xf32>
    %56 = tpu.matmul %2, %52, %cst_55 {dimension_numbers = #tpu.dot_dimension_numbers<[1], [0], [0], [1], [0, 0, 1, 1], [], []>} : vector<160x40xf32>, vector<40x4xf32>, vector<160x4xf32> -> vector<160x4xf32>
    %cst_56 = arith.constant dense<0.000000e+00> : vector<160x4xf32>
    %57 = tpu.matmul %1, %52, %cst_56 {dimension_numbers = #tpu.dot_dimension_numbers<[1], [0], [0], [1], [0, 0, 1, 1], [], []>} : vector<160x40xf32>, vector<40x4xf32>, vector<160x4xf32> -> vector<160x4xf32>
    %cst_57 = arith.constant dense<0.000000e+00> : vector<160x32xf32>
    %58 = tpu.matmul %56, %4, %cst_57 {dimension_numbers = #tpu.dot_dimension_numbers<[1], [0], [0], [1], [0, 0, 1, 1], [], []>} : vector<160x4xf32>, vector<4x32xf32>, vector<160x32xf32> -> vector<160x32xf32>
    %cst_58 = arith.constant dense<0.000000e+00> : vector<160x32xf32>
    %59 = tpu.matmul %57, %5, %cst_58 {dimension_numbers = #tpu.dot_dimension_numbers<[1], [0], [0], [1], [0, 0, 1, 1], [], []>} : vector<160x4xf32>, vector<4x32xf32>, vector<160x32xf32> -> vector<160x32xf32>
    %60 = arith.addf %58, %59 : vector<160x32xf32>
    %61 = vector.broadcast %6 : vector<1x32xf32> to vector<160x32xf32>
    %62 = arith.addf %60, %61 : vector<160x32xf32>
    %cst_59 = arith.constant 0.000000e+00 : f32
    %63 = vector.broadcast %cst_59 : f32 to vector<160x32xf32>
    %64 = arith.maximumf %62, %63 : vector<160x32xf32>
    %cst_60 = arith.constant dense<0.000000e+00> : vector<160x32xf32>
    %65 = tpu.matmul %64, %7, %cst_60 {dimension_numbers = #tpu.dot_dimension_numbers<[1], [0], [0], [1], [0, 0, 1, 1], [], []>} : vector<160x32xf32>, vector<32x32xf32>, vector<160x32xf32> -> vector<160x32xf32>
    %66 = vector.broadcast %8 : vector<1x32xf32> to vector<160x32xf32>
    %67 = arith.addf %65, %66 : vector<160x32xf32>
    %cst_61 = arith.constant 0.000000e+00 : f32
    %68 = vector.broadcast %cst_61 : f32 to vector<160x32xf32>
    %69 = arith.maximumf %67, %68 : vector<160x32xf32>
    %70 = arith.mulf %69, %19 : vector<160x32xf32>
    %cst_62 = arith.constant dense<0.000000e+00> : vector<160x16xf32>
    %71 = tpu.matmul %70, %16, %cst_62 {dimension_numbers = #tpu.dot_dimension_numbers<[1], [0], [0], [1], [0, 0, 1, 1], [], []>} : vector<160x32xf32>, vector<32x16xf32>, vector<160x16xf32> -> vector<160x16xf32>
    %cst_63 = arith.constant dense<0.000000e+00> : vector<40x16xf32>
    %72 = tpu.matmul %3, %71, %cst_63 {dimension_numbers = #tpu.dot_dimension_numbers<[1], [0], [0], [1], [0, 0, 1, 1], [], []>} : vector<40x160xf32>, vector<160x16xf32>, vector<40x16xf32> -> vector<40x16xf32>
    %cst_64 = arith.constant dense<0.000000e+00> : vector<40x16xf32>
    %73 = tpu.matmul %52, %9, %cst_64 {dimension_numbers = #tpu.dot_dimension_numbers<[1], [0], [0], [1], [0, 0, 1, 1], [], []>} : vector<40x4xf32>, vector<4x16xf32>, vector<40x16xf32> -> vector<40x16xf32>
    %cst_65 = arith.constant dense<0.000000e+00> : vector<40x16xf32>
    %74 = tpu.matmul %72, %10, %cst_65 {dimension_numbers = #tpu.dot_dimension_numbers<[1], [0], [0], [1], [0, 0, 1, 1], [], []>} : vector<40x16xf32>, vector<16x16xf32>, vector<40x16xf32> -> vector<40x16xf32>
    %75 = arith.addf %73, %74 : vector<40x16xf32>
    %76 = vector.broadcast %11 : vector<1x16xf32> to vector<40x16xf32>
    %77 = arith.addf %75, %76 : vector<40x16xf32>
    %cst_66 = arith.constant 0.000000e+00 : f32
    %78 = vector.broadcast %cst_66 : f32 to vector<40x16xf32>
    %79 = arith.maximumf %77, %78 : vector<40x16xf32>
    %cst_67 = arith.constant dense<0.000000e+00> : vector<40x16xf32>
    %80 = tpu.matmul %79, %12, %cst_67 {dimension_numbers = #tpu.dot_dimension_numbers<[1], [0], [0], [1], [0, 0, 1, 1], [], []>} : vector<40x16xf32>, vector<16x16xf32>, vector<40x16xf32> -> vector<40x16xf32>
    %81 = vector.broadcast %13 : vector<1x16xf32> to vector<40x16xf32>
    %82 = arith.addf %80, %81 : vector<40x16xf32>
    %cst_68 = arith.constant 0.000000e+00 : f32
    %83 = vector.broadcast %cst_68 : f32 to vector<40x16xf32>
    %84 = arith.maximumf %82, %83 : vector<40x16xf32>
    %cst_69 = arith.constant dense<0.000000e+00> : vector<40x4xf32>
    %85 = tpu.matmul %84, %14, %cst_69 {dimension_numbers = #tpu.dot_dimension_numbers<[1], [0], [0], [1], [0, 0, 1, 1], [], []>} : vector<40x16xf32>, vector<16x4xf32>, vector<40x4xf32> -> vector<40x4xf32>
    %86 = vector.broadcast %15 : vector<1x4xf32> to vector<40x4xf32>
    %87 = arith.addf %85, %86 : vector<40x4xf32>
    %88 = arith.addf %52, %87 : vector<40x4xf32>
    %c1 = arith.constant 1 : index
    %c0_70 = arith.constant 0 : index
    %c0_71 = arith.constant 0 : index
    %89 = vector.load %arg20[%c1, %c0_70, %c0_71] : memref<2x40x4xf32, #tpu.memory_space<vmem>>, vector<1x40x4xf32>
    %90 = vector.shape_cast %89 : vector<1x40x4xf32> to vector<40x4xf32>
    %91 = vector.shape_cast %88 : vector<40x4xf32> to vector<1x40x4xf32>
    tpu.vector_store %arg20[%c1, %c0_70, %c0_71], %91 {strides = array<i32>} : memref<2x40x4xf32, #tpu.memory_space<vmem>>, vector<1x40x4xf32>,
    return
  }
  func.func @transform_0(%arg0: i32) -> (i32, i32) {
    %c0_i32 = arith.constant 0 : i32
    %c0_i32_0 = arith.constant 0 : i32
    return %arg0, %c0_i32 : i32, i32
  }
  func.func @transform_1(%arg0: i32) -> (i32, i32) {
    %c0_i32 = arith.constant 0 : i32
    %c0_i32_0 = arith.constant 0 : i32
    return %arg0, %c0_i32 : i32, i32
  }
  func.func @transform_2(%arg0: i32) -> (i32, i32) {
    %c0_i32 = arith.constant 0 : i32
    %c0_i32_0 = arith.constant 0 : i32
    %c0_i32_1 = arith.constant 0 : i32
    return %c0_i32, %c0_i32_0 : i32, i32
  }
  func.func @transform_3(%arg0: i32) -> (i32, i32) {
    %c0_i32 = arith.constant 0 : i32
    %c0_i32_0 = arith.constant 0 : i32
    %c0_i32_1 = arith.constant 0 : i32
    return %c0_i32, %c0_i32_0 : i32, i32
  }
  func.func @transform_4(%arg0: i32) -> (i32, i32) {
    %c0_i32 = arith.constant 0 : i32
    %c0_i32_0 = arith.constant 0 : i32
    %c0_i32_1 = arith.constant 0 : i32
    return %c0_i32, %c0_i32_0 : i32, i32
  }
  func.func @transform_5(%arg0: i32) -> (i32, i32) {
    %c0_i32 = arith.constant 0 : i32
    %c0_i32_0 = arith.constant 0 : i32
    %c0_i32_1 = arith.constant 0 : i32
    return %c0_i32, %c0_i32_0 : i32, i32
  }
  func.func @transform_6(%arg0: i32) -> (i32, i32) {
    %c0_i32 = arith.constant 0 : i32
    %c0_i32_0 = arith.constant 0 : i32
    %c0_i32_1 = arith.constant 0 : i32
    return %c0_i32, %c0_i32_0 : i32, i32
  }
  func.func @transform_7(%arg0: i32) -> (i32, i32) {
    %c0_i32 = arith.constant 0 : i32
    %c0_i32_0 = arith.constant 0 : i32
    %c0_i32_1 = arith.constant 0 : i32
    return %c0_i32, %c0_i32_0 : i32, i32
  }
  func.func @transform_8(%arg0: i32) -> (i32, i32) {
    %c0_i32 = arith.constant 0 : i32
    %c0_i32_0 = arith.constant 0 : i32
    %c0_i32_1 = arith.constant 0 : i32
    return %c0_i32, %c0_i32_0 : i32, i32
  }
  func.func @transform_9(%arg0: i32) -> (i32, i32) {
    %c0_i32 = arith.constant 0 : i32
    %c0_i32_0 = arith.constant 0 : i32
    %c0_i32_1 = arith.constant 0 : i32
    return %c0_i32, %c0_i32_0 : i32, i32
  }
  func.func @transform_10(%arg0: i32) -> (i32, i32) {
    %c0_i32 = arith.constant 0 : i32
    %c0_i32_0 = arith.constant 0 : i32
    %c0_i32_1 = arith.constant 0 : i32
    return %c0_i32, %c0_i32_0 : i32, i32
  }
  func.func @transform_11(%arg0: i32) -> (i32, i32) {
    %c0_i32 = arith.constant 0 : i32
    %c0_i32_0 = arith.constant 0 : i32
    %c0_i32_1 = arith.constant 0 : i32
    return %c0_i32, %c0_i32_0 : i32, i32
  }
  func.func @transform_12(%arg0: i32) -> (i32, i32) {
    %c0_i32 = arith.constant 0 : i32
    %c0_i32_0 = arith.constant 0 : i32
    %c0_i32_1 = arith.constant 0 : i32
    return %c0_i32, %c0_i32_0 : i32, i32
  }
  func.func @transform_13(%arg0: i32) -> (i32, i32) {
    %c0_i32 = arith.constant 0 : i32
    %c0_i32_0 = arith.constant 0 : i32
    %c0_i32_1 = arith.constant 0 : i32
    return %c0_i32, %c0_i32_0 : i32, i32
  }
  func.func @transform_14(%arg0: i32) -> (i32, i32) {
    %c0_i32 = arith.constant 0 : i32
    %c0_i32_0 = arith.constant 0 : i32
    %c0_i32_1 = arith.constant 0 : i32
    return %c0_i32, %c0_i32_0 : i32, i32
  }
  func.func @transform_15(%arg0: i32) -> (i32, i32) {
    %c0_i32 = arith.constant 0 : i32
    %c0_i32_0 = arith.constant 0 : i32
    %c0_i32_1 = arith.constant 0 : i32
    return %c0_i32, %c0_i32_0 : i32, i32
  }
  func.func @transform_16(%arg0: i32) -> (i32, i32) {
    %c0_i32 = arith.constant 0 : i32
    %c0_i32_0 = arith.constant 0 : i32
    %c0_i32_1 = arith.constant 0 : i32
    return %c0_i32, %c0_i32_0 : i32, i32
  }
  func.func @transform_17(%arg0: i32) -> (i32, i32) {
    %c0_i32 = arith.constant 0 : i32
    %c0_i32_0 = arith.constant 0 : i32
    %c0_i32_1 = arith.constant 0 : i32
    return %c0_i32, %c0_i32_0 : i32, i32
  }
  func.func @transform_18(%arg0: i32) -> (i32, i32) {
    %c0_i32 = arith.constant 0 : i32
    %c0_i32_0 = arith.constant 0 : i32
    %c0_i32_1 = arith.constant 0 : i32
    return %c0_i32, %c0_i32_0 : i32, i32
  }
  func.func @transform_19(%arg0: i32) -> (i32, i32, i32) {
    %c0_i32 = arith.constant 0 : i32
    %c0_i32_0 = arith.constant 0 : i32
    %c0_i32_1 = arith.constant 0 : i32
    return %c0_i32, %arg0, %c0_i32_0 : i32, i32, i32
  }
}

</mosaic_0001>

<llo_original>
// kernel: mlp_decoder_forward.1
$region0: #{mlp_decoder_forward.1}
  #allocation0 [shape = 'u32[]', space=smem, size = 0x4, offset = 0x4, fixed_abs, tag = 'smem constant byte address 0x4 - core index']
  #allocation1 [shape = 'u32[144,128]{1,0:T(1,128)}', space=vmem, size = 0x12000, scoped, tag = 'internal scratch']
  %s0 = inlined_call_operand.vmem [shape: f32[80,4], index: 0, kind: input, shape index: {}]
  %s1 = inlined_call_operand.vmem [shape: f32[320,2], index: 1, kind: input, shape index: {}]
  %s2 = inlined_call_operand.vmem [shape: f32[160,40], index: 2, kind: input, shape index: {}]
  %s3 = inlined_call_operand.vmem [shape: f32[160,40], index: 3, kind: input, shape index: {}]
  %s4 = inlined_call_operand.vmem [shape: f32[40,160], index: 4, kind: input, shape index: {}]
  %s5 = inlined_call_operand.vmem [shape: f32[4,32], index: 5, kind: input, shape index: {}]
  %s6 = inlined_call_operand.vmem [shape: f32[4,32], index: 6, kind: input, shape index: {}]
  %s7 = inlined_call_operand.vmem [shape: f32[1,32], index: 7, kind: input, shape index: {}]
  %s8 = inlined_call_operand.vmem [shape: f32[32,32], index: 8, kind: input, shape index: {}]
  %s9 = inlined_call_operand.vmem [shape: f32[1,32], index: 9, kind: input, shape index: {}]
  %s10 = inlined_call_operand.vmem [shape: f32[2,32], index: 10, kind: input, shape index: {}]
  %s11 = inlined_call_operand.vmem [shape: f32[32,16], index: 11, kind: input, shape index: {}]
  %s12 = inlined_call_operand.vmem [shape: f32[4,16], index: 12, kind: input, shape index: {}]
  %s13 = inlined_call_operand.vmem [shape: f32[16,16], index: 13, kind: input, shape index: {}]
  %s14 = inlined_call_operand.vmem [shape: f32[1,16], index: 14, kind: input, shape index: {}]
  %s15 = inlined_call_operand.vmem [shape: f32[16,16], index: 15, kind: input, shape index: {}]
  %s16 = inlined_call_operand.vmem [shape: f32[1,16], index: 16, kind: input, shape index: {}]
  %s17 = inlined_call_operand.vmem [shape: f32[16,4], index: 17, kind: input, shape index: {}]
  %s18 = inlined_call_operand.vmem [shape: f32[1,4], index: 18, kind: input, shape index: {}]
  %s19 = inlined_call_operand.vmem [shape: f32[2,80,4], index: 19, kind: output, shape index: {}]
  %s20 = sld [smem:[#allocation0]]
  $region143: #{mlp_decoder_forward.1} parent=0
    _
  %s22 = ssub.s32 1, %s20
  %s23 = scalar_select 0, %s22, %s20
  $region1: #{mlp_decoder_forward.1} parent=0
    #allocation2 [shape = 'u8[81920]{0}', space=vmem, size = 0x14000, scoped, tag = 'output window, operand 0']
    loop: start=0, step=1, limit=4
    $region2: #{mlp_decoder_forward.1} parent=1 // loop_pre_header
      _
    $region3: #{mlp_decoder_forward.1} parent=1 // loop_header
      %s25 = sphi 0, %s29
      %p26 = scmp.ge.s32.totalorder %s25, 4
      %s35 = sphi 0, %s37
      %s38 = sphi 0, %s35
      %s39 = sphi 0, %s38
      %s55 = sphi 0, %s39
      %s61 = sphi 0, %s63
      %s64 = sphi 0, %s61
      %s65 = sphi 0, %s64
      %s81 = sphi 0, %s65
      %s85 = sphi 0, %s85
      %s87 = sphi 0, %s85
      %s88 = sphi 0, %s87
      %s102 = sphi 0, %s88
      %s106 = sphi 0, %s106
      %s108 = sphi 0, %s106
      %s109 = sphi 0, %s108
      %s123 = sphi 0, %s109
      %s127 = sphi 0, %s127
      %s129 = sphi 0, %s127
      %s130 = sphi 0, %s129
      %s144 = sphi 0, %s130
      %s148 = sphi 0, %s148
      %s150 = sphi 0, %s148
      %s151 = sphi 0, %s150
      %s165 = sphi 0, %s151
      %s169 = sphi 0, %s169
      %s171 = sphi 0, %s169
      %s172 = sphi 0, %s171
      %s186 = sphi 0, %s172
      %s190 = sphi 0, %s190
      %s192 = sphi 0, %s190
      %s193 = sphi 0, %s192
      %s207 = sphi 0, %s193
      %s211 = sphi 0, %s211
      %s213 = sphi 0, %s211
      %s214 = sphi 0, %s213
      %s228 = sphi 0, %s214
      %s232 = sphi 0, %s232
      %s234 = sphi 0, %s232
      %s235 = sphi 0, %s234
      %s249 = sphi 0, %s235
      %s253 = sphi 0, %s253
      %s255 = sphi 0, %s253
      %s256 = sphi 0, %s255
      %s270 = sphi 0, %s256
      %s274 = sphi 0, %s274
      %s276 = sphi 0, %s274
      %s277 = sphi 0, %s276
      %s291 = sphi 0, %s277
      %s295 = sphi 0, %s295
      %s297 = sphi 0, %s295
      %s298 = sphi 0, %s297
      %s312 = sphi 0, %s298
      %s316 = sphi 0, %s316
      %s318 = sphi 0, %s316
      %s319 = sphi 0, %s318
      %s333 = sphi 0, %s319
      %s337 = sphi 0, %s337
      %s339 = sphi 0, %s337
      %s340 = sphi 0, %s339
      %s354 = sphi 0, %s340
      %s358 = sphi 0, %s358
      %s360 = sphi 0, %s358
      %s361 = sphi 0, %s360
      %s375 = sphi 0, %s361
      %s379 = sphi 0, %s379
      %s381 = sphi 0, %s379
      %s382 = sphi 0, %s381
      %s396 = sphi 0, %s382
      %s400 = sphi 0, %s400
      %s402 = sphi 0, %s400
      %s403 = sphi 0, %s402
      %s417 = sphi 0, %s403
      %s421 = sphi 0, %s421
      %s423 = sphi 0, %s421
      %s424 = sphi 0, %s423
      %s438 = sphi 0, %s424
      %s444 = sphi 0, %s446
      %s447 = sphi 0, %s444
      %s448 = sphi 0, %s447
      %s464 = sphi 0, %s448
    $region4: #{mlp_decoder_forward.1} parent=1 // loop_header_branch
      %28 = sbr.rel (%p26) target = $region8
    $region5: #{mlp_decoder_forward.1} parent=1 // loop_body
      %s30 = ssub.s32 %s25, 1
      %s31 = ssub.s32 %s25, 2
      %s32 = sadd.s32 %s25, 1
      %s33 = ssub.s32 %s25, %s32
      %p34 = scmp.eq.s32.totalorder %s33, 0
      %s36 = sadd.s32 %s35, 1
      %s37 = scalar_select %p34, %s35, %s36
      %p40 = pneg %p34
      %p41 = scmp.eq.s32.totalorder %s25, 1
      %p42 = por %p40, %p41
      %p43 = scmp.ne.s32.totalorder %s35, %s38
      %p44 = scmp.eq.s32.totalorder %s25, 0
      %p45 = por %p43, %p44
      %p46 = scmp.ne.s32.totalorder %s35, %s38
      %p47 = scmp.eq.s32.totalorder %s30, 1
      %p48 = por %p46, %p47
      %p49 = scmp.ne.s32.totalorder %s38, %s39
      %p50 = scmp.eq.s32.totalorder %s30, 0
      %p51 = por %p49, %p50
      %p52 = scmp.ne.s32.totalorder %s38, %s39
      %p53 = scmp.eq.s32.totalorder %s31, 1
      %p54 = por %p52, %p53
      %p56 = scmp.ne.s32.totalorder %s39, %s55
      %p57 = scmp.eq.s32.totalorder %s31, 0
      %p58 = por %p56, %p57
      %s59 = ssub.s32 %s25, %s32
      %p60 = scmp.eq.s32.totalorder %s59, 0
      %s62 = sadd.s32 %s61, 1
      %s63 = scalar_select %p60, %s61, %s62
      %p66 = pneg %p60
      %p67 = scmp.eq.s32.totalorder %s25, 1
      %p68 = por %p66, %p67
      %p69 = scmp.ne.s32.totalorder %s61, %s64
      %p70 = scmp.eq.s32.totalorder %s25, 0
      %p71 = por %p69, %p70
      %p72 = scmp.ne.s32.totalorder %s61, %s64
      %p73 = scmp.eq.s32.totalorder %s30, 1
      %p74 = por %p72, %p73
      %p75 = scmp.ne.s32.totalorder %s64, %s65
      %p76 = scmp.eq.s32.totalorder %s30, 0
      %p77 = por %p75, %p76
      %p78 = scmp.ne.s32.totalorder %s64, %s65
      %p79 = scmp.eq.s32.totalorder %s31, 1
      %p80 = por %p78, %p79
      %p82 = scmp.ne.s32.totalorder %s65, %s81
      %p83 = scmp.eq.s32.totalorder %s31, 0
      %p84 = por %p82, %p83
      %s86 = sadd.s32 %s85, 1
      %p89 = scmp.eq.s32.totalorder %s25, 1
      %p90 = scmp.ne.s32.totalorder %s85, %s87
      %p91 = scmp.eq.s32.totalorder %s25, 0
      %p92 = por %p90, %p91
      %p93 = scmp.ne.s32.totalorder %s85, %s87
      %p94 = scmp.eq.s32.totalorder %s30, 1
      %p95 = por %p93, %p94
      %p96 = scmp.ne.s32.totalorder %s87, %s88
      %p97 = scmp.eq.s32.totalorder %s30, 0
      %p98 = por %p96, %p97
      %p99 = scmp.ne.s32.totalorder %s87, %s88
      %p100 = scmp.eq.s32.totalorder %s31, 1
      %p101 = por %p99, %p100
      %p103 = scmp.ne.s32.totalorder %s88, %s102
      %p104 = scmp.eq.s32.totalorder %s31, 0
      %p105 = por %p103, %p104
      %s107 = sadd.s32 %s106, 1
      %p110 = scmp.eq.s32.totalorder %s25, 1
      %p111 = scmp.ne.s32.totalorder %s106, %s108
      %p112 = scmp.eq.s32.totalorder %s25, 0
      %p113 = por %p111, %p112
      %p114 = scmp.ne.s32.totalorder %s106, %s108
      %p115 = scmp.eq.s32.totalorder %s30, 1
      %p116 = por %p114, %p115
      %p117 = scmp.ne.s32.totalorder %s108, %s109
      %p118 = scmp.eq.s32.totalorder %s30, 0
      %p119 = por %p117, %p118
      %p120 = scmp.ne.s32.totalorder %s108, %s109
      %p121 = scmp.eq.s32.totalorder %s31, 1
      %p122 = por %p120, %p121
      %p124 = scmp.ne.s32.totalorder %s109, %s123
      %p125 = scmp.eq.s32.totalorder %s31, 0
      %p126 = por %p124, %p125
      %s128 = sadd.s32 %s127, 1
      %p131 = scmp.eq.s32.totalorder %s25, 1
      %p132 = scmp.ne.s32.totalorder %s127, %s129
      %p133 = scmp.eq.s32.totalorder %s25, 0
      %p134 = por %p132, %p133
      %p135 = scmp.ne.s32.totalorder %s127, %s129
      %p136 = scmp.eq.s32.totalorder %s30, 1
      %p137 = por %p135, %p136
      %p138 = scmp.ne.s32.totalorder %s129, %s130
      %p139 = scmp.eq.s32.totalorder %s30, 0
      %p140 = por %p138, %p139
      %p141 = scmp.ne.s32.totalorder %s129, %s130
      %p142 = scmp.eq.s32.totalorder %s31, 1
      %p143 = por %p141, %p142
      %p145 = scmp.ne.s32.totalorder %s130, %s144
      %p146 = scmp.eq.s32.totalorder %s31, 0
      %p147 = por %p145, %p146
      %s149 = sadd.s32 %s148, 1
      %p152 = scmp.eq.s32.totalorder %s25, 1
      %p153 = scmp.ne.s32.totalorder %s148, %s150
      %p154 = scmp.eq.s32.totalorder %s25, 0
      %p155 = por %p153, %p154
      %p156 = scmp.ne.s32.totalorder %s148, %s150
      %p157 = scmp.eq.s32.totalorder %s30, 1
      %p158 = por %p156, %p157
      %p159 = scmp.ne.s32.totalorder %s150, %s151
      %p160 = scmp.eq.s32.totalorder %s30, 0
      %p161 = por %p159, %p160
      %p162 = scmp.ne.s32.totalorder %s150, %s151
      %p163 = scmp.eq.s32.totalorder %s31, 1
      %p164 = por %p162, %p163
      %p166 = scmp.ne.s32.totalorder %s151, %s165
      %p167 = scmp.eq.s32.totalorder %s31, 0
      %p168 = por %p166, %p167
      %s170 = sadd.s32 %s169, 1
      %p173 = scmp.eq.s32.totalorder %s25, 1
      %p174 = scmp.ne.s32.totalorder %s169, %s171
      %p175 = scmp.eq.s32.totalorder %s25, 0
      %p176 = por %p174, %p175
      %p177 = scmp.ne.s32.totalorder %s169, %s171
      %p178 = scmp.eq.s32.totalorder %s30, 1
      %p179 = por %p177, %p178
      %p180 = scmp.ne.s32.totalorder %s171, %s172
      %p181 = scmp.eq.s32.totalorder %s30, 0
      %p182 = por %p180, %p181
      %p183 = scmp.ne.s32.totalorder %s171, %s172
      %p184 = scmp.eq.s32.totalorder %s31, 1
      %p185 = por %p183, %p184
      %p187 = scmp.ne.s32.totalorder %s172, %s186
      %p188 = scmp.eq.s32.totalorder %s31, 0
      %p189 = por %p187, %p188
      %s191 = sadd.s32 %s190, 1
      %p194 = scmp.eq.s32.totalorder %s25, 1
      %p195 = scmp.ne.s32.totalorder %s190, %s192
      %p196 = scmp.eq.s32.totalorder %s25, 0
      %p197 = por %p195, %p196
      %p198 = scmp.ne.s32.totalorder %s190, %s192
      %p199 = scmp.eq.s32.totalorder %s30, 1
      %p200 = por %p198, %p199
      %p201 = scmp.ne.s32.totalorder %s192, %s193
      %p202 = scmp.eq.s32.totalorder %s30, 0
      %p203 = por %p201, %p202
      %p204 = scmp.ne.s32.totalorder %s192, %s193
      %p205 = scmp.eq.s32.totalorder %s31, 1
      %p206 = por %p204, %p205
      %p208 = scmp.ne.s32.totalorder %s193, %s207
      %p209 = scmp.eq.s32.totalorder %s31, 0
      %p210 = por %p208, %p209
      %s212 = sadd.s32 %s211, 1
      %p215 = scmp.eq.s32.totalorder %s25, 1
      %p216 = scmp.ne.s32.totalorder %s211, %s213
      %p217 = scmp.eq.s32.totalorder %s25, 0
      %p218 = por %p216, %p217
      %p219 = scmp.ne.s32.totalorder %s211, %s213
      %p220 = scmp.eq.s32.totalorder %s30, 1
      %p221 = por %p219, %p220
      %p222 = scmp.ne.s32.totalorder %s213, %s214
      %p223 = scmp.eq.s32.totalorder %s30, 0
      %p224 = por %p222, %p223
      %p225 = scmp.ne.s32.totalorder %s213, %s214
      %p226 = scmp.eq.s32.totalorder %s31, 1
      %p227 = por %p225, %p226
      %p229 = scmp.ne.s32.totalorder %s214, %s228
      %p230 = scmp.eq.s32.totalorder %s31, 0
      %p231 = por %p229, %p230
      %s233 = sadd.s32 %s232, 1
      %p236 = scmp.eq.s32.totalorder %s25, 1
      %p237 = scmp.ne.s32.totalorder %s232, %s234
      %p238 = scmp.eq.s32.totalorder %s25, 0
      %p239 = por %p237, %p238
      %p240 = scmp.ne.s32.totalorder %s232, %s234
      %p241 = scmp.eq.s32.totalorder %s30, 1
      %p242 = por %p240, %p241
      %p243 = scmp.ne.s32.totalorder %s234, %s235
      %p244 = scmp.eq.s32.totalorder %s30, 0
      %p245 = por %p243, %p244
      %p246 = scmp.ne.s32.totalorder %s234, %s235
      %p247 = scmp.eq.s32.totalorder %s31, 1
      %p248 = por %p246, %p247
      %p250 = scmp.ne.s32.totalorder %s235, %s249
      %p251 = scmp.eq.s32.totalorder %s31, 0
      %p252 = por %p250, %p251
      %s254 = sadd.s32 %s253, 1
      %p257 = scmp.eq.s32.totalorder %s25, 1
      %p258 = scmp.ne.s32.totalorder %s253, %s255
      %p259 = scmp.eq.s32.totalorder %s25, 0
      %p260 = por %p258, %p259
      %p261 = scmp.ne.s32.totalorder %s253, %s255
      %p262 = scmp.eq.s32.totalorder %s30, 1
      %p263 = por %p261, %p262
      %p264 = scmp.ne.s32.totalorder %s255, %s256
      %p265 = scmp.eq.s32.totalorder %s30, 0
      %p266 = por %p264, %p265
      %p267 = scmp.ne.s32.totalorder %s255, %s256
      %p268 = scmp.eq.s32.totalorder %s31, 1
      %p269 = por %p267, %p268
      %p271 = scmp.ne.s32.totalorder %s256, %s270
      %p272 = scmp.eq.s32.totalorder %s31, 0
      %p273 = por %p271, %p272
      %s275 = sadd.s32 %s274, 1
      %p278 = scmp.eq.s32.totalorder %s25, 1
      %p279 = scmp.ne.s32.totalorder %s274, %s276
      %p280 = scmp.eq.s32.totalorder %s25, 0
      %p281 = por %p279, %p280
      %p282 = scmp.ne.s32.totalorder %s274, %s276
      %p283 = scmp.eq.s32.totalorder %s30, 1
      %p284 = por %p282, %p283
      %p285 = scmp.ne.s32.totalorder %s276, %s277
      %p286 = scmp.eq.s32.totalorder %s30, 0
      %p287 = por %p285, %p286
      %p288 = scmp.ne.s32.totalorder %s276, %s277
      %p289 = scmp.eq.s32.totalorder %s31, 1
      %p290 = por %p288, %p289
      %p292 = scmp.ne.s32.totalorder %s277, %s291
      %p293 = scmp.eq.s32.totalorder %s31, 0
      %p294 = por %p292, %p293
      %s296 = sadd.s32 %s295, 1
      %p299 = scmp.eq.s32.totalorder %s25, 1
      %p300 = scmp.ne.s32.totalorder %s295, %s297
      %p301 = scmp.eq.s32.totalorder %s25, 0
      %p302 = por %p300, %p301
      %p303 = scmp.ne.s32.totalorder %s295, %s297
      %p304 = scmp.eq.s32.totalorder %s30, 1
      %p305 = por %p303, %p304
      %p306 = scmp.ne.s32.totalorder %s297, %s298
      %p307 = scmp.eq.s32.totalorder %s30, 0
      %p308 = por %p306, %p307
      %p309 = scmp.ne.s32.totalorder %s297, %s298
      %p310 = scmp.eq.s32.totalorder %s31, 1
      %p311 = por %p309, %p310
      %p313 = scmp.ne.s32.totalorder %s298, %s312
      %p314 = scmp.eq.s32.totalorder %s31, 0
      %p315 = por %p313, %p314
      %s317 = sadd.s32 %s316, 1
      %p320 = scmp.eq.s32.totalorder %s25, 1
      %p321 = scmp.ne.s32.totalorder %s316, %s318
      %p322 = scmp.eq.s32.totalorder %s25, 0
      %p323 = por %p321, %p322
      %p324 = scmp.ne.s32.totalorder %s316, %s318
      %p325 = scmp.eq.s32.totalorder %s30, 1
      %p326 = por %p324, %p325
      %p327 = scmp.ne.s32.totalorder %s318, %s319
      %p328 = scmp.eq.s32.totalorder %s30, 0
      %p329 = por %p327, %p328
      %p330 = scmp.ne.s32.totalorder %s318, %s319
      %p331 = scmp.eq.s32.totalorder %s31, 1
      %p332 = por %p330, %p331
      %p334 = scmp.ne.s32.totalorder %s319, %s333
      %p335 = scmp.eq.s32.totalorder %s31, 0
      %p336 = por %p334, %p335
      %s338 = sadd.s32 %s337, 1
      %p341 = scmp.eq.s32.totalorder %s25, 1
      %p342 = scmp.ne.s32.totalorder %s337, %s339
      %p343 = scmp.eq.s32.totalorder %s25, 0
      %p344 = por %p342, %p343
      %p345 = scmp.ne.s32.totalorder %s337, %s339
      %p346 = scmp.eq.s32.totalorder %s30, 1
      %p347 = por %p345, %p346
      %p348 = scmp.ne.s32.totalorder %s339, %s340
      %p349 = scmp.eq.s32.totalorder %s30, 0
      %p350 = por %p348, %p349
      %p351 = scmp.ne.s32.totalorder %s339, %s340
      %p352 = scmp.eq.s32.totalorder %s31, 1
      %p353 = por %p351, %p352
      %p355 = scmp.ne.s32.totalorder %s340, %s354
      %p356 = scmp.eq.s32.totalorder %s31, 0
      %p357 = por %p355, %p356
      %s359 = sadd.s32 %s358, 1
      %p362 = scmp.eq.s32.totalorder %s25, 1
      %p363 = scmp.ne.s32.totalorder %s358, %s360
      %p364 = scmp.eq.s32.totalorder %s25, 0
      %p365 = por %p363, %p364
      %p366 = scmp.ne.s32.totalorder %s358, %s360
      %p367 = scmp.eq.s32.totalorder %s30, 1
      %p368 = por %p366, %p367
      %p369 = scmp.ne.s32.totalorder %s360, %s361
      %p370 = scmp.eq.s32.totalorder %s30, 0
      %p371 = por %p369, %p370
      %p372 = scmp.ne.s32.totalorder %s360, %s361
      %p373 = scmp.eq.s32.totalorder %s31, 1
      %p374 = por %p372, %p373
      %p376 = scmp.ne.s32.totalorder %s361, %s375
      %p377 = scmp.eq.s32.totalorder %s31, 0
      %p378 = por %p376, %p377
      %s380 = sadd.s32 %s379, 1
      %p383 = scmp.eq.s32.totalorder %s25, 1
      %p384 = scmp.ne.s32.totalorder %s379, %s381
      %p385 = scmp.eq.s32.totalorder %s25, 0
      %p386 = por %p384, %p385
      %p387 = scmp.ne.s32.totalorder %s379, %s381
      %p388 = scmp.eq.s32.totalorder %s30, 1
      %p389 = por %p387, %p388
      %p390 = scmp.ne.s32.totalorder %s381, %s382
      %p391 = scmp.eq.s32.totalorder %s30, 0
      %p392 = por %p390, %p391
      %p393 = scmp.ne.s32.totalorder %s381, %s382
      %p394 = scmp.eq.s32.totalorder %s31, 1
      %p395 = por %p393, %p394
      %p397 = scmp.ne.s32.totalorder %s382, %s396
      %p398 = scmp.eq.s32.totalorder %s31, 0
      %p399 = por %p397, %p398
      %s401 = sadd.s32 %s400, 1
      %p404 = scmp.eq.s32.totalorder %s25, 1
      %p405 = scmp.ne.s32.totalorder %s400, %s402
      %p406 = scmp.eq.s32.totalorder %s25, 0
      %p407 = por %p405, %p406
      %p408 = scmp.ne.s32.totalorder %s400, %s402
      %p409 = scmp.eq.s32.totalorder %s30, 1
      %p410 = por %p408, %p409
      %p411 = scmp.ne.s32.totalorder %s402, %s403
      %p412 = scmp.eq.s32.totalorder %s30, 0
      %p413 = por %p411, %p412
      %p414 = scmp.ne.s32.totalorder %s402, %s403
      %p415 = scmp.eq.s32.totalorder %s31, 1
      %p416 = por %p414, %p415
      %p418 = scmp.ne.s32.totalorder %s403, %s417
      %p419 = scmp.eq.s32.totalorder %s31, 0
      %p420 = por %p418, %p419
      %s422 = sadd.s32 %s421, 1
      %p425 = scmp.eq.s32.totalorder %s25, 1
      %p426 = scmp.ne.s32.totalorder %s421, %s423
      %p427 = scmp.eq.s32.totalorder %s25, 0
      %p428 = por %p426, %p427
      %p429 = scmp.ne.s32.totalorder %s421, %s423
      %p430 = scmp.eq.s32.totalorder %s30, 1
      %p431 = por %p429, %p430
      %p432 = scmp.ne.s32.totalorder %s423, %s424
      %p433 = scmp.eq.s32.totalorder %s30, 0
      %p434 = por %p432, %p433
      %p435 = scmp.ne.s32.totalorder %s423, %s424
      %p436 = scmp.eq.s32.totalorder %s31, 1
      %p437 = por %p435, %p436
      %p439 = scmp.ne.s32.totalorder %s424, %s438
      %p440 = scmp.eq.s32.totalorder %s31, 0
      %p441 = por %p439, %p440
      %s442 = ssub.s32 %s25, %s32
      %p443 = scmp.eq.s32.totalorder %s442, 0
      %s445 = sadd.s32 %s444, 1
      %s446 = scalar_select %p443, %s444, %s445
      %p449 = pneg %p443
      %p450 = scmp.eq.s32.totalorder %s25, 1
      %p451 = por %p449, %p450
      %p452 = scmp.ne.s32.totalorder %s444, %s447
      %p453 = scmp.eq.s32.totalorder %s25, 0
      %p454 = por %p452, %p453
      %p455 = scmp.ne.s32.totalorder %s444, %s447
      %p456 = scmp.eq.s32.totalorder %s30, 1
      %p457 = por %p455, %p456
      %p458 = scmp.ne.s32.totalorder %s447, %s448
      %p459 = scmp.eq.s32.totalorder %s30, 0
      %p460 = por %p458, %p459
      %p461 = scmp.ne.s32.totalorder %s447, %s448
      %p462 = scmp.eq.s32.totalorder %s31, 1
      %p463 = por %p461, %p462
      %p465 = scmp.ne.s32.totalorder %s448, %s464
      %p466 = scmp.eq.s32.totalorder %s31, 0
      %p467 = por %p465, %p466
      %p468 = scmp.le.s32.totalorder 1, %s25
      %p469 = scmp.lt.s32.totalorder %s25, 3
      %p470 = pnand %p468, %p469
      %p471 = pneg %p470
      // Predicated region
      $region9: #{mlp_decoder_forward.1} parent=5 // pred_check
        _
      $region10: #{mlp_decoder_forward.1} parent=5 // pred_check_branch
        %473 = sbr.rel (%p470) target = $region12
      $region11: #{mlp_decoder_forward.1} parent=5 // pred_region
        %s474 = ssub.s32 %s25, 1
        // Predicated region
        $region13: #{mlp_decoder_forward.1} parent=11 // pred_check
          %p475 = pneg %p98
        $region14: #{mlp_decoder_forward.1} parent=11 // pred_check_branch
          %477 = sbr.rel (%p475) target = $region16
        $region15: #{mlp_decoder_forward.1} parent=11 // pred_region
          _
        $region16: #{mlp_decoder_forward.1} parent=11 // pred_fallthru
          _
        // Predicated region
        $region17: #{mlp_decoder_forward.1} parent=11 // pred_check
          %p478 = pneg %p119
        $region18: #{mlp_decoder_forward.1} parent=11 // pred_check_branch
          %480 = sbr.rel (%p478) target = $region20
        $region19: #{mlp_decoder_forward.1} parent=11 // pred_region
          _
        $region20: #{mlp_decoder_forward.1} parent=11 // pred_fallthru
          _
        // Predicated region
        $region21: #{mlp_decoder_forward.1} parent=11 // pred_check
          %p481 = pneg %p140
        $region22: #{mlp_decoder_forward.1} parent=11 // pred_check_branch
          %483 = sbr.rel (%p481) target = $region24
        $region23: #{mlp_decoder_forward.1} parent=11 // pred_region
          _
        $region24: #{mlp_decoder_forward.1} parent=11 // pred_fallthru
          _
        // Predicated region
        $region25: #{mlp_decoder_forward.1} parent=11 // pred_check
          %p484 = pneg %p161
        $region26: #{mlp_decoder_forward.1} parent=11 // pred_check_branch
          %486 = sbr.rel (%p484) target = $region28
        $region27: #{mlp_decoder_forward.1} parent=11 // pred_region
          _
        $region28: #{mlp_decoder_forward.1} parent=11 // pred_fallthru
          _
        // Predicated region
        $region29: #{mlp_decoder_forward.1} parent=11 // pred_check
          %p487 = pneg %p182
        $region30: #{mlp_decoder_forward.1} parent=11 // pred_check_branch
          %489 = sbr.rel (%p487) target = $region32
        $region31: #{mlp_decoder_forward.1} parent=11 // pred_region
          _
        $region32: #{mlp_decoder_forward.1} parent=11 // pred_fallthru
          _
        // Predicated region
        $region33: #{mlp_decoder_forward.1} parent=11 // pred_check
          %p490 = pneg %p203
        $region34: #{mlp_decoder_forward.1} parent=11 // pred_check_branch
          %492 = sbr.rel (%p490) target = $region36
        $region35: #{mlp_decoder_forward.1} parent=11 // pred_region
          _
        $region36: #{mlp_decoder_forward.1} parent=11 // pred_fallthru
          _
        // Predicated region
        $region37: #{mlp_decoder_forward.1} parent=11 // pred_check
          %p493 = pneg %p224
        $region38: #{mlp_decoder_forward.1} parent=11 // pred_check_branch
          %495 = sbr.rel (%p493) target = $region40
        $region39: #{mlp_decoder_forward.1} parent=11 // pred_region
          _
        $region40: #{mlp_decoder_forward.1} parent=11 // pred_fallthru
          _
        // Predicated region
        $region41: #{mlp_decoder_forward.1} parent=11 // pred_check
          %p496 = pneg %p245
        $region42: #{mlp_decoder_forward.1} parent=11 // pred_check_branch
          %498 = sbr.rel (%p496) target = $region44
        $region43: #{mlp_decoder_forward.1} parent=11 // pred_region
          _
        $region44: #{mlp_decoder_forward.1} parent=11 // pred_fallthru
          _
        // Predicated region
        $region45: #{mlp_decoder_forward.1} parent=11 // pred_check
          %p499 = pneg %p266
        $region46: #{mlp_decoder_forward.1} parent=11 // pred_check_branch
          %501 = sbr.rel (%p499) target = $region48
        $region47: #{mlp_decoder_forward.1} parent=11 // pred_region
          _
        $region48: #{mlp_decoder_forward.1} parent=11 // pred_fallthru
          _
        // Predicated region
        $region49: #{mlp_decoder_forward.1} parent=11 // pred_check
          %p502 = pneg %p287
        $region50: #{mlp_decoder_forward.1} parent=11 // pred_check_branch
          %504 = sbr.rel (%p502) target = $region52
        $region51: #{mlp_decoder_forward.1} parent=11 // pred_region
          _
        $region52: #{mlp_decoder_forward.1} parent=11 // pred_fallthru
          _
        // Predicated region
        $region53: #{mlp_decoder_forward.1} parent=11 // pred_check
          %p505 = pneg %p308
        $region54: #{mlp_decoder_forward.1} parent=11 // pred_check_branch
          %507 = sbr.rel (%p505) target = $region56
        $region55: #{mlp_decoder_forward.1} parent=11 // pred_region
          _
        $region56: #{mlp_decoder_forward.1} parent=11 // pred_fallthru
          _
        // Predicated region
        $region57: #{mlp_decoder_forward.1} parent=11 // pred_check
          %p508 = pneg %p329
        $region58: #{mlp_decoder_forward.1} parent=11 // pred_check_branch
          %510 = sbr.rel (%p508) target = $region60
        $region59: #{mlp_decoder_forward.1} parent=11 // pred_region
          _
        $region60: #{mlp_decoder_forward.1} parent=11 // pred_fallthru
          _
        // Predicated region
        $region61: #{mlp_decoder_forward.1} parent=11 // pred_check
          %p511 = pneg %p350
        $region62: #{mlp_decoder_forward.1} parent=11 // pred_check_branch
          %513 = sbr.rel (%p511) target = $region64
        $region63: #{mlp_decoder_forward.1} parent=11 // pred_region
          _
        $region64: #{mlp_decoder_forward.1} parent=11 // pred_fallthru
          _
        // Predicated region
        $region65: #{mlp_decoder_forward.1} parent=11 // pred_check
          %p514 = pneg %p371
        $region66: #{mlp_decoder_forward.1} parent=11 // pred_check_branch
          %516 = sbr.rel (%p514) target = $region68
        $region67: #{mlp_decoder_forward.1} parent=11 // pred_region
          _
        $region68: #{mlp_decoder_forward.1} parent=11 // pred_fallthru
          _
        // Predicated region
        $region69: #{mlp_decoder_forward.1} parent=11 // pred_check
          %p517 = pneg %p392
        $region70: #{mlp_decoder_forward.1} parent=11 // pred_check_branch
          %519 = sbr.rel (%p517) target = $region72
        $region71: #{mlp_decoder_forward.1} parent=11 // pred_region
          _
        $region72: #{mlp_decoder_forward.1} parent=11 // pred_fallthru
          _
        // Predicated region
        $region73: #{mlp_decoder_forward.1} parent=11 // pred_check
          %p520 = pneg %p413
        $region74: #{mlp_decoder_forward.1} parent=11 // pred_check_branch
          %522 = sbr.rel (%p520) target = $region76
        $region75: #{mlp_decoder_forward.1} parent=11 // pred_region
          _
        $region76: #{mlp_decoder_forward.1} parent=11 // pred_fallthru
          _
        // Predicated region
        $region77: #{mlp_decoder_forward.1} parent=11 // pred_check
          %p523 = pneg %p434
        $region78: #{mlp_decoder_forward.1} parent=11 // pred_check_branch
          %525 = sbr.rel (%p523) target = $region80
        $region79: #{mlp_decoder_forward.1} parent=11 // pred_region
          _
        $region80: #{mlp_decoder_forward.1} parent=11 // pred_fallthru
          _
      $region12: #{mlp_decoder_forward.1} parent=5 // pred_fallthru
        _
      %p526 = scmp.lt.s32.totalorder %s25, 2
      // Predicated region
      $region81: #{mlp_decoder_forward.1} parent=5 // pred_check
        %p527 = pneg %p526
      $region82: #{mlp_decoder_forward.1} parent=5 // pred_check_branch
        %529 = sbr.rel (%p527) target = $region84
      $region83: #{mlp_decoder_forward.1} parent=5 // pred_region
        // Predicated region
        $region85: #{mlp_decoder_forward.1} parent=83 // pred_check
          %p530 = pneg %p45
        $region86: #{mlp_decoder_forward.1} parent=83 // pred_check_branch
          %532 = sbr.rel (%p530) target = $region88
        $region87: #{mlp_decoder_forward.1} parent=83 // pred_region
          %s533 = smul.u32 5, %s25
          %p534 = scmp.lt.s32.totalorder %s533, 9
          %s535 = scalar_select %p534, %s533, 9
          %s536 = smul.addr %s535, 8
          %s537 = scalar_lea.vmem %s0, %s536
          %s538 = smul.u32 5, %s25
        $region88: #{mlp_decoder_forward.1} parent=83 // pred_fallthru
          _
        // Predicated region
        $region89: #{mlp_decoder_forward.1} parent=83 // pred_check
          %p539 = pneg %p71
        $region90: #{mlp_decoder_forward.1} parent=83 // pred_check_branch
          %541 = sbr.rel (%p539) target = $region92
        $region91: #{mlp_decoder_forward.1} parent=83 // pred_region
          %s542 = smul.u32 20, %s25
          %p543 = scmp.lt.s32.totalorder %s542, 39
          %s544 = scalar_select %p543, %s542, 39
          %s545 = smul.addr %s544, 8
          %s546 = scalar_lea.vmem %s1, %s545
          %s547 = smul.u32 20, %s25
        $region92: #{mlp_decoder_forward.1} parent=83 // pred_fallthru
          _
      $region84: #{mlp_decoder_forward.1} parent=5 // pred_fallthru
        _
      %p548 = scmp.le.s32.totalorder 1, %s25
      %p549 = scmp.lt.s32.totalorder %s25, 3
      %p550 = pnand %p548, %p549
      %p551 = pneg %p550
      // Predicated region
      $region93: #{mlp_decoder_forward.1} parent=5 // pred_check
        _
      $region94: #{mlp_decoder_forward.1} parent=5 // pred_check_branch
        %553 = sbr.rel (%p550) target = $region96
      $region95: #{mlp_decoder_forward.1} parent=5 // pred_region
        %s554 = ssub.s32 %s25, 1
        %s555 = smul.u32 5, %s30
        %p556 = scmp.lt.s32.totalorder %s555, 9
        %s557 = scalar_select %p556, %s555, 9
        %s558 = smul.addr %s557, 8
        %s559 = scalar_lea.vmem %s0, %s558
        %p560 = pneg %p51
        %p561 = pneg %p48
        %s562 = smul.u32 20, %s30
        %p563 = scmp.lt.s32.totalorder %s562, 39
        %s564 = scalar_select %p563, %s562, 39
        %s565 = smul.addr %s564, 8
        %s566 = scalar_lea.vmem %s1, %s565
        %p567 = pneg %p77
        %p568 = pneg %p74
        %p569 = pneg %p98
        %p570 = pneg %p95
        %p571 = pneg %p119
        %p572 = pneg %p116
        %p573 = pneg %p140
        %p574 = pneg %p137
        %p575 = pneg %p161
        %p576 = pneg %p158
        %p577 = pneg %p182
        %p578 = pneg %p179
        %p579 = pneg %p203
        %p580 = pneg %p200
        %p581 = pneg %p224
        %p582 = pneg %p221
        %p583 = pneg %p245
        %p584 = pneg %p242
        %p585 = pneg %p266
        %p586 = pneg %p263
        %p587 = pneg %p287
        %p588 = pneg %p284
        %p589 = pneg %p308
        %p590 = pneg %p305
        %p591 = pneg %p329
        %p592 = pneg %p326
        %p593 = pneg %p350
        %p594 = pneg %p347
        %p595 = pneg %p371
        %p596 = pneg %p368
        %p597 = pneg %p392
        %p598 = pneg %p389
        %p599 = pneg %p413
        %p600 = pneg %p410
        %p601 = pneg %p434
        %p602 = pneg %p431
        %p603 = pneg %p460
        %p604 = pneg %p457
        %s605 = sand.u32 %s447, 1
        %s606 = sand.u32 %s447, 1
        %s607 = smul.addr %s606, 80
        %s608 = scalar_lea.vmem [#allocation2], %s607
        %s609 = smul.u32 5, %s30
        %p610 = scmp.lt.s32.totalorder %s609, 9
        %s611 = scalar_select %p610, %s609, 9
        %s612 = smul.addr %s611, 8
        %s613 = scalar_lea.vmem %s0, %s612
        %s614 = smul.u32 5, %s30
        %s615 = smul.u32 20, %s30
        %p616 = scmp.lt.s32.totalorder %s615, 39
        %s617 = scalar_select %p616, %s615, 39
        %s618 = smul.addr %s617, 8
        %s619 = scalar_lea.vmem %s1, %s618
        %s620 = smul.u32 20, %s30
        %s621 = smul.u32 5, %s30
        %v622 = vld [vmem:[%s613] sm:$0xff]
        %v623 = vld [vmem:[%s613 + $0x8] sm:$0xff]
        %v624 = vld [vmem:[%s613 + $0x10] sm:$0xff]
        %v625 = vld [vmem:[%s613 + $0x18] sm:$0xff]
        %v626 = vld [vmem:[%s613 + $0x20] sm:$0xff]
        %v627 = vld [vmem:[%s2] sm:$0xff]
        %v628 = vld [vmem:[%s2 + $0x8] sm:$0xff]
        %v629 = vld [vmem:[%s2 + $0x10] sm:$0xff]
        %v630 = vld [vmem:[%s2 + $0x18] sm:$0xff]
        %v631 = vld [vmem:[%s2 + $0x20] sm:$0xff]
        %v632 = vld [vmem:[%s2 + $0x28] sm:$0xff]
        %v633 = vld [vmem:[%s2 + $0x30] sm:$0xff]
        %v634 = vld [vmem:[%s2 + $0x38] sm:$0xff]
        %v635 = vld [vmem:[%s2 + $0x40] sm:$0xff]
        %v636 = vld [vmem:[%s2 + $0x48] sm:$0xff]
        %v637 = vld [vmem:[%s2 + $0x50] sm:$0xff]
        %v638 = vld [vmem:[%s2 + $0x58] sm:$0xff]
        %v639 = vld [vmem:[%s2 + $0x60] sm:$0xff]
        %v640 = vld [vmem:[%s2 + $0x68] sm:$0xff]
        %v641 = vld [vmem:[%s2 + $0x70] sm:$0xff]
        %v642 = vld [vmem:[%s2 + $0x78] sm:$0xff]
        %v643 = vld [vmem:[%s2 + $0x80] sm:$0xff]
        %v644 = vld [vmem:[%s2 + $0x88] sm:$0xff]
        %v645 = vld [vmem:[%s2 + $0x90] sm:$0xff]
        %v646 = vld [vmem:[%s2 + $0x98] sm:$0xff]
        %v647 = vld [vmem:[%s3] sm:$0xff]
        %v648 = vld [vmem:[%s3 + $0x8] sm:$0xff]
        %v649 = vld [vmem:[%s3 + $0x10] sm:$0xff]
        %v650 = vld [vmem:[%s3 + $0x18] sm:$0xff]
        %v651 = vld [vmem:[%s3 + $0x20] sm:$0xff]
        %v652 = vld [vmem:[%s3 + $0x28] sm:$0xff]
        %v653 = vld [vmem:[%s3 + $0x30] sm:$0xff]
        %v654 = vld [vmem:[%s3 + $0x38] sm:$0xff]
        %v655 = vld [vmem:[%s3 + $0x40] sm:$0xff]
        %v656 = vld [vmem:[%s3 + $0x48] sm:$0xff]
        %v657 = vld [vmem:[%s3 + $0x50] sm:$0xff]
        %v658 = vld [vmem:[%s3 + $0x58] sm:$0xff]
        %v659 = vld [vmem:[%s3 + $0x60] sm:$0xff]
        %v660 = vld [vmem:[%s3 + $0x68] sm:$0xff]
        %v661 = vld [vmem:[%s3 + $0x70] sm:$0xff]
        %v662 = vld [vmem:[%s3 + $0x78] sm:$0xff]
        %v663 = vld [vmem:[%s3 + $0x80] sm:$0xff]
        %v664 = vld [vmem:[%s3 + $0x88] sm:$0xff]
        %v665 = vld [vmem:[%s3 + $0x90] sm:$0xff]
        %v666 = vld [vmem:[%s3 + $0x98] sm:$0xff]
        %v667 = vld [vmem:[%s4] sm:$0xff]
        %v668 = vld [vmem:[%s4 + $0x8] sm:$0xff]
        %v669 = vld [vmem:[%s4 + $0x10] sm:$0xff]
        %v670 = vld [vmem:[%s4 + $0x18] sm:$0xff]
        %v671 = vld [vmem:[%s4 + $0x20] sm:$0xff]
        %v672 = vld [vmem:[%s4 + $0x28] sm:$0xff]
        %v673 = vld [vmem:[%s4 + $0x30] sm:$0xff]
        %v674 = vld [vmem:[%s4 + $0x38] sm:$0xff]
        %v675 = vld [vmem:[%s4 + $0x40] sm:$0xff]
        %v676 = vld [vmem:[%s4 + $0x48] sm:$0xff]
        %v677 = vld [vmem:[%s5] sm:$0xf]
        %v678 = vld [vmem:[%s6] sm:$0xf]
        %v679 = vld [vmem:[%s7] sm:$0x1]
        %v680 = vld [vmem:[%s8] sm:$0xff]
        %v681 = vld [vmem:[%s8 + $0x8] sm:$0xff]
        %v682 = vld [vmem:[%s8 + $0x10] sm:$0xff]
        %v683 = vld [vmem:[%s8 + $0x18] sm:$0xff]
        %v684 = vld [vmem:[%s9] sm:$0x1]
        %v685 = vld [vmem:[%s12] sm:$0xf]
        %v686 = vld [vmem:[%s13] sm:$0xff]
        %v687 = vld [vmem:[%s13 + $0x8] sm:$0xff]
        %v688 = vld [vmem:[%s14] sm:$0x1]
        %v689 = vld [vmem:[%s15] sm:$0xff]
        %v690 = vld [vmem:[%s15 + $0x8] sm:$0xff]
        %v691 = vld [vmem:[%s16] sm:$0x1]
        %v692 = vld [vmem:[%s17] sm:$0xff]
        %v693 = vld [vmem:[%s17 + $0x8] sm:$0xff]
        %v694 = vld [vmem:[%s18] sm:$0x1]
        %v695 = vld [vmem:[%s11] sm:$0xff]
        %v696 = vld [vmem:[%s11 + $0x8] sm:$0xff]
        %v697 = vld [vmem:[%s11 + $0x10] sm:$0xff]
        %v698 = vld [vmem:[%s11 + $0x18] sm:$0xff]
        %v699 = vld [vmem:[%s619] sm:$0xff]
        %v700 = vld [vmem:[%s619 + $0x8] sm:$0xff]
        %v701 = vld [vmem:[%s619 + $0x10] sm:$0xff]
        %v702 = vld [vmem:[%s619 + $0x18] sm:$0xff]
        %v703 = vld [vmem:[%s619 + $0x20] sm:$0xff]
        %v704 = vld [vmem:[%s619 + $0x28] sm:$0xff]
        %v705 = vld [vmem:[%s619 + $0x30] sm:$0xff]
        %v706 = vld [vmem:[%s619 + $0x38] sm:$0xff]
        %v707 = vld [vmem:[%s619 + $0x40] sm:$0xff]
        %v708 = vld [vmem:[%s619 + $0x48] sm:$0xff]
        %v709 = vld [vmem:[%s619 + $0x50] sm:$0xff]
        %v710 = vld [vmem:[%s619 + $0x58] sm:$0xff]
        %v711 = vld [vmem:[%s619 + $0x60] sm:$0xff]
        %v712 = vld [vmem:[%s619 + $0x68] sm:$0xff]
        %v713 = vld [vmem:[%s619 + $0x70] sm:$0xff]
        %v714 = vld [vmem:[%s619 + $0x78] sm:$0xff]
        %v715 = vld [vmem:[%s619 + $0x80] sm:$0xff]
        %v716 = vld [vmem:[%s619 + $0x88] sm:$0xff]
        %v717 = vld [vmem:[%s619 + $0x90] sm:$0xff]
        %v718 = vld [vmem:[%s619 + $0x98] sm:$0xff]
        %v719 = vld [vmem:[%s10] sm:$0x3]
        %vm720 = vcmask 15360
        %v722 = vsel %vm720, %v699, 0
        %v725 = vsel %vm720, %v700, 0
        %v728 = vsel %vm720, %v701, 0
        %v731 = vsel %vm720, %v702, 0
        %v734 = vsel %vm720, %v703, 0
        %v737 = vsel %vm720, %v704, 0
        %v740 = vsel %vm720, %v705, 0
        %v743 = vsel %vm720, %v706, 0
        %v746 = vsel %vm720, %v707, 0
        %v749 = vsel %vm720, %v708, 0
        %v752 = vsel %vm720, %v709, 0
        %v755 = vsel %vm720, %v710, 0
        %v758 = vsel %vm720, %v711, 0
        %v761 = vsel %vm720, %v712, 0
        %v764 = vsel %vm720, %v713, 0
        %v767 = vsel %vm720, %v714, 0
        %v770 = vsel %vm720, %v715, 0
        %v773 = vsel %vm720, %v716, 0
        %v776 = vsel %vm720, %v717, 0
        %v779 = vsel %vm720, %v718, 0
        %vm781 = vcmask 1041408
        %v783 = vsel %vm781, %v719, 0
        %785 = vmatprep.subr.mxu0 0.0
        %786 = vmatpush1.msra.mxu0 %v783
        %787 = vmatprep.subr.mxu0 0.0
        %788 = vmatpush1.msra.mxu0 0.0
        %789 = vmatprep.subr.mxu0 0.0
        %790 = vmatpush1.msra.mxu0 0.0
        %791 = vmatprep.subr.mxu0 0.0
        %792 = vmatpush1.msra.mxu0 0.0
        %793 = vmatprep.subr.mxu0 0.0
        %794 = vmatpush1.msra.mxu0 0.0
        %795 = vmatprep.subr.mxu0 0.0
        %796 = vmatpush1.msra.mxu0 0.0
        %797 = vmatprep.subr.mxu0 0.0
        %798 = vmatpush1.msra.mxu0 0.0
        %799 = vmatprep.subr.mxu0 0.0
        %800 = vmatpush1.msra.mxu0 0.0
        %801 = vmatprep.subr.mxu0 0.0
        %802 = vmatpush1.msra.mxu0 0.0
        %803 = vmatprep.subr.mxu0 0.0
        %804 = vmatpush1.msra.mxu0 0.0
        %805 = vmatprep.subr.mxu0 0.0
        %806 = vmatpush1.msra.mxu0 0.0
        %807 = vmatprep.subr.mxu0 0.0
        %808 = vmatpush1.msra.mxu0 0.0
        %809 = vmatprep.subr.mxu0 0.0
        %810 = vmatpush1.msra.mxu0 0.0
        %811 = vmatprep.subr.mxu0 0.0
        %812 = vmatpush1.msra.mxu0 0.0
        %813 = vmatprep.subr.mxu0 0.0
        %814 = vmatpush1.msra.mxu0 0.0
        %815 = vmatprep.subr.mxu0 0.0
        %816 = vmatpush1.msra.mxu0 0.0
        %817 = vmatprep.subr.mxu0 0.0
        %818 = vmatpush1.msra.mxu0 0.0
        %819 = vmatprep.subr.mxu0 0.0
        %820 = vmatpush1.msra.mxu0 0.0
        %821 = vmatprep.subr.mxu0 0.0
        %822 = vmatpush1.msra.mxu0 0.0
        %823 = vmatprep.subr.mxu0 0.0
        %824 = vmatpush1.msra.mxu0 0.0
        %825 = vmatprep.subr.mxu0 0.0
        %826 = vmatpush1.msra.mxu0 0.0
        %827 = vmatprep.subr.mxu0 0.0
        %828 = vmatpush1.msra.mxu0 0.0
        %829 = vmatprep.subr.mxu0 0.0
        %830 = vmatpush1.msra.mxu0 0.0
        %831 = vmatprep.subr.mxu0 0.0
        %832 = vmatpush1.msra.mxu0 0.0
        %833 = vmatprep.subr.mxu0 0.0
        %834 = vmatpush1.msra.mxu0 0.0
        %835 = vmatprep.subr.mxu0 0.0
        %836 = vmatpush1.msra.mxu0 0.0
        %837 = vmatprep.subr.mxu0 0.0
        %838 = vmatpush1.msra.mxu0 0.0
        %839 = vmatprep.subr.mxu0 0.0
        %840 = vmatpush1.msra.mxu0 0.0
        %841 = vmatprep.subr.mxu0 0.0
        %842 = vmatpush1.msra.mxu0 0.0
        %843 = vmatprep.subr.mxu0 0.0
        %844 = vmatpush1.msra.mxu0 0.0
        %845 = vmatprep.subr.mxu0 0.0
        %846 = vmatpush1.msra.mxu0 0.0
        %847 = vmatprep.subr.mxu0 0.0
        %848 = vmatpush1.msra.mxu0 0.0
        %849 = vmatprep.mubr.f32.mxu0 0.0
        %850 = vmatmul.mubr.f32.gmra.mrb[0].mxu0 %v722
        %v851 = vpop.f32.mrb[0].mxu0
        %v852 = vadd.f32 0.0, %v851
        %v853 = vpop.f32.mrb[0].mxu0
        %854 = vmatprep.mubr.f32.mxu0 0.0
        %855 = vmatmul.mubr.f32.gmra.mrb[0].mxu0 %v725
        %v856 = vpop.f32.mrb[0].mxu0
        %v857 = vadd.f32 0.0, %v856
        %v858 = vpop.f32.mrb[0].mxu0
        %859 = vmatprep.mubr.f32.mxu0 0.0
        %860 = vmatmul.mubr.f32.gmra.mrb[0].mxu0 %v728
        %v861 = vpop.f32.mrb[0].mxu0
        %v862 = vadd.f32 0.0, %v861
        %v863 = vpop.f32.mrb[0].mxu0
        %864 = vmatprep.mubr.f32.mxu0 0.0
        %865 = vmatmul.mubr.f32.gmra.mrb[0].mxu0 %v731
        %v866 = vpop.f32.mrb[0].mxu0
        %v867 = vadd.f32 0.0, %v866
        %v868 = vpop.f32.mrb[0].mxu0
        %869 = vmatprep.mubr.f32.mxu0 0.0
        %870 = vmatmul.mubr.f32.gmra.mrb[0].mxu0 %v734
        %v871 = vpop.f32.mrb[0].mxu0
        %v872 = vadd.f32 0.0, %v871
        %v873 = vpop.f32.mrb[0].mxu0
        %874 = vmatprep.mubr.f32.mxu0 0.0
        %875 = vmatmul.mubr.f32.gmra.mrb[0].mxu0 %v737
        %v876 = vpop.f32.mrb[0].mxu0
        %v877 = vadd.f32 0.0, %v876
        %v878 = vpop.f32.mrb[0].mxu0
        %879 = vmatprep.mubr.f32.mxu0 0.0
        %880 = vmatmul.mubr.f32.gmra.mrb[0].mxu0 %v740
        %v881 = vpop.f32.mrb[0].mxu0
        %v882 = vadd.f32 0.0, %v881
        %v883 = vpop.f32.mrb[0].mxu0
        %884 = vmatprep.mubr.f32.mxu0 0.0
        %885 = vmatmul.mubr.f32.gmra.mrb[0].mxu0 %v743
        %v886 = vpop.f32.mrb[0].mxu0
        %v887 = vadd.f32 0.0, %v886
        %v888 = vpop.f32.mrb[0].mxu0
        %889 = vmatprep.mubr.f32.mxu0 0.0
        %890 = vmatmul.mubr.f32.gmra.mrb[0].mxu0 %v746
        %v891 = vpop.f32.mrb[0].mxu0
        %v892 = vadd.f32 0.0, %v891
        %v893 = vpop.f32.mrb[0].mxu0
        %894 = vmatprep.mubr.f32.mxu0 0.0
        %895 = vmatmul.mubr.f32.gmra.mrb[0].mxu0 %v749
        %v896 = vpop.f32.mrb[0].mxu0
        %v897 = vadd.f32 0.0, %v896
        %v898 = vpop.f32.mrb[0].mxu0
        %899 = vmatprep.mubr.f32.mxu0 0.0
        %900 = vmatmul.mubr.f32.gmra.mrb[0].mxu0 %v752
        %v901 = vpop.f32.mrb[0].mxu0
        %v902 = vadd.f32 0.0, %v901
        %v903 = vpop.f32.mrb[0].mxu0
        %904 = vmatprep.mubr.f32.mxu0 0.0
        %905 = vmatmul.mubr.f32.gmra.mrb[0].mxu0 %v755
        %v906 = vpop.f32.mrb[0].mxu0
        %v907 = vadd.f32 0.0, %v906
        %v908 = vpop.f32.mrb[0].mxu0
        %909 = vmatprep.mubr.f32.mxu0 0.0
        %910 = vmatmul.mubr.f32.gmra.mrb[0].mxu0 %v758
        %v911 = vpop.f32.mrb[0].mxu0
        %v912 = vadd.f32 0.0, %v911
        %v913 = vpop.f32.mrb[0].mxu0
        %914 = vmatprep.mubr.f32.mxu0 0.0
        %915 = vmatmul.mubr.f32.gmra.mrb[0].mxu0 %v761
        %v916 = vpop.f32.mrb[0].mxu0
        %v917 = vadd.f32 0.0, %v916
        %v918 = vpop.f32.mrb[0].mxu0
        %919 = vmatprep.mubr.f32.mxu0 0.0
        %920 = vmatmul.mubr.f32.gmra.mrb[0].mxu0 %v764
        %v921 = vpop.f32.mrb[0].mxu0
        %v922 = vadd.f32 0.0, %v921
        %v923 = vpop.f32.mrb[0].mxu0
        %924 = vmatprep.mubr.f32.mxu0 0.0
        %925 = vmatmul.mubr.f32.gmra.mrb[0].mxu0 %v767
        %v926 = vpop.f32.mrb[0].mxu0
        %v927 = vadd.f32 0.0, %v926
        %v928 = vpop.f32.mrb[0].mxu0
        %929 = vmatprep.mubr.f32.mxu0 0.0
        %930 = vmatmul.mubr.f32.gmra.mrb[0].mxu0 %v770
        %v931 = vpop.f32.mrb[0].mxu0
        %v932 = vadd.f32 0.0, %v931
        %v933 = vpop.f32.mrb[0].mxu0
        %934 = vmatprep.mubr.f32.mxu0 0.0
        %935 = vmatmul.mubr.f32.gmra.mrb[0].mxu0 %v773
        %v936 = vpop.f32.mrb[0].mxu0
        %v937 = vadd.f32 0.0, %v936
        %v938 = vpop.f32.mrb[0].mxu0
        %939 = vmatprep.mubr.f32.mxu0 0.0
        %940 = vmatmul.mubr.f32.gmra.mrb[0].mxu0 %v776
        %v941 = vpop.f32.mrb[0].mxu0
        %v942 = vadd.f32 0.0, %v941
        %v943 = vpop.f32.mrb[0].mxu0
        %944 = vmatprep.mubr.f32.mxu0 0.0
        %945 = vmatmul.mubr.f32.gmra.mrb[0].mxu0 %v779
        %v946 = vpop.f32.mrb[0].mxu0
        %v947 = vadd.f32 0.0, %v946
        %v948 = vpop.f32.mrb[0].mxu0
        %949 = vdwg.mxu0
        %vm950 = vcmask 326656
        %v952 = vsel %vm950, %v647, 0
        %v955 = vsel %vm950, %v648, 0
        %v958 = vsel %vm950, %v649, 0
        %v961 = vsel %vm950, %v650, 0
        %v964 = vsel %vm950, %v651, 0
        %v967 = vsel %vm950, %v652, 0
        %v970 = vsel %vm950, %v653, 0
        %v973 = vsel %vm950, %v654, 0
        %v976 = vsel %vm950, %v655, 0
        %v979 = vsel %vm950, %v656, 0
        %v982 = vsel %vm950, %v657, 0
        %v985 = vsel %vm950, %v658, 0
        %v988 = vsel %vm950, %v659, 0
        %v991 = vsel %vm950, %v660, 0
        %v994 = vsel %vm950, %v661, 0
        %v997 = vsel %vm950, %v662, 0
        %v1000 = vsel %vm950, %v663, 0
        %v1003 = vsel %vm950, %v664, 0
        %v1006 = vsel %vm950, %v665, 0
        %v1009 = vsel %vm950, %v666, 0
        %1011 = vmatprep.subr.mxu0 0.0
        %1012 = vmatpush1.msra.mxu0 %v622
        %1013 = vmatprep.subr.mxu0 0.0
        %1014 = vmatpush1.msra.mxu0 %v623
        %1015 = vmatprep.subr.mxu0 0.0
        %1016 = vmatpush1.msra.mxu0 %v624
        %1017 = vmatprep.subr.mxu0 0.0
        %1018 = vmatpush1.msra.mxu0 %v625
        %1019 = vmatprep.subr.mxu0 0.0
        %1020 = vmatpush1.msra.mxu0 %v626
        %1021 = vmatprep.subr.mxu0 0.0
        %1022 = vmatpush1.msra.mxu0 0.0
        %1023 = vmatprep.subr.mxu0 0.0
        %1024 = vmatpush1.msra.mxu0 0.0
        %1025 = vmatprep.subr.mxu0 0.0
        %1026 = vmatpush1.msra.mxu0 0.0
        %1027 = vmatprep.subr.mxu0 0.0
        %1028 = vmatpush1.msra.mxu0 0.0
        %1029 = vmatprep.subr.mxu0 0.0
        %1030 = vmatpush1.msra.mxu0 0.0
        %1031 = vmatprep.subr.mxu0 0.0
        %1032 = vmatpush1.msra.mxu0 0.0
        %1033 = vmatprep.subr.mxu0 0.0
        %1034 = vmatpush1.msra.mxu0 0.0
        %1035 = vmatprep.subr.mxu0 0.0
        %1036 = vmatpush1.msra.mxu0 0.0
        %1037 = vmatprep.subr.mxu0 0.0
        %1038 = vmatpush1.msra.mxu0 0.0
        %1039 = vmatprep.subr.mxu0 0.0
        %1040 = vmatpush1.msra.mxu0 0.0
        %1041 = vmatprep.subr.mxu0 0.0
        %1042 = vmatpush1.msra.mxu0 0.0
        %1043 = vmatprep.subr.mxu0 0.0
        %1044 = vmatpush1.msra.mxu0 0.0
        %1045 = vmatprep.subr.mxu0 0.0
        %1046 = vmatpush1.msra.mxu0 0.0
        %1047 = vmatprep.subr.mxu0 0.0
        %1048 = vmatpush1.msra.mxu0 0.0
        %1049 = vmatprep.subr.mxu0 0.0
        %1050 = vmatpush1.msra.mxu0 0.0
        %1051 = vmatprep.subr.mxu0 0.0
        %1052 = vmatpush1.msra.mxu0 0.0
        %1053 = vmatprep.subr.mxu0 0.0
        %1054 = vmatpush1.msra.mxu0 0.0
        %1055 = vmatprep.subr.mxu0 0.0
        %1056 = vmatpush1.msra.mxu0 0.0
        %1057 = vmatprep.subr.mxu0 0.0
        %1058 = vmatpush1.msra.mxu0 0.0
        %1059 = vmatprep.subr.mxu0 0.0
        %1060 = vmatpush1.msra.mxu0 0.0
        %1061 = vmatprep.subr.mxu0 0.0
        %1062 = vmatpush1.msra.mxu0 0.0
        %1063 = vmatprep.subr.mxu0 0.0
        %1064 = vmatpush1.msra.mxu0 0.0
        %1065 = vmatprep.subr.mxu0 0.0
        %1066 = vmatpush1.msra.mxu0 0.0
        %1067 = vmatprep.subr.mxu0 0.0
        %1068 = vmatpush1.msra.mxu0 0.0
        %1069 = vmatprep.subr.mxu0 0.0
        %1070 = vmatpush1.msra.mxu0 0.0
        %1071 = vmatprep.subr.mxu0 0.0
        %1072 = vmatpush1.msra.mxu0 0.0
        %1073 = vmatprep.subr.mxu0 0.0
        %1074 = vmatpush1.msra.mxu0 0.0
        %1075 = vmatprep.mubr.f32.mxu0 0.0
        %1076 = vmatmul.mubr.f32.gmra.mrb[0].mxu0 %v952
        %v1077 = vpop.f32.mrb[0].mxu0
        %v1078 = vadd.f32 0.0, %v1077
        %v1079 = vpop.f32.mrb[0].mxu0
        %1080 = vmatprep.mubr.f32.mxu0 0.0
        %1081 = vmatmul.mubr.f32.gmra.mrb[0].mxu0 %v955
        %v1082 = vpop.f32.mrb[0].mxu0
        %v1083 = vadd.f32 0.0, %v1082
        %v1084 = vpop.f32.mrb[0].mxu0
        %1085 = vmatprep.mubr.f32.mxu0 0.0
        %1086 = vmatmul.mubr.f32.gmra.mrb[0].mxu0 %v958
        %v1087 = vpop.f32.mrb[0].mxu0
        %v1088 = vadd.f32 0.0, %v1087
        %v1089 = vpop.f32.mrb[0].mxu0
        %1090 = vmatprep.mubr.f32.mxu0 0.0
        %1091 = vmatmul.mubr.f32.gmra.mrb[0].mxu0 %v961
        %v1092 = vpop.f32.mrb[0].mxu0
        %v1093 = vadd.f32 0.0, %v1092
        %v1094 = vpop.f32.mrb[0].mxu0
        %1095 = vmatprep.mubr.f32.mxu0 0.0
        %1096 = vmatmul.mubr.f32.gmra.mrb[0].mxu0 %v964
        %v1097 = vpop.f32.mrb[0].mxu0
        %v1098 = vadd.f32 0.0, %v1097
        %v1099 = vpop.f32.mrb[0].mxu0
        %1100 = vmatprep.mubr.f32.mxu0 0.0
        %1101 = vmatmul.mubr.f32.gmra.mrb[0].mxu0 %v967
        %v1102 = vpop.f32.mrb[0].mxu0
        %v1103 = vadd.f32 0.0, %v1102
        %v1104 = vpop.f32.mrb[0].mxu0
        %1105 = vmatprep.mubr.f32.mxu0 0.0
        %1106 = vmatmul.mubr.f32.gmra.mrb[0].mxu0 %v970
        %v1107 = vpop.f32.mrb[0].mxu0
        %v1108 = vadd.f32 0.0, %v1107
        %v1109 = vpop.f32.mrb[0].mxu0
        %1110 = vmatprep.mubr.f32.mxu0 0.0
        %1111 = vmatmul.mubr.f32.gmra.mrb[0].mxu0 %v973
        %v1112 = vpop.f32.mrb[0].mxu0
        %v1113 = vadd.f32 0.0, %v1112
        %v1114 = vpop.f32.mrb[0].mxu0
        %1115 = vmatprep.mubr.f32.mxu0 0.0
        %1116 = vmatmul.mubr.f32.gmra.mrb[0].mxu0 %v976
        %v1117 = vpop.f32.mrb[0].mxu0
        %v1118 = vadd.f32 0.0, %v1117
        %v1119 = vpop.f32.mrb[0].mxu0
        %1120 = vmatprep.mubr.f32.mxu0 0.0
        %1121 = vmatmul.mubr.f32.gmra.mrb[0].mxu0 %v979
        %v1122 = vpop.f32.mrb[0].mxu0
        %v1123 = vadd.f32 0.0, %v1122
        %v1124 = vpop.f32.mrb[0].mxu0
        %1125 = vmatprep.mubr.f32.mxu0 0.0
        %1126 = vmatmul.mubr.f32.gmra.mrb[0].mxu0 %v982
        %v1127 = vpop.f32.mrb[0].mxu0
        %v1128 = vadd.f32 0.0, %v1127
        %v1129 = vpop.f32.mrb[0].mxu0
        %1130 = vmatprep.mubr.f32.mxu0 0.0
        %1131 = vmatmul.mubr.f32.gmra.mrb[0].mxu0 %v985
        %v1132 = vpop.f32.mrb[0].mxu0
        %v1133 = vadd.f32 0.0, %v1132
        %v1134 = vpop.f32.mrb[0].mxu0
        %1135 = vmatprep.mubr.f32.mxu0 0.0
        %1136 = vmatmul.mubr.f32.gmra.mrb[0].mxu0 %v988
        %v1137 = vpop.f32.mrb[0].mxu0
        %v1138 = vadd.f32 0.0, %v1137
        %v1139 = vpop.f32.mrb[0].mxu0
        %1140 = vmatprep.mubr.f32.mxu0 0.0
        %1141 = vmatmul.mubr.f32.gmra.mrb[0].mxu0 %v991
        %v1142 = vpop.f32.mrb[0].mxu0
        %v1143 = vadd.f32 0.0, %v1142
        %v1144 = vpop.f32.mrb[0].mxu0
        %1145 = vmatprep.mubr.f32.mxu0 0.0
        %1146 = vmatmul.mubr.f32.gmra.mrb[0].mxu0 %v994
        %v1147 = vpop.f32.mrb[0].mxu0
        %v1148 = vadd.f32 0.0, %v1147
        %v1149 = vpop.f32.mrb[0].mxu0
        %1150 = vmatprep.mubr.f32.mxu0 0.0
        %1151 = vmatmul.mubr.f32.gmra.mrb[0].mxu0 %v997
        %v1152 = vpop.f32.mrb[0].mxu0
        %v1153 = vadd.f32 0.0, %v1152
        %v1154 = vpop.f32.mrb[0].mxu0
        %1155 = vmatprep.mubr.f32.mxu0 0.0
        %1156 = vmatmul.mubr.f32.gmra.mrb[0].mxu0 %v1000
        %v1157 = vpop.f32.mrb[0].mxu0
        %v1158 = vadd.f32 0.0, %v1157
        %v1159 = vpop.f32.mrb[0].mxu0
        %1160 = vmatprep.mubr.f32.mxu0 0.0
        %1161 = vmatmul.mubr.f32.gmra.mrb[0].mxu0 %v1003
        %v1162 = vpop.f32.mrb[0].mxu0
        %v1163 = vadd.f32 0.0, %v1162
        %v1164 = vpop.f32.mrb[0].mxu0
        %1165 = vmatprep.mubr.f32.mxu0 0.0
        %1166 = vmatmul.mubr.f32.gmra.mrb[0].mxu0 %v1006
        %v1167 = vpop.f32.mrb[0].mxu0
        %v1168 = vadd.f32 0.0, %v1167
        %v1169 = vpop.f32.mrb[0].mxu0
        %1170 = vmatprep.mubr.f32.mxu0 0.0
        %1171 = vmatmul.mubr.f32.gmra.mrb[0].mxu0 %v1009
        %v1172 = vpop.f32.mrb[0].mxu0
        %v1173 = vadd.f32 0.0, %v1172
        %v1174 = vpop.f32.mrb[0].mxu0
        %1175 = vdwg.mxu0
        %v1177 = vsel %vm950, %v627, 0
        %v1180 = vsel %vm950, %v628, 0
        %v1183 = vsel %vm950, %v629, 0
        %v1186 = vsel %vm950, %v630, 0
        %v1189 = vsel %vm950, %v631, 0
        %v1192 = vsel %vm950, %v632, 0
        %v1195 = vsel %vm950, %v633, 0
        %v1198 = vsel %vm950, %v634, 0
        %v1201 = vsel %vm950, %v635, 0
        %v1204 = vsel %vm950, %v636, 0
        %v1207 = vsel %vm950, %v637, 0
        %v1210 = vsel %vm950, %v638, 0
        %v1213 = vsel %vm950, %v639, 0
        %v1216 = vsel %vm950, %v640, 0
        %v1219 = vsel %vm950, %v641, 0
        %v1222 = vsel %vm950, %v642, 0
        %v1225 = vsel %vm950, %v643, 0
        %v1228 = vsel %vm950, %v644, 0
        %v1231 = vsel %vm950, %v645, 0
        %v1234 = vsel %vm950, %v646, 0
        %1236 = vmatprep.subr.mxu0 0.0
        %1237 = vmatpush1.msra.mxu0 %v622
        %1238 = vmatprep.subr.mxu0 0.0
        %1239 = vmatpush1.msra.mxu0 %v623
        %1240 = vmatprep.subr.mxu0 0.0
        %1241 = vmatpush1.msra.mxu0 %v624
        %1242 = vmatprep.subr.mxu0 0.0
        %1243 = vmatpush1.msra.mxu0 %v625
        %1244 = vmatprep.subr.mxu0 0.0
        %1245 = vmatpush1.msra.mxu0 %v626
        %1246 = vmatprep.subr.mxu0 0.0
        %1247 = vmatpush1.msra.mxu0 0.0
        %1248 = vmatprep.subr.mxu0 0.0
        %1249 = vmatpush1.msra.mxu0 0.0
        %1250 = vmatprep.subr.mxu0 0.0
        %1251 = vmatpush1.msra.mxu0 0.0
        %1252 = vmatprep.subr.mxu0 0.0
        %1253 = vmatpush1.msra.mxu0 0.0
        %1254 = vmatprep.subr.mxu0 0.0
        %1255 = vmatpush1.msra.mxu0 0.0
        %1256 = vmatprep.subr.mxu0 0.0
        %1257 = vmatpush1.msra.mxu0 0.0
        %1258 = vmatprep.subr.mxu0 0.0
        %1259 = vmatpush1.msra.mxu0 0.0
        %1260 = vmatprep.subr.mxu0 0.0
        %1261 = vmatpush1.msra.mxu0 0.0
        %1262 = vmatprep.subr.mxu0 0.0
        %1263 = vmatpush1.msra.mxu0 0.0
        %1264 = vmatprep.subr.mxu0 0.0
        %1265 = vmatpush1.msra.mxu0 0.0
        %1266 = vmatprep.subr.mxu0 0.0
        %1267 = vmatpush1.msra.mxu0 0.0
        %1268 = vmatprep.subr.mxu0 0.0
        %1269 = vmatpush1.msra.mxu0 0.0
        %1270 = vmatprep.subr.mxu0 0.0
        %1271 = vmatpush1.msra.mxu0 0.0
        %1272 = vmatprep.subr.mxu0 0.0
        %1273 = vmatpush1.msra.mxu0 0.0
        %1274 = vmatprep.subr.mxu0 0.0
        %1275 = vmatpush1.msra.mxu0 0.0
        %1276 = vmatprep.subr.mxu0 0.0
        %1277 = vmatpush1.msra.mxu0 0.0
        %1278 = vmatprep.subr.mxu0 0.0
        %1279 = vmatpush1.msra.mxu0 0.0
        %1280 = vmatprep.subr.mxu0 0.0
        %1281 = vmatpush1.msra.mxu0 0.0
        %1282 = vmatprep.subr.mxu0 0.0
        %1283 = vmatpush1.msra.mxu0 0.0
        %1284 = vmatprep.subr.mxu0 0.0
        %1285 = vmatpush1.msra.mxu0 0.0
        %1286 = vmatprep.subr.mxu0 0.0
        %1287 = vmatpush1.msra.mxu0 0.0
        %1288 = vmatprep.subr.mxu0 0.0
        %1289 = vmatpush1.msra.mxu0 0.0
        %1290 = vmatprep.subr.mxu0 0.0
        %1291 = vmatpush1.msra.mxu0 0.0
        %1292 = vmatprep.subr.mxu0 0.0
        %1293 = vmatpush1.msra.mxu0 0.0
        %1294 = vmatprep.subr.mxu0 0.0
        %1295 = vmatpush1.msra.mxu0 0.0
        %1296 = vmatprep.subr.mxu0 0.0
        %1297 = vmatpush1.msra.mxu0 0.0
        %1298 = vmatprep.subr.mxu0 0.0
        %1299 = vmatpush1.msra.mxu0 0.0
        %1300 = vmatprep.mubr.f32.mxu0 0.0
        %1301 = vmatmul.mubr.f32.gmra.mrb[0].mxu0 %v1177
        %v1302 = vpop.f32.mrb[0].mxu0
        %v1303 = vadd.f32 0.0, %v1302
        %v1304 = vpop.f32.mrb[0].mxu0
        %1305 = vmatprep.mubr.f32.mxu0 0.0
        %1306 = vmatmul.mubr.f32.gmra.mrb[0].mxu0 %v1180
        %v1307 = vpop.f32.mrb[0].mxu0
        %v1308 = vadd.f32 0.0, %v1307
        %v1309 = vpop.f32.mrb[0].mxu0
        %1310 = vmatprep.mubr.f32.mxu0 0.0
        %1311 = vmatmul.mubr.f32.gmra.mrb[0].mxu0 %v1183
        %v1312 = vpop.f32.mrb[0].mxu0
        %v1313 = vadd.f32 0.0, %v1312
        %v1314 = vpop.f32.mrb[0].mxu0
        %1315 = vmatprep.mubr.f32.mxu0 0.0
        %1316 = vmatmul.mubr.f32.gmra.mrb[0].mxu0 %v1186
        %v1317 = vpop.f32.mrb[0].mxu0
        %v1318 = vadd.f32 0.0, %v1317
        %v1319 = vpop.f32.mrb[0].mxu0
        %1320 = vmatprep.mubr.f32.mxu0 0.0
        %1321 = vmatmul.mubr.f32.gmra.mrb[0].mxu0 %v1189
        %v1322 = vpop.f32.mrb[0].mxu0
        %v1323 = vadd.f32 0.0, %v1322
        %v1324 = vpop.f32.mrb[0].mxu0
        %1325 = vmatprep.mubr.f32.mxu0 0.0
        %1326 = vmatmul.mubr.f32.gmra.mrb[0].mxu0 %v1192
        %v1327 = vpop.f32.mrb[0].mxu0
        %v1328 = vadd.f32 0.0, %v1327
        %v1329 = vpop.f32.mrb[0].mxu0
        %1330 = vmatprep.mubr.f32.mxu0 0.0
        %1331 = vmatmul.mubr.f32.gmra.mrb[0].mxu0 %v1195
        %v1332 = vpop.f32.mrb[0].mxu0
        %v1333 = vadd.f32 0.0, %v1332
        %v1334 = vpop.f32.mrb[0].mxu0
        %1335 = vmatprep.mubr.f32.mxu0 0.0
        %1336 = vmatmul.mubr.f32.gmra.mrb[0].mxu0 %v1198
        %v1337 = vpop.f32.mrb[0].mxu0
        %v1338 = vadd.f32 0.0, %v1337
        %v1339 = vpop.f32.mrb[0].mxu0
        %1340 = vmatprep.mubr.f32.mxu0 0.0
        %1341 = vmatmul.mubr.f32.gmra.mrb[0].mxu0 %v1201
        %v1342 = vpop.f32.mrb[0].mxu0
        %v1343 = vadd.f32 0.0, %v1342
        %v1344 = vpop.f32.mrb[0].mxu0
        %1345 = vmatprep.mubr.f32.mxu0 0.0
        %1346 = vmatmul.mubr.f32.gmra.mrb[0].mxu0 %v1204
        %v1347 = vpop.f32.mrb[0].mxu0
        %v1348 = vadd.f32 0.0, %v1347
        %v1349 = vpop.f32.mrb[0].mxu0
        %1350 = vmatprep.mubr.f32.mxu0 0.0
        %1351 = vmatmul.mubr.f32.gmra.mrb[0].mxu0 %v1207
        %v1352 = vpop.f32.mrb[0].mxu0
        %v1353 = vadd.f32 0.0, %v1352
        %v1354 = vpop.f32.mrb[0].mxu0
        %1355 = vmatprep.mubr.f32.mxu0 0.0
        %1356 = vmatmul.mubr.f32.gmra.mrb[0].mxu0 %v1210
        %v1357 = vpop.f32.mrb[0].mxu0
        %v1358 = vadd.f32 0.0, %v1357
        %v1359 = vpop.f32.mrb[0].mxu0
        %1360 = vmatprep.mubr.f32.mxu0 0.0
        %1361 = vmatmul.mubr.f32.gmra.mrb[0].mxu0 %v1213
        %v1362 = vpop.f32.mrb[0].mxu0
        %v1363 = vadd.f32 0.0, %v1362
        %v1364 = vpop.f32.mrb[0].mxu0
        %1365 = vmatprep.mubr.f32.mxu0 0.0
        %1366 = vmatmul.mubr.f32.gmra.mrb[0].mxu0 %v1216
        %v1367 = vpop.f32.mrb[0].mxu0
        %v1368 = vadd.f32 0.0, %v1367
        %v1369 = vpop.f32.mrb[0].mxu0
        %1370 = vmatprep.mubr.f32.mxu0 0.0
        %1371 = vmatmul.mubr.f32.gmra.mrb[0].mxu0 %v1219
        %v1372 = vpop.f32.mrb[0].mxu0
        %v1373 = vadd.f32 0.0, %v1372
        %v1374 = vpop.f32.mrb[0].mxu0
        %1375 = vmatprep.mubr.f32.mxu0 0.0
        %1376 = vmatmul.mubr.f32.gmra.mrb[0].mxu0 %v1222
        %v1377 = vpop.f32.mrb[0].mxu0
        %v1378 = vadd.f32 0.0, %v1377
        %v1379 = vpop.f32.mrb[0].mxu0
        %1380 = vmatprep.mubr.f32.mxu0 0.0
        %1381 = vmatmul.mubr.f32.gmra.mrb[0].mxu0 %v1225
        %v1382 = vpop.f32.mrb[0].mxu0
        %v1383 = vadd.f32 0.0, %v1382
        %v1384 = vpop.f32.mrb[0].mxu0
        %1385 = vmatprep.mubr.f32.mxu0 0.0
        %1386 = vmatmul.mubr.f32.gmra.mrb[0].mxu0 %v1228
        %v1387 = vpop.f32.mrb[0].mxu0
        %v1388 = vadd.f32 0.0, %v1387
        %v1389 = vpop.f32.mrb[0].mxu0
        %1390 = vmatprep.mubr.f32.mxu0 0.0
        %1391 = vmatmul.mubr.f32.gmra.mrb[0].mxu0 %v1231
        %v1392 = vpop.f32.mrb[0].mxu0
        %v1393 = vadd.f32 0.0, %v1392
        %v1394 = vpop.f32.mrb[0].mxu0
        %1395 = vmatprep.mubr.f32.mxu0 0.0
        %1396 = vmatmul.mubr.f32.gmra.mrb[0].mxu0 %v1234
        %v1397 = vpop.f32.mrb[0].mxu0
        %v1398 = vadd.f32 0.0, %v1397
        %v1399 = vpop.f32.mrb[0].mxu0
        %1400 = vdwg.mxu0
        %vm1401 = vcmask 31744
        %v1403 = vsel %vm1401, %v1303, 0
        %v1406 = vsel %vm1401, %v1308, 0
        %v1409 = vsel %vm1401, %v1313, 0
        %v1412 = vsel %vm1401, %v1318, 0
        %v1415 = vsel %vm1401, %v1323, 0
        %v1418 = vsel %vm1401, %v1328, 0
        %v1421 = vsel %vm1401, %v1333, 0
        %v1424 = vsel %vm1401, %v1338, 0
        %v1427 = vsel %vm1401, %v1343, 0
        %v1430 = vsel %vm1401, %v1348, 0
        %v1433 = vsel %vm1401, %v1353, 0
        %v1436 = vsel %vm1401, %v1358, 0
        %v1439 = vsel %vm1401, %v1363, 0
        %v1442 = vsel %vm1401, %v1368, 0
        %v1445 = vsel %vm1401, %v1373, 0
        %v1448 = vsel %vm1401, %v1378, 0
        %v1451 = vsel %vm1401, %v1383, 0
        %v1454 = vsel %vm1401, %v1388, 0
        %v1457 = vsel %vm1401, %v1393, 0
        %v1460 = vsel %vm1401, %v1398, 0
        %vm1462 = vcmask 1043456
        %v1464 = vsel %vm1462, %v678, 0
        %1466 = vmatprep.subr.mxu0 0.0
        %1467 = vmatpush1.msra.mxu0 %v1464
        %1468 = vmatprep.subr.mxu0 0.0
        %1469 = vmatpush1.msra.mxu0 0.0
        %1470 = vmatprep.subr.mxu0 0.0
        %1471 = vmatpush1.msra.mxu0 0.0
        %1472 = vmatprep.subr.mxu0 0.0
        %1473 = vmatpush1.msra.mxu0 0.0
        %1474 = vmatprep.subr.mxu0 0.0
        %1475 = vmatpush1.msra.mxu0 0.0
        %1476 = vmatprep.subr.mxu0 0.0
        %1477 = vmatpush1.msra.mxu0 0.0
        %1478 = vmatprep.subr.mxu0 0.0
        %1479 = vmatpush1.msra.mxu0 0.0
        %1480 = vmatprep.subr.mxu0 0.0
        %1481 = vmatpush1.msra.mxu0 0.0
        %1482 = vmatprep.subr.mxu0 0.0
        %1483 = vmatpush1.msra.mxu0 0.0
        %1484 = vmatprep.subr.mxu0 0.0
        %1485 = vmatpush1.msra.mxu0 0.0
        %1486 = vmatprep.subr.mxu0 0.0
        %1487 = vmatpush1.msra.mxu0 0.0
        %1488 = vmatprep.subr.mxu0 0.0
        %1489 = vmatpush1.msra.mxu0 0.0
        %1490 = vmatprep.subr.mxu0 0.0
        %1491 = vmatpush1.msra.mxu0 0.0
        %1492 = vmatprep.subr.mxu0 0.0
        %1493 = vmatpush1.msra.mxu0 0.0
        %1494 = vmatprep.subr.mxu0 0.0
        %1495 = vmatpush1.msra.mxu0 0.0
        %1496 = vmatprep.subr.mxu0 0.0
        %1497 = vmatpush1.msra.mxu0 0.0
        %1498 = vmatprep.subr.mxu0 0.0
        %1499 = vmatpush1.msra.mxu0 0.0
        %1500 = vmatprep.subr.mxu0 0.0
        %1501 = vmatpush1.msra.mxu0 0.0
        %1502 = vmatprep.subr.mxu0 0.0
        %1503 = vmatpush1.msra.mxu0 0.0
        %1504 = vmatprep.subr.mxu0 0.0
        %1505 = vmatpush1.msra.mxu0 0.0
        %1506 = vmatprep.subr.mxu0 0.0
        %1507 = vmatpush1.msra.mxu0 0.0
        %1508 = vmatprep.subr.mxu0 0.0
        %1509 = vmatpush1.msra.mxu0 0.0
        %1510 = vmatprep.subr.mxu0 0.0
        %1511 = vmatpush1.msra.mxu0 0.0
        %1512 = vmatprep.subr.mxu0 0.0
        %1513 = vmatpush1.msra.mxu0 0.0
        %1514 = vmatprep.subr.mxu0 0.0
        %1515 = vmatpush1.msra.mxu0 0.0
        %1516 = vmatprep.subr.mxu0 0.0
        %1517 = vmatpush1.msra.mxu0 0.0
        %1518 = vmatprep.subr.mxu0 0.0
        %1519 = vmatpush1.msra.mxu0 0.0
        %1520 = vmatprep.subr.mxu0 0.0
        %1521 = vmatpush1.msra.mxu0 0.0
        %1522 = vmatprep.subr.mxu0 0.0
        %1523 = vmatpush1.msra.mxu0 0.0
        %1524 = vmatprep.subr.mxu0 0.0
        %1525 = vmatpush1.msra.mxu0 0.0
        %1526 = vmatprep.subr.mxu0 0.0
        %1527 = vmatpush1.msra.mxu0 0.0
        %1528 = vmatprep.subr.mxu0 0.0
        %1529 = vmatpush1.msra.mxu0 0.0
        %1530 = vmatprep.mubr.f32.mxu0 0.0
        %1531 = vmatmul.mubr.f32.gmra.mrb[0].mxu0 %v1403
        %v1532 = vpop.f32.mrb[0].mxu0
        %v1533 = vadd.f32 0.0, %v1532
        %v1534 = vpop.f32.mrb[0].mxu0
        %1535 = vmatprep.mubr.f32.mxu0 0.0
        %1536 = vmatmul.mubr.f32.gmra.mrb[0].mxu0 %v1406
        %v1537 = vpop.f32.mrb[0].mxu0
        %v1538 = vadd.f32 0.0, %v1537
        %v1539 = vpop.f32.mrb[0].mxu0
        %1540 = vmatprep.mubr.f32.mxu0 0.0
        %1541 = vmatmul.mubr.f32.gmra.mrb[0].mxu0 %v1409
        %v1542 = vpop.f32.mrb[0].mxu0
        %v1543 = vadd.f32 0.0, %v1542
        %v1544 = vpop.f32.mrb[0].mxu0
        %1545 = vmatprep.mubr.f32.mxu0 0.0
        %1546 = vmatmul.mubr.f32.gmra.mrb[0].mxu0 %v1412
        %v1547 = vpop.f32.mrb[0].mxu0
        %v1548 = vadd.f32 0.0, %v1547
        %v1549 = vpop.f32.mrb[0].mxu0
        %1550 = vmatprep.mubr.f32.mxu0 0.0
        %1551 = vmatmul.mubr.f32.gmra.mrb[0].mxu0 %v1415
        %v1552 = vpop.f32.mrb[0].mxu0
        %v1553 = vadd.f32 0.0, %v1552
        %v1554 = vpop.f32.mrb[0].mxu0
        %1555 = vmatprep.mubr.f32.mxu0 0.0
        %1556 = vmatmul.mubr.f32.gmra.mrb[0].mxu0 %v1418
        %v1557 = vpop.f32.mrb[0].mxu0
        %v1558 = vadd.f32 0.0, %v1557
        %v1559 = vpop.f32.mrb[0].mxu0
        %1560 = vmatprep.mubr.f32.mxu0 0.0
        %1561 = vmatmul.mubr.f32.gmra.mrb[0].mxu0 %v1421
        %v1562 = vpop.f32.mrb[0].mxu0
        %v1563 = vadd.f32 0.0, %v1562
        %v1564 = vpop.f32.mrb[0].mxu0
        %1565 = vmatprep.mubr.f32.mxu0 0.0
        %1566 = vmatmul.mubr.f32.gmra.mrb[0].mxu0 %v1424
        %v1567 = vpop.f32.mrb[0].mxu0
        %v1568 = vadd.f32 0.0, %v1567
        %v1569 = vpop.f32.mrb[0].mxu0
        %1570 = vmatprep.mubr.f32.mxu0 0.0
        %1571 = vmatmul.mubr.f32.gmra.mrb[0].mxu0 %v1427
        %v1572 = vpop.f32.mrb[0].mxu0
        %v1573 = vadd.f32 0.0, %v1572
        %v1574 = vpop.f32.mrb[0].mxu0
        %1575 = vmatprep.mubr.f32.mxu0 0.0
        %1576 = vmatmul.mubr.f32.gmra.mrb[0].mxu0 %v1430
        %v1577 = vpop.f32.mrb[0].mxu0
        %v1578 = vadd.f32 0.0, %v1577
        %v1579 = vpop.f32.mrb[0].mxu0
        %1580 = vmatprep.mubr.f32.mxu0 0.0
        %1581 = vmatmul.mubr.f32.gmra.mrb[0].mxu0 %v1433
        %v1582 = vpop.f32.mrb[0].mxu0
        %v1583 = vadd.f32 0.0, %v1582
        %v1584 = vpop.f32.mrb[0].mxu0
        %1585 = vmatprep.mubr.f32.mxu0 0.0
        %1586 = vmatmul.mubr.f32.gmra.mrb[0].mxu0 %v1436
        %v1587 = vpop.f32.mrb[0].mxu0
        %v1588 = vadd.f32 0.0, %v1587
        %v1589 = vpop.f32.mrb[0].mxu0
        %1590 = vmatprep.mubr.f32.mxu0 0.0
        %1591 = vmatmul.mubr.f32.gmra.mrb[0].mxu0 %v1439
        %v1592 = vpop.f32.mrb[0].mxu0
        %v1593 = vadd.f32 0.0, %v1592
        %v1594 = vpop.f32.mrb[0].mxu0
        %1595 = vmatprep.mubr.f32.mxu0 0.0
        %1596 = vmatmul.mubr.f32.gmra.mrb[0].mxu0 %v1442
        %v1597 = vpop.f32.mrb[0].mxu0
        %v1598 = vadd.f32 0.0, %v1597
        %v1599 = vpop.f32.mrb[0].mxu0
        %1600 = vmatprep.mubr.f32.mxu0 0.0
        %1601 = vmatmul.mubr.f32.gmra.mrb[0].mxu0 %v1445
        %v1602 = vpop.f32.mrb[0].mxu0
        %v1603 = vadd.f32 0.0, %v1602
        %v1604 = vpop.f32.mrb[0].mxu0
        %1605 = vmatprep.mubr.f32.mxu0 0.0
        %1606 = vmatmul.mubr.f32.gmra.mrb[0].mxu0 %v1448
        %v1607 = vpop.f32.mrb[0].mxu0
        %v1608 = vadd.f32 0.0, %v1607
        %v1609 = vpop.f32.mrb[0].mxu0
        %1610 = vmatprep.mubr.f32.mxu0 0.0
        %1611 = vmatmul.mubr.f32.gmra.mrb[0].mxu0 %v1451
        %v1612 = vpop.f32.mrb[0].mxu0
        %v1613 = vadd.f32 0.0, %v1612
        %v1614 = vpop.f32.mrb[0].mxu0
        %1615 = vmatprep.mubr.f32.mxu0 0.0
        %1616 = vmatmul.mubr.f32.gmra.mrb[0].mxu0 %v1454
        %v1617 = vpop.f32.mrb[0].mxu0
        %v1618 = vadd.f32 0.0, %v1617
        %v1619 = vpop.f32.mrb[0].mxu0
        %1620 = vmatprep.mubr.f32.mxu0 0.0
        %1621 = vmatmul.mubr.f32.gmra.mrb[0].mxu0 %v1457
        %v1622 = vpop.f32.mrb[0].mxu0
        %v1623 = vadd.f32 0.0, %v1622
        %v1624 = vpop.f32.mrb[0].mxu0
        %1625 = vmatprep.mubr.f32.mxu0 0.0
        %1626 = vmatmul.mubr.f32.gmra.mrb[0].mxu0 %v1460
        %v1627 = vpop.f32.mrb[0].mxu0
        %v1628 = vadd.f32 0.0, %v1627
        %v1629 = vpop.f32.mrb[0].mxu0
        %1630 = vdwg.mxu0
        %v1632 = vsel %vm1401, %v1078, 0
        %v1635 = vsel %vm1401, %v1083, 0
        %v1638 = vsel %vm1401, %v1088, 0
        %v1641 = vsel %vm1401, %v1093, 0
        %v1644 = vsel %vm1401, %v1098, 0
        %v1647 = vsel %vm1401, %v1103, 0
        %v1650 = vsel %vm1401, %v1108, 0
        %v1653 = vsel %vm1401, %v1113, 0
        %v1656 = vsel %vm1401, %v1118, 0
        %v1659 = vsel %vm1401, %v1123, 0
        %v1662 = vsel %vm1401, %v1128, 0
        %v1665 = vsel %vm1401, %v1133, 0
        %v1668 = vsel %vm1401, %v1138, 0
        %v1671 = vsel %vm1401, %v1143, 0
        %v1674 = vsel %vm1401, %v1148, 0
        %v1677 = vsel %vm1401, %v1153, 0
        %v1680 = vsel %vm1401, %v1158, 0
        %v1683 = vsel %vm1401, %v1163, 0
        %v1686 = vsel %vm1401, %v1168, 0
        %v1689 = vsel %vm1401, %v1173, 0
        %v1692 = vsel %vm1462, %v677, 0
        %1694 = vmatprep.subr.mxu0 0.0
        %1695 = vmatpush1.msra.mxu0 %v1692
        %1696 = vmatprep.subr.mxu0 0.0
        %1697 = vmatpush1.msra.mxu0 0.0
        %1698 = vmatprep.subr.mxu0 0.0
        %1699 = vmatpush1.msra.mxu0 0.0
        %1700 = vmatprep.subr.mxu0 0.0
        %1701 = vmatpush1.msra.mxu0 0.0
        %1702 = vmatprep.subr.mxu0 0.0
        %1703 = vmatpush1.msra.mxu0 0.0
        %1704 = vmatprep.subr.mxu0 0.0
        %1705 = vmatpush1.msra.mxu0 0.0
        %1706 = vmatprep.subr.mxu0 0.0
        %1707 = vmatpush1.msra.mxu0 0.0
        %1708 = vmatprep.subr.mxu0 0.0
        %1709 = vmatpush1.msra.mxu0 0.0
        %1710 = vmatprep.subr.mxu0 0.0
        %1711 = vmatpush1.msra.mxu0 0.0
        %1712 = vmatprep.subr.mxu0 0.0
        %1713 = vmatpush1.msra.mxu0 0.0
        %1714 = vmatprep.subr.mxu0 0.0
        %1715 = vmatpush1.msra.mxu0 0.0
        %1716 = vmatprep.subr.mxu0 0.0
        %1717 = vmatpush1.msra.mxu0 0.0
        %1718 = vmatprep.subr.mxu0 0.0
        %1719 = vmatpush1.msra.mxu0 0.0
        %1720 = vmatprep.subr.mxu0 0.0
        %1721 = vmatpush1.msra.mxu0 0.0
        %1722 = vmatprep.subr.mxu0 0.0
        %1723 = vmatpush1.msra.mxu0 0.0
        %1724 = vmatprep.subr.mxu0 0.0
        %1725 = vmatpush1.msra.mxu0 0.0
        %1726 = vmatprep.subr.mxu0 0.0
        %1727 = vmatpush1.msra.mxu0 0.0
        %1728 = vmatprep.subr.mxu0 0.0
        %1729 = vmatpush1.msra.mxu0 0.0
        %1730 = vmatprep.subr.mxu0 0.0
        %1731 = vmatpush1.msra.mxu0 0.0
        %1732 = vmatprep.subr.mxu0 0.0
        %1733 = vmatpush1.msra.mxu0 0.0
        %1734 = vmatprep.subr.mxu0 0.0
        %1735 = vmatpush1.msra.mxu0 0.0
        %1736 = vmatprep.subr.mxu0 0.0
        %1737 = vmatpush1.msra.mxu0 0.0
        %1738 = vmatprep.subr.mxu0 0.0
        %1739 = vmatpush1.msra.mxu0 0.0
        %1740 = vmatprep.subr.mxu0 0.0
        %1741 = vmatpush1.msra.mxu0 0.0
        %1742 = vmatprep.subr.mxu0 0.0
        %1743 = vmatpush1.msra.mxu0 0.0
        %1744 = vmatprep.subr.mxu0 0.0
        %1745 = vmatpush1.msra.mxu0 0.0
        %1746 = vmatprep.subr.mxu0 0.0
        %1747 = vmatpush1.msra.mxu0 0.0
        %1748 = vmatprep.subr.mxu0 0.0
        %1749 = vmatpush1.msra.mxu0 0.0
        %1750 = vmatprep.subr.mxu0 0.0
        %1751 = vmatpush1.msra.mxu0 0.0
        %1752 = vmatprep.subr.mxu0 0.0
        %1753 = vmatpush1.msra.mxu0 0.0
        %1754 = vmatprep.subr.mxu0 0.0
        %1755 = vmatpush1.msra.mxu0 0.0
        %1756 = vmatprep.subr.mxu0 0.0
        %1757 = vmatpush1.msra.mxu0 0.0
        %1758 = vmatprep.mubr.f32.mxu0 0.0
        %1759 = vmatmul.mubr.f32.gmra.mrb[0].mxu0 %v1632
        %v1760 = vpop.f32.mrb[0].mxu0
        %v1761 = vadd.f32 %v1533, %v1760
        %v1762 = vpop.f32.mrb[0].mxu0
        %1763 = vmatprep.mubr.f32.mxu0 0.0
        %1764 = vmatmul.mubr.f32.gmra.mrb[0].mxu0 %v1635
        %v1765 = vpop.f32.mrb[0].mxu0
        %v1766 = vadd.f32 %v1538, %v1765
        %v1767 = vpop.f32.mrb[0].mxu0
        %1768 = vmatprep.mubr.f32.mxu0 0.0
        %1769 = vmatmul.mubr.f32.gmra.mrb[0].mxu0 %v1638
        %v1770 = vpop.f32.mrb[0].mxu0
        %v1771 = vadd.f32 %v1543, %v1770
        %v1772 = vpop.f32.mrb[0].mxu0
        %1773 = vmatprep.mubr.f32.mxu0 0.0
        %1774 = vmatmul.mubr.f32.gmra.mrb[0].mxu0 %v1641
        %v1775 = vpop.f32.mrb[0].mxu0
        %v1776 = vadd.f32 %v1548, %v1775
        %v1777 = vpop.f32.mrb[0].mxu0
        %1778 = vmatprep.mubr.f32.mxu0 0.0
        %1779 = vmatmul.mubr.f32.gmra.mrb[0].mxu0 %v1644
        %v1780 = vpop.f32.mrb[0].mxu0
        %v1781 = vadd.f32 %v1553, %v1780
        %v1782 = vpop.f32.mrb[0].mxu0
        %1783 = vmatprep.mubr.f32.mxu0 0.0
        %1784 = vmatmul.mubr.f32.gmra.mrb[0].mxu0 %v1647
        %v1785 = vpop.f32.mrb[0].mxu0
        %v1786 = vadd.f32 %v1558, %v1785
        %v1787 = vpop.f32.mrb[0].mxu0
        %1788 = vmatprep.mubr.f32.mxu0 0.0
        %1789 = vmatmul.mubr.f32.gmra.mrb[0].mxu0 %v1650
        %v1790 = vpop.f32.mrb[0].mxu0
        %v1791 = vadd.f32 %v1563, %v1790
        %v1792 = vpop.f32.mrb[0].mxu0
        %1793 = vmatprep.mubr.f32.mxu0 0.0
        %1794 = vmatmul.mubr.f32.gmra.mrb[0].mxu0 %v1653
        %v1795 = vpop.f32.mrb[0].mxu0
        %v1796 = vadd.f32 %v1568, %v1795
        %v1797 = vpop.f32.mrb[0].mxu0
        %1798 = vmatprep.mubr.f32.mxu0 0.0
        %1799 = vmatmul.mubr.f32.gmra.mrb[0].mxu0 %v1656
        %v1800 = vpop.f32.mrb[0].mxu0
        %v1801 = vadd.f32 %v1573, %v1800
        %v1802 = vpop.f32.mrb[0].mxu0
        %1803 = vmatprep.mubr.f32.mxu0 0.0
        %1804 = vmatmul.mubr.f32.gmra.mrb[0].mxu0 %v1659
        %v1805 = vpop.f32.mrb[0].mxu0
        %v1806 = vadd.f32 %v1578, %v1805
        %v1807 = vpop.f32.mrb[0].mxu0
        %1808 = vmatprep.mubr.f32.mxu0 0.0
        %1809 = vmatmul.mubr.f32.gmra.mrb[0].mxu0 %v1662
        %v1810 = vpop.f32.mrb[0].mxu0
        %v1811 = vadd.f32 %v1583, %v1810
        %v1812 = vpop.f32.mrb[0].mxu0
        %1813 = vmatprep.mubr.f32.mxu0 0.0
        %1814 = vmatmul.mubr.f32.gmra.mrb[0].mxu0 %v1665
        %v1815 = vpop.f32.mrb[0].mxu0
        %v1816 = vadd.f32 %v1588, %v1815
        %v1817 = vpop.f32.mrb[0].mxu0
        %1818 = vmatprep.mubr.f32.mxu0 0.0
        %1819 = vmatmul.mubr.f32.gmra.mrb[0].mxu0 %v1668
        %v1820 = vpop.f32.mrb[0].mxu0
        %v1821 = vadd.f32 %v1593, %v1820
        %v1822 = vpop.f32.mrb[0].mxu0
        %1823 = vmatprep.mubr.f32.mxu0 0.0
        %1824 = vmatmul.mubr.f32.gmra.mrb[0].mxu0 %v1671
        %v1825 = vpop.f32.mrb[0].mxu0
        %v1826 = vadd.f32 %v1598, %v1825
        %v1827 = vpop.f32.mrb[0].mxu0
        %1828 = vmatprep.mubr.f32.mxu0 0.0
        %1829 = vmatmul.mubr.f32.gmra.mrb[0].mxu0 %v1674
        %v1830 = vpop.f32.mrb[0].mxu0
        %v1831 = vadd.f32 %v1603, %v1830
        %v1832 = vpop.f32.mrb[0].mxu0
        %1833 = vmatprep.mubr.f32.mxu0 0.0
        %1834 = vmatmul.mubr.f32.gmra.mrb[0].mxu0 %v1677
        %v1835 = vpop.f32.mrb[0].mxu0
        %v1836 = vadd.f32 %v1608, %v1835
        %v1837 = vpop.f32.mrb[0].mxu0
        %1838 = vmatprep.mubr.f32.mxu0 0.0
        %1839 = vmatmul.mubr.f32.gmra.mrb[0].mxu0 %v1680
        %v1840 = vpop.f32.mrb[0].mxu0
        %v1841 = vadd.f32 %v1613, %v1840
        %v1842 = vpop.f32.mrb[0].mxu0
        %1843 = vmatprep.mubr.f32.mxu0 0.0
        %1844 = vmatmul.mubr.f32.gmra.mrb[0].mxu0 %v1683
        %v1845 = vpop.f32.mrb[0].mxu0
        %v1846 = vadd.f32 %v1618, %v1845
        %v1847 = vpop.f32.mrb[0].mxu0
        %1848 = vmatprep.mubr.f32.mxu0 0.0
        %1849 = vmatmul.mubr.f32.gmra.mrb[0].mxu0 %v1686
        %v1850 = vpop.f32.mrb[0].mxu0
        %v1851 = vadd.f32 %v1623, %v1850
        %v1852 = vpop.f32.mrb[0].mxu0
        %1853 = vmatprep.mubr.f32.mxu0 0.0
        %1854 = vmatmul.mubr.f32.gmra.mrb[0].mxu0 %v1689
        %v1855 = vpop.f32.mrb[0].mxu0
        %v1856 = vadd.f32 %v1628, %v1855
        %v1857 = vpop.f32.mrb[0].mxu0
        %1858 = vdwg.mxu0
        %v1860 = vlaneseq
        %v1861 = vshrl.u32 %v1860, 7
        %v1862 = vsub.s32 0, %v1861
        %v1863 = vrot.slane %v679, %v1862
        %v1865 = vadd.f32 %v1761, %v1863
        %v1866 = vadd.f32 %v1766, %v1863
        %v1867 = vadd.f32 %v1771, %v1863
        %v1868 = vadd.f32 %v1776, %v1863
        %v1869 = vadd.f32 %v1781, %v1863
        %v1870 = vadd.f32 %v1786, %v1863
        %v1871 = vadd.f32 %v1791, %v1863
        %v1872 = vadd.f32 %v1796, %v1863
        %v1873 = vadd.f32 %v1801, %v1863
        %v1874 = vadd.f32 %v1806, %v1863
        %v1875 = vadd.f32 %v1811, %v1863
        %v1876 = vadd.f32 %v1816, %v1863
        %v1877 = vadd.f32 %v1821, %v1863
        %v1878 = vadd.f32 %v1826, %v1863
        %v1879 = vadd.f32 %v1831, %v1863
        %v1880 = vadd.f32 %v1836, %v1863
        %v1881 = vadd.f32 %v1841, %v1863
        %v1882 = vadd.f32 %v1846, %v1863
        %v1883 = vadd.f32 %v1851, %v1863
        %v1884 = vadd.f32 %v1856, %v1863
        %v1885 = vmax.f32 %v1865, 0.0
        %v1886 = vmax.f32 %v1866, 0.0
        %v1887 = vmax.f32 %v1867, 0.0
        %v1888 = vmax.f32 %v1868, 0.0
        %v1889 = vmax.f32 %v1869, 0.0
        %v1890 = vmax.f32 %v1870, 0.0
        %v1891 = vmax.f32 %v1871, 0.0
        %v1892 = vmax.f32 %v1872, 0.0
        %v1893 = vmax.f32 %v1873, 0.0
        %v1894 = vmax.f32 %v1874, 0.0
        %v1895 = vmax.f32 %v1875, 0.0
        %v1896 = vmax.f32 %v1876, 0.0
        %v1897 = vmax.f32 %v1877, 0.0
        %v1898 = vmax.f32 %v1878, 0.0
        %v1899 = vmax.f32 %v1879, 0.0
        %v1900 = vmax.f32 %v1880, 0.0
        %v1901 = vmax.f32 %v1881, 0.0
        %v1902 = vmax.f32 %v1882, 0.0
        %v1903 = vmax.f32 %v1883, 0.0
        %v1904 = vmax.f32 %v1884, 0.0
        %v1906 = vlaneseq
        %v1907 = vshrl.u32 %v1906, 7
        %v1908 = vsub.s32 0, %v1907
        %v1909 = vrot.slane %v684, %v1908
        %vm1911 = vcmask 261120
        %v1913 = vsel %vm1911, %v1885, 0
        %v1916 = vsel %vm1911, %v1886, 0
        %v1919 = vsel %vm1911, %v1887, 0
        %v1922 = vsel %vm1911, %v1888, 0
        %v1925 = vsel %vm1911, %v1889, 0
        %v1928 = vsel %vm1911, %v1890, 0
        %v1931 = vsel %vm1911, %v1891, 0
        %v1934 = vsel %vm1911, %v1892, 0
        %v1937 = vsel %vm1911, %v1893, 0
        %v1940 = vsel %vm1911, %v1894, 0
        %v1943 = vsel %vm1911, %v1895, 0
        %v1946 = vsel %vm1911, %v1896, 0
        %v1949 = vsel %vm1911, %v1897, 0
        %v1952 = vsel %vm1911, %v1898, 0
        %v1955 = vsel %vm1911, %v1899, 0
        %v1958 = vsel %vm1911, %v1900, 0
        %v1961 = vsel %vm1911, %v1901, 0
        %v1964 = vsel %vm1911, %v1902, 0
        %v1967 = vsel %vm1911, %v1903, 0
        %v1970 = vsel %vm1911, %v1904, 0
        %1972 = vmatprep.subr.mxu0 0.0
        %1973 = vmatpush1.msra.mxu0 %v680
        %1974 = vmatprep.subr.mxu0 0.0
        %1975 = vmatpush1.msra.mxu0 %v681
        %1976 = vmatprep.subr.mxu0 0.0
        %1977 = vmatpush1.msra.mxu0 %v682
        %1978 = vmatprep.subr.mxu0 0.0
        %1979 = vmatpush1.msra.mxu0 %v683
        %1980 = vmatprep.subr.mxu0 0.0
        %1981 = vmatpush1.msra.mxu0 0.0
        %1982 = vmatprep.subr.mxu0 0.0
        %1983 = vmatpush1.msra.mxu0 0.0
        %1984 = vmatprep.subr.mxu0 0.0
        %1985 = vmatpush1.msra.mxu0 0.0
        %1986 = vmatprep.subr.mxu0 0.0
        %1987 = vmatpush1.msra.mxu0 0.0
        %1988 = vmatprep.subr.mxu0 0.0
        %1989 = vmatpush1.msra.mxu0 0.0
        %1990 = vmatprep.subr.mxu0 0.0
        %1991 = vmatpush1.msra.mxu0 0.0
        %1992 = vmatprep.subr.mxu0 0.0
        %1993 = vmatpush1.msra.mxu0 0.0
        %1994 = vmatprep.subr.mxu0 0.0
        %1995 = vmatpush1.msra.mxu0 0.0
        %1996 = vmatprep.subr.mxu0 0.0
        %1997 = vmatpush1.msra.mxu0 0.0
        %1998 = vmatprep.subr.mxu0 0.0
        %1999 = vmatpush1.msra.mxu0 0.0
        %2000 = vmatprep.subr.mxu0 0.0
        %2001 = vmatpush1.msra.mxu0 0.0
        %2002 = vmatprep.subr.mxu0 0.0
        %2003 = vmatpush1.msra.mxu0 0.0
        %2004 = vmatprep.subr.mxu0 0.0
        %2005 = vmatpush1.msra.mxu0 0.0
        %2006 = vmatprep.subr.mxu0 0.0
        %2007 = vmatpush1.msra.mxu0 0.0
        %2008 = vmatprep.subr.mxu0 0.0
        %2009 = vmatpush1.msra.mxu0 0.0
        %2010 = vmatprep.subr.mxu0 0.0
        %2011 = vmatpush1.msra.mxu0 0.0
        %2012 = vmatprep.subr.mxu0 0.0
        %2013 = vmatpush1.msra.mxu0 0.0
        %2014 = vmatprep.subr.mxu0 0.0
        %2015 = vmatpush1.msra.mxu0 0.0
        %2016 = vmatprep.subr.mxu0 0.0
        %2017 = vmatpush1.msra.mxu0 0.0
        %2018 = vmatprep.subr.mxu0 0.0
        %2019 = vmatpush1.msra.mxu0 0.0
        %2020 = vmatprep.subr.mxu0 0.0
        %2021 = vmatpush1.msra.mxu0 0.0
        %2022 = vmatprep.subr.mxu0 0.0
        %2023 = vmatpush1.msra.mxu0 0.0
        %2024 = vmatprep.subr.mxu0 0.0
        %2025 = vmatpush1.msra.mxu0 0.0
        %2026 = vmatprep.subr.mxu0 0.0
        %2027 = vmatpush1.msra.mxu0 0.0
        %2028 = vmatprep.subr.mxu0 0.0
        %2029 = vmatpush1.msra.mxu0 0.0
        %2030 = vmatprep.subr.mxu0 0.0
        %2031 = vmatpush1.msra.mxu0 0.0
        %2032 = vmatprep.subr.mxu0 0.0
        %2033 = vmatpush1.msra.mxu0 0.0
        %2034 = vmatprep.subr.mxu0 0.0
        %2035 = vmatpush1.msra.mxu0 0.0
        %2036 = vmatprep.mubr.f32.mxu0 0.0
        %2037 = vmatmul.mubr.f32.gmra.mrb[0].mxu0 %v1913
        %v2038 = vpop.f32.mrb[0].mxu0
        %v2039 = vadd.f32 %v1909, %v2038
        %v2040 = vpop.f32.mrb[0].mxu0
        %2041 = vmatprep.mubr.f32.mxu0 0.0
        %2042 = vmatmul.mubr.f32.gmra.mrb[0].mxu0 %v1916
        %v2043 = vpop.f32.mrb[0].mxu0
        %v2044 = vadd.f32 %v1909, %v2043
        %v2045 = vpop.f32.mrb[0].mxu0
        %2046 = vmatprep.mubr.f32.mxu0 0.0
        %2047 = vmatmul.mubr.f32.gmra.mrb[0].mxu0 %v1919
        %v2048 = vpop.f32.mrb[0].mxu0
        %v2049 = vadd.f32 %v1909, %v2048
        %v2050 = vpop.f32.mrb[0].mxu0
        %2051 = vmatprep.mubr.f32.mxu0 0.0
        %2052 = vmatmul.mubr.f32.gmra.mrb[0].mxu0 %v1922
        %v2053 = vpop.f32.mrb[0].mxu0
        %v2054 = vadd.f32 %v1909, %v2053
        %v2055 = vpop.f32.mrb[0].mxu0
        %2056 = vmatprep.mubr.f32.mxu0 0.0
        %2057 = vmatmul.mubr.f32.gmra.mrb[0].mxu0 %v1925
        %v2058 = vpop.f32.mrb[0].mxu0
        %v2059 = vadd.f32 %v1909, %v2058
        %v2060 = vpop.f32.mrb[0].mxu0
        %2061 = vmatprep.mubr.f32.mxu0 0.0
        %2062 = vmatmul.mubr.f32.gmra.mrb[0].mxu0 %v1928
        %v2063 = vpop.f32.mrb[0].mxu0
        %v2064 = vadd.f32 %v1909, %v2063
        %v2065 = vpop.f32.mrb[0].mxu0
        %2066 = vmatprep.mubr.f32.mxu0 0.0
        %2067 = vmatmul.mubr.f32.gmra.mrb[0].mxu0 %v1931
        %v2068 = vpop.f32.mrb[0].mxu0
        %v2069 = vadd.f32 %v1909, %v2068
        %v2070 = vpop.f32.mrb[0].mxu0
        %2071 = vmatprep.mubr.f32.mxu0 0.0
        %2072 = vmatmul.mubr.f32.gmra.mrb[0].mxu0 %v1934
        %v2073 = vpop.f32.mrb[0].mxu0
        %v2074 = vadd.f32 %v1909, %v2073
        %v2075 = vpop.f32.mrb[0].mxu0
        %2076 = vmatprep.mubr.f32.mxu0 0.0
        %2077 = vmatmul.mubr.f32.gmra.mrb[0].mxu0 %v1937
        %v2078 = vpop.f32.mrb[0].mxu0
        %v2079 = vadd.f32 %v1909, %v2078
        %v2080 = vpop.f32.mrb[0].mxu0
        %2081 = vmatprep.mubr.f32.mxu0 0.0
        %2082 = vmatmul.mubr.f32.gmra.mrb[0].mxu0 %v1940
        %v2083 = vpop.f32.mrb[0].mxu0
        %v2084 = vadd.f32 %v1909, %v2083
        %v2085 = vpop.f32.mrb[0].mxu0
        %2086 = vmatprep.mubr.f32.mxu0 0.0
        %2087 = vmatmul.mubr.f32.gmra.mrb[0].mxu0 %v1943
        %v2088 = vpop.f32.mrb[0].mxu0
        %v2089 = vadd.f32 %v1909, %v2088
        %v2090 = vpop.f32.mrb[0].mxu0
        %2091 = vmatprep.mubr.f32.mxu0 0.0
        %2092 = vmatmul.mubr.f32.gmra.mrb[0].mxu0 %v1946
        %v2093 = vpop.f32.mrb[0].mxu0
        %v2094 = vadd.f32 %v1909, %v2093
        %v2095 = vpop.f32.mrb[0].mxu0
        %2096 = vmatprep.mubr.f32.mxu0 0.0
        %2097 = vmatmul.mubr.f32.gmra.mrb[0].mxu0 %v1949
        %v2098 = vpop.f32.mrb[0].mxu0
        %v2099 = vadd.f32 %v1909, %v2098
        %v2100 = vpop.f32.mrb[0].mxu0
        %2101 = vmatprep.mubr.f32.mxu0 0.0
        %2102 = vmatmul.mubr.f32.gmra.mrb[0].mxu0 %v1952
        %v2103 = vpop.f32.mrb[0].mxu0
        %v2104 = vadd.f32 %v1909, %v2103
        %v2105 = vpop.f32.mrb[0].mxu0
        %2106 = vmatprep.mubr.f32.mxu0 0.0
        %2107 = vmatmul.mubr.f32.gmra.mrb[0].mxu0 %v1955
        %v2108 = vpop.f32.mrb[0].mxu0
        %v2109 = vadd.f32 %v1909, %v2108
        %v2110 = vpop.f32.mrb[0].mxu0
        %2111 = vmatprep.mubr.f32.mxu0 0.0
        %2112 = vmatmul.mubr.f32.gmra.mrb[0].mxu0 %v1958
        %v2113 = vpop.f32.mrb[0].mxu0
        %v2114 = vadd.f32 %v1909, %v2113
        %v2115 = vpop.f32.mrb[0].mxu0
        %2116 = vmatprep.mubr.f32.mxu0 0.0
        %2117 = vmatmul.mubr.f32.gmra.mrb[0].mxu0 %v1961
        %v2118 = vpop.f32.mrb[0].mxu0
        %v2119 = vadd.f32 %v1909, %v2118
        %v2120 = vpop.f32.mrb[0].mxu0
        %2121 = vmatprep.mubr.f32.mxu0 0.0
        %2122 = vmatmul.mubr.f32.gmra.mrb[0].mxu0 %v1964
        %v2123 = vpop.f32.mrb[0].mxu0
        %v2124 = vadd.f32 %v1909, %v2123
        %v2125 = vpop.f32.mrb[0].mxu0
        %2126 = vmatprep.mubr.f32.mxu0 0.0
        %2127 = vmatmul.mubr.f32.gmra.mrb[0].mxu0 %v1967
        %v2128 = vpop.f32.mrb[0].mxu0
        %v2129 = vadd.f32 %v1909, %v2128
        %v2130 = vpop.f32.mrb[0].mxu0
        %2131 = vmatprep.mubr.f32.mxu0 0.0
        %2132 = vmatmul.mubr.f32.gmra.mrb[0].mxu0 %v1970
        %v2133 = vpop.f32.mrb[0].mxu0
        %v2134 = vadd.f32 %v1909, %v2133
        %v2135 = vpop.f32.mrb[0].mxu0
        %2136 = vdwg.mxu0
        %v2137 = vmax.f32 %v2039, 0.0
        %v2138 = vmax.f32 %v2044, 0.0
        %v2139 = vmax.f32 %v2049, 0.0
        %v2140 = vmax.f32 %v2054, 0.0
        %v2141 = vmax.f32 %v2059, 0.0
        %v2142 = vmax.f32 %v2064, 0.0
        %v2143 = vmax.f32 %v2069, 0.0
        %v2144 = vmax.f32 %v2074, 0.0
        %v2145 = vmax.f32 %v2079, 0.0
        %v2146 = vmax.f32 %v2084, 0.0
        %v2147 = vmax.f32 %v2089, 0.0
        %v2148 = vmax.f32 %v2094, 0.0
        %v2149 = vmax.f32 %v2099, 0.0
        %v2150 = vmax.f32 %v2104, 0.0
        %v2151 = vmax.f32 %v2109, 0.0
        %v2152 = vmax.f32 %v2114, 0.0
        %v2153 = vmax.f32 %v2119, 0.0
        %v2154 = vmax.f32 %v2124, 0.0
        %v2155 = vmax.f32 %v2129, 0.0
        %v2156 = vmax.f32 %v2134, 0.0
        %v2157 = vmul.f32 %v2137, %v852
        %v2158 = vmul.f32 %v2138, %v857
        %v2159 = vmul.f32 %v2139, %v862
        %v2160 = vmul.f32 %v2140, %v867
        %v2161 = vmul.f32 %v2141, %v872
        %v2162 = vmul.f32 %v2142, %v877
        %v2163 = vmul.f32 %v2143, %v882
        %v2164 = vmul.f32 %v2144, %v887
        %v2165 = vmul.f32 %v2145, %v892
        %v2166 = vmul.f32 %v2146, %v897
        %v2167 = vmul.f32 %v2147, %v902
        %v2168 = vmul.f32 %v2148, %v907
        %v2169 = vmul.f32 %v2149, %v912
        %v2170 = vmul.f32 %v2150, %v917
        %v2171 = vmul.f32 %v2151, %v922
        %v2172 = vmul.f32 %v2152, %v927
        %v2173 = vmul.f32 %v2153, %v932
        %v2174 = vmul.f32 %v2154, %v937
        %v2175 = vmul.f32 %v2155, %v942
        %v2176 = vmul.f32 %v2156, %v947
        %v2178 = vsel %vm1911, %v2157, 0
        %v2181 = vsel %vm1911, %v2158, 0
        %v2184 = vsel %vm1911, %v2159, 0
        %v2187 = vsel %vm1911, %v2160, 0
        %v2190 = vsel %vm1911, %v2161, 0
        %v2193 = vsel %vm1911, %v2162, 0
        %v2196 = vsel %vm1911, %v2163, 0
        %v2199 = vsel %vm1911, %v2164, 0
        %v2202 = vsel %vm1911, %v2165, 0
        %v2205 = vsel %vm1911, %v2166, 0
        %v2208 = vsel %vm1911, %v2167, 0
        %v2211 = vsel %vm1911, %v2168, 0
        %v2214 = vsel %vm1911, %v2169, 0
        %v2217 = vsel %vm1911, %v2170, 0
        %v2220 = vsel %vm1911, %v2171, 0
        %v2223 = vsel %vm1911, %v2172, 0
        %v2226 = vsel %vm1911, %v2173, 0
        %v2229 = vsel %vm1911, %v2174, 0
        %v2232 = vsel %vm1911, %v2175, 0
        %v2235 = vsel %vm1911, %v2176, 0
        %2237 = vmatprep.subr.mxu0 0.0
        %2238 = vmatpush1.msra.mxu0 %v695
        %2239 = vmatprep.subr.mxu0 0.0
        %2240 = vmatpush1.msra.mxu0 %v696
        %2241 = vmatprep.subr.mxu0 0.0
        %2242 = vmatpush1.msra.mxu0 %v697
        %2243 = vmatprep.subr.mxu0 0.0
        %2244 = vmatpush1.msra.mxu0 %v698
        %2245 = vmatprep.subr.mxu0 0.0
        %2246 = vmatpush1.msra.mxu0 0.0
        %2247 = vmatprep.subr.mxu0 0.0
        %2248 = vmatpush1.msra.mxu0 0.0
        %2249 = vmatprep.subr.mxu0 0.0
        %2250 = vmatpush1.msra.mxu0 0.0
        %2251 = vmatprep.subr.mxu0 0.0
        %2252 = vmatpush1.msra.mxu0 0.0
        %2253 = vmatprep.subr.mxu0 0.0
        %2254 = vmatpush1.msra.mxu0 0.0
        %2255 = vmatprep.subr.mxu0 0.0
        %2256 = vmatpush1.msra.mxu0 0.0
        %2257 = vmatprep.subr.mxu0 0.0
        %2258 = vmatpush1.msra.mxu0 0.0
        %2259 = vmatprep.subr.mxu0 0.0
        %2260 = vmatpush1.msra.mxu0 0.0
        %2261 = vmatprep.subr.mxu0 0.0
        %2262 = vmatpush1.msra.mxu0 0.0
        %2263 = vmatprep.subr.mxu0 0.0
        %2264 = vmatpush1.msra.mxu0 0.0
        %2265 = vmatprep.subr.mxu0 0.0
        %2266 = vmatpush1.msra.mxu0 0.0
        %2267 = vmatprep.subr.mxu0 0.0
        %2268 = vmatpush1.msra.mxu0 0.0
        %2269 = vmatprep.subr.mxu0 0.0
        %2270 = vmatpush1.msra.mxu0 0.0
        %2271 = vmatprep.subr.mxu0 0.0
        %2272 = vmatpush1.msra.mxu0 0.0
        %2273 = vmatprep.subr.mxu0 0.0
        %2274 = vmatpush1.msra.mxu0 0.0
        %2275 = vmatprep.subr.mxu0 0.0
        %2276 = vmatpush1.msra.mxu0 0.0
        %2277 = vmatprep.subr.mxu0 0.0
        %2278 = vmatpush1.msra.mxu0 0.0
        %2279 = vmatprep.subr.mxu0 0.0
        %2280 = vmatpush1.msra.mxu0 0.0
        %2281 = vmatprep.subr.mxu0 0.0
        %2282 = vmatpush1.msra.mxu0 0.0
        %2283 = vmatprep.subr.mxu0 0.0
        %2284 = vmatpush1.msra.mxu0 0.0
        %2285 = vmatprep.subr.mxu0 0.0
        %2286 = vmatpush1.msra.mxu0 0.0
        %2287 = vmatprep.subr.mxu0 0.0
        %2288 = vmatpush1.msra.mxu0 0.0
        %2289 = vmatprep.subr.mxu0 0.0
        %2290 = vmatpush1.msra.mxu0 0.0
        %2291 = vmatprep.subr.mxu0 0.0
        %2292 = vmatpush1.msra.mxu0 0.0
        %2293 = vmatprep.subr.mxu0 0.0
        %2294 = vmatpush1.msra.mxu0 0.0
        %2295 = vmatprep.subr.mxu0 0.0
        %2296 = vmatpush1.msra.mxu0 0.0
        %2297 = vmatprep.subr.mxu0 0.0
        %2298 = vmatpush1.msra.mxu0 0.0
        %2299 = vmatprep.subr.mxu0 0.0
        %2300 = vmatpush1.msra.mxu0 0.0
        %2301 = vmatprep.mubr.f32.mxu0 0.0
        %2302 = vmatmul.mubr.f32.gmra.mrb[0].mxu0 %v2178
        %v2303 = vpop.f32.mrb[0].mxu0
        %v2304 = vadd.f32 0.0, %v2303
        %v2305 = vpop.f32.mrb[0].mxu0
        %2306 = vmatprep.mubr.f32.mxu0 0.0
        %2307 = vmatmul.mubr.f32.gmra.mrb[0].mxu0 %v2181
        %v2308 = vpop.f32.mrb[0].mxu0
        %v2309 = vadd.f32 0.0, %v2308
        %v2310 = vpop.f32.mrb[0].mxu0
        %2311 = vmatprep.mubr.f32.mxu0 0.0
        %2312 = vmatmul.mubr.f32.gmra.mrb[0].mxu0 %v2184
        %v2313 = vpop.f32.mrb[0].mxu0
        %v2314 = vadd.f32 0.0, %v2313
        %v2315 = vpop.f32.mrb[0].mxu0
        %2316 = vmatprep.mubr.f32.mxu0 0.0
        %2317 = vmatmul.mubr.f32.gmra.mrb[0].mxu0 %v2187
        %v2318 = vpop.f32.mrb[0].mxu0
        %v2319 = vadd.f32 0.0, %v2318
        %v2320 = vpop.f32.mrb[0].mxu0
        %2321 = vmatprep.mubr.f32.mxu0 0.0
        %2322 = vmatmul.mubr.f32.gmra.mrb[0].mxu0 %v2190
        %v2323 = vpop.f32.mrb[0].mxu0
        %v2324 = vadd.f32 0.0, %v2323
        %v2325 = vpop.f32.mrb[0].mxu0
        %2326 = vmatprep.mubr.f32.mxu0 0.0
        %2327 = vmatmul.mubr.f32.gmra.mrb[0].mxu0 %v2193
        %v2328 = vpop.f32.mrb[0].mxu0
        %v2329 = vadd.f32 0.0, %v2328
        %v2330 = vpop.f32.mrb[0].mxu0
        %2331 = vmatprep.mubr.f32.mxu0 0.0
        %2332 = vmatmul.mubr.f32.gmra.mrb[0].mxu0 %v2196
        %v2333 = vpop.f32.mrb[0].mxu0
        %v2334 = vadd.f32 0.0, %v2333
        %v2335 = vpop.f32.mrb[0].mxu0
        %2336 = vmatprep.mubr.f32.mxu0 0.0
        %2337 = vmatmul.mubr.f32.gmra.mrb[0].mxu0 %v2199
        %v2338 = vpop.f32.mrb[0].mxu0
        %v2339 = vadd.f32 0.0, %v2338
        %v2340 = vpop.f32.mrb[0].mxu0
        %2341 = vmatprep.mubr.f32.mxu0 0.0
        %2342 = vmatmul.mubr.f32.gmra.mrb[0].mxu0 %v2202
        %v2343 = vpop.f32.mrb[0].mxu0
        %v2344 = vadd.f32 0.0, %v2343
        %v2345 = vpop.f32.mrb[0].mxu0
        %2346 = vmatprep.mubr.f32.mxu0 0.0
        %2347 = vmatmul.mubr.f32.gmra.mrb[0].mxu0 %v2205
        %v2348 = vpop.f32.mrb[0].mxu0
        %v2349 = vadd.f32 0.0, %v2348
        %v2350 = vpop.f32.mrb[0].mxu0
        %2351 = vmatprep.mubr.f32.mxu0 0.0
        %2352 = vmatmul.mubr.f32.gmra.mrb[0].mxu0 %v2208
        %v2353 = vpop.f32.mrb[0].mxu0
        %v2354 = vadd.f32 0.0, %v2353
        %v2355 = vpop.f32.mrb[0].mxu0
        %2356 = vmatprep.mubr.f32.mxu0 0.0
        %2357 = vmatmul.mubr.f32.gmra.mrb[0].mxu0 %v2211
        %v2358 = vpop.f32.mrb[0].mxu0
        %v2359 = vadd.f32 0.0, %v2358
        %v2360 = vpop.f32.mrb[0].mxu0
        %2361 = vmatprep.mubr.f32.mxu0 0.0
        %2362 = vmatmul.mubr.f32.gmra.mrb[0].mxu0 %v2214
        %v2363 = vpop.f32.mrb[0].mxu0
        %v2364 = vadd.f32 0.0, %v2363
        %v2365 = vpop.f32.mrb[0].mxu0
        %2366 = vmatprep.mubr.f32.mxu0 0.0
        %2367 = vmatmul.mubr.f32.gmra.mrb[0].mxu0 %v2217
        %v2368 = vpop.f32.mrb[0].mxu0
        %v2369 = vadd.f32 0.0, %v2368
        %v2370 = vpop.f32.mrb[0].mxu0
        %2371 = vmatprep.mubr.f32.mxu0 0.0
        %2372 = vmatmul.mubr.f32.gmra.mrb[0].mxu0 %v2220
        %v2373 = vpop.f32.mrb[0].mxu0
        %v2374 = vadd.f32 0.0, %v2373
        %v2375 = vpop.f32.mrb[0].mxu0
        %2376 = vmatprep.mubr.f32.mxu0 0.0
        %2377 = vmatmul.mubr.f32.gmra.mrb[0].mxu0 %v2223
        %v2378 = vpop.f32.mrb[0].mxu0
        %v2379 = vadd.f32 0.0, %v2378
        %v2380 = vpop.f32.mrb[0].mxu0
        %2381 = vmatprep.mubr.f32.mxu0 0.0
        %2382 = vmatmul.mubr.f32.gmra.mrb[0].mxu0 %v2226
        %v2383 = vpop.f32.mrb[0].mxu0
        %v2384 = vadd.f32 0.0, %v2383
        %v2385 = vpop.f32.mrb[0].mxu0
        %2386 = vmatprep.mubr.f32.mxu0 0.0
        %2387 = vmatmul.mubr.f32.gmra.mrb[0].mxu0 %v2229
        %v2388 = vpop.f32.mrb[0].mxu0
        %v2389 = vadd.f32 0.0, %v2388
        %v2390 = vpop.f32.mrb[0].mxu0
        %2391 = vmatprep.mubr.f32.mxu0 0.0
        %2392 = vmatmul.mubr.f32.gmra.mrb[0].mxu0 %v2232
        %v2393 = vpop.f32.mrb[0].mxu0
        %v2394 = vadd.f32 0.0, %v2393
        %v2395 = vpop.f32.mrb[0].mxu0
        %2396 = vmatprep.mubr.f32.mxu0 0.0
        %2397 = vmatmul.mubr.f32.gmra.mrb[0].mxu0 %v2235
        %v2398 = vpop.f32.mrb[0].mxu0
        %v2399 = vadd.f32 0.0, %v2398
        %v2400 = vpop.f32.mrb[0].mxu0
        %2401 = vdwg.mxu0
        %v2403 = vsel %vm1911, %v668, 0
        %v2406 = vsel %vm1911, %v670, 0
        %v2409 = vsel %vm1911, %v672, 0
        %v2412 = vsel %vm1911, %v674, 0
        %v2415 = vsel %vm1911, %v676, 0
        %2417 = vmatprep.subr.mxu0 0.0
        %2418 = vmatpush1.msra.mxu0 %v2304
        %2419 = vmatprep.subr.mxu0 0.0
        %2420 = vmatpush1.msra.mxu0 %v2309
        %2421 = vmatprep.subr.mxu0 0.0
        %2422 = vmatpush1.msra.mxu0 %v2314
        %2423 = vmatprep.subr.mxu0 0.0
        %2424 = vmatpush1.msra.mxu0 %v2319
        %2425 = vmatprep.subr.mxu0 0.0
        %2426 = vmatpush1.msra.mxu0 %v2324
        %2427 = vmatprep.subr.mxu0 0.0
        %2428 = vmatpush1.msra.mxu0 %v2329
        %2429 = vmatprep.subr.mxu0 0.0
        %2430 = vmatpush1.msra.mxu0 %v2334
        %2431 = vmatprep.subr.mxu0 0.0
        %2432 = vmatpush1.msra.mxu0 %v2339
        %2433 = vmatprep.subr.mxu0 0.0
        %2434 = vmatpush1.msra.mxu0 %v2344
        %2435 = vmatprep.subr.mxu0 0.0
        %2436 = vmatpush1.msra.mxu0 %v2349
        %2437 = vmatprep.subr.mxu0 0.0
        %2438 = vmatpush1.msra.mxu0 %v2354
        %2439 = vmatprep.subr.mxu0 0.0
        %2440 = vmatpush1.msra.mxu0 %v2359
        %2441 = vmatprep.subr.mxu0 0.0
        %2442 = vmatpush1.msra.mxu0 %v2364
        %2443 = vmatprep.subr.mxu0 0.0
        %2444 = vmatpush1.msra.mxu0 %v2369
        %2445 = vmatprep.subr.mxu0 0.0
        %2446 = vmatpush1.msra.mxu0 %v2374
        %2447 = vmatprep.subr.mxu0 0.0
        %2448 = vmatpush1.msra.mxu0 %v2379
        %2449 = vmatprep.subr.mxu0 0.0
        %2450 = vmatpush1.msra.mxu0 %v2384
        %2451 = vmatprep.subr.mxu0 0.0
        %2452 = vmatpush1.msra.mxu0 %v2389
        %2453 = vmatprep.subr.mxu0 0.0
        %2454 = vmatpush1.msra.mxu0 %v2394
        %2455 = vmatprep.subr.mxu0 0.0
        %2456 = vmatpush1.msra.mxu0 %v2399
        %2457 = vmatprep.subr.mxu0 0.0
        %2458 = vmatpush1.msra.mxu0 0.0
        %2459 = vmatprep.subr.mxu0 0.0
        %2460 = vmatpush1.msra.mxu0 0.0
        %2461 = vmatprep.subr.mxu0 0.0
        %2462 = vmatpush1.msra.mxu0 0.0
        %2463 = vmatprep.subr.mxu0 0.0
        %2464 = vmatpush1.msra.mxu0 0.0
        %2465 = vmatprep.subr.mxu0 0.0
        %2466 = vmatpush1.msra.mxu0 0.0
        %2467 = vmatprep.subr.mxu0 0.0
        %2468 = vmatpush1.msra.mxu0 0.0
        %2469 = vmatprep.subr.mxu0 0.0
        %2470 = vmatpush1.msra.mxu0 0.0
        %2471 = vmatprep.subr.mxu0 0.0
        %2472 = vmatpush1.msra.mxu0 0.0
        %2473 = vmatprep.subr.mxu0 0.0
        %2474 = vmatpush1.msra.mxu0 0.0
        %2475 = vmatprep.subr.mxu0 0.0
        %2476 = vmatpush1.msra.mxu0 0.0
        %2477 = vmatprep.subr.mxu0 0.0
        %2478 = vmatpush1.msra.mxu0 0.0
        %2479 = vmatprep.subr.mxu0 0.0
        %2480 = vmatpush1.msra.mxu0 0.0
        %2481 = vmatprep.mubr.f32.mxu0 %v2403
        %2482 = vmatmul.mubr.f32.gmra.mrb[0].mxu0 %v667
        %v2483 = vpop.f32.mrb[0].mxu0
        %v2484 = vadd.f32 0.0, %v2483
        %v2485 = vpop.f32.mrb[0].mxu0
        %2486 = vmatprep.mubr.f32.mxu0 %v2406
        %2487 = vmatmul.mubr.f32.gmra.mrb[0].mxu0 %v669
        %v2488 = vpop.f32.mrb[0].mxu0
        %v2489 = vadd.f32 0.0, %v2488
        %v2490 = vpop.f32.mrb[0].mxu0
        %2491 = vmatprep.mubr.f32.mxu0 %v2409
        %2492 = vmatmul.mubr.f32.gmra.mrb[0].mxu0 %v671
        %v2493 = vpop.f32.mrb[0].mxu0
        %v2494 = vadd.f32 0.0, %v2493
        %v2495 = vpop.f32.mrb[0].mxu0
        %2496 = vmatprep.mubr.f32.mxu0 %v2412
        %2497 = vmatmul.mubr.f32.gmra.mrb[0].mxu0 %v673
        %v2498 = vpop.f32.mrb[0].mxu0
        %v2499 = vadd.f32 0.0, %v2498
        %v2500 = vpop.f32.mrb[0].mxu0
        %2501 = vmatprep.mubr.f32.mxu0 %v2415
        %2502 = vmatmul.mubr.f32.gmra.mrb[0].mxu0 %v675
        %v2503 = vpop.f32.mrb[0].mxu0
        %v2504 = vadd.f32 0.0, %v2503
        %v2505 = vpop.f32.mrb[0].mxu0
        %2506 = vdwg.mxu0
        %vm2507 = vcmask 130048
        %v2509 = vsel %vm2507, %v2484, 0
        %v2512 = vsel %vm2507, %v2489, 0
        %v2515 = vsel %vm2507, %v2494, 0
        %v2518 = vsel %vm2507, %v2499, 0
        %v2521 = vsel %vm2507, %v2504, 0
        %2523 = vmatprep.subr.mxu0 0.0
        %2524 = vmatpush1.msra.mxu0 %v686
        %2525 = vmatprep.subr.mxu0 0.0
        %2526 = vmatpush1.msra.mxu0 %v687
        %2527 = vmatprep.subr.mxu0 0.0
        %2528 = vmatpush1.msra.mxu0 0.0
        %2529 = vmatprep.subr.mxu0 0.0
        %2530 = vmatpush1.msra.mxu0 0.0
        %2531 = vmatprep.subr.mxu0 0.0
        %2532 = vmatpush1.msra.mxu0 0.0
        %2533 = vmatprep.subr.mxu0 0.0
        %2534 = vmatpush1.msra.mxu0 0.0
        %2535 = vmatprep.subr.mxu0 0.0
        %2536 = vmatpush1.msra.mxu0 0.0
        %2537 = vmatprep.subr.mxu0 0.0
        %2538 = vmatpush1.msra.mxu0 0.0
        %2539 = vmatprep.subr.mxu0 0.0
        %2540 = vmatpush1.msra.mxu0 0.0
        %2541 = vmatprep.subr.mxu0 0.0
        %2542 = vmatpush1.msra.mxu0 0.0
        %2543 = vmatprep.subr.mxu0 0.0
        %2544 = vmatpush1.msra.mxu0 0.0
        %2545 = vmatprep.subr.mxu0 0.0
        %2546 = vmatpush1.msra.mxu0 0.0
        %2547 = vmatprep.subr.mxu0 0.0
        %2548 = vmatpush1.msra.mxu0 0.0
        %2549 = vmatprep.subr.mxu0 0.0
        %2550 = vmatpush1.msra.mxu0 0.0
        %2551 = vmatprep.subr.mxu0 0.0
        %2552 = vmatpush1.msra.mxu0 0.0
        %2553 = vmatprep.subr.mxu0 0.0
        %2554 = vmatpush1.msra.mxu0 0.0
        %2555 = vmatprep.subr.mxu0 0.0
        %2556 = vmatpush1.msra.mxu0 0.0
        %2557 = vmatprep.subr.mxu0 0.0
        %2558 = vmatpush1.msra.mxu0 0.0
        %2559 = vmatprep.subr.mxu0 0.0
        %2560 = vmatpush1.msra.mxu0 0.0
        %2561 = vmatprep.subr.mxu0 0.0
        %2562 = vmatpush1.msra.mxu0 0.0
        %2563 = vmatprep.subr.mxu0 0.0
        %2564 = vmatpush1.msra.mxu0 0.0
        %2565 = vmatprep.subr.mxu0 0.0
        %2566 = vmatpush1.msra.mxu0 0.0
        %2567 = vmatprep.subr.mxu0 0.0
        %2568 = vmatpush1.msra.mxu0 0.0
        %2569 = vmatprep.subr.mxu0 0.0
        %2570 = vmatpush1.msra.mxu0 0.0
        %2571 = vmatprep.subr.mxu0 0.0
        %2572 = vmatpush1.msra.mxu0 0.0
        %2573 = vmatprep.subr.mxu0 0.0
        %2574 = vmatpush1.msra.mxu0 0.0
        %2575 = vmatprep.subr.mxu0 0.0
        %2576 = vmatpush1.msra.mxu0 0.0
        %2577 = vmatprep.subr.mxu0 0.0
        %2578 = vmatpush1.msra.mxu0 0.0
        %2579 = vmatprep.subr.mxu0 0.0
        %2580 = vmatpush1.msra.mxu0 0.0
        %2581 = vmatprep.subr.mxu0 0.0
        %2582 = vmatpush1.msra.mxu0 0.0
        %2583 = vmatprep.subr.mxu0 0.0
        %2584 = vmatpush1.msra.mxu0 0.0
        %2585 = vmatprep.subr.mxu0 0.0
        %2586 = vmatpush1.msra.mxu0 0.0
        %2587 = vmatprep.mubr.f32.mxu0 0.0
        %2588 = vmatmul.mubr.f32.gmra.mrb[0].mxu0 %v2509
        %v2589 = vpop.f32.mrb[0].mxu0
        %v2590 = vadd.f32 0.0, %v2589
        %v2591 = vpop.f32.mrb[0].mxu0
        %2592 = vmatprep.mubr.f32.mxu0 0.0
        %2593 = vmatmul.mubr.f32.gmra.mrb[0].mxu0 %v2512
        %v2594 = vpop.f32.mrb[0].mxu0
        %v2595 = vadd.f32 0.0, %v2594
        %v2596 = vpop.f32.mrb[0].mxu0
        %2597 = vmatprep.mubr.f32.mxu0 0.0
        %2598 = vmatmul.mubr.f32.gmra.mrb[0].mxu0 %v2515
        %v2599 = vpop.f32.mrb[0].mxu0
        %v2600 = vadd.f32 0.0, %v2599
        %v2601 = vpop.f32.mrb[0].mxu0
        %2602 = vmatprep.mubr.f32.mxu0 0.0
        %2603 = vmatmul.mubr.f32.gmra.mrb[0].mxu0 %v2518
        %v2604 = vpop.f32.mrb[0].mxu0
        %v2605 = vadd.f32 0.0, %v2604
        %v2606 = vpop.f32.mrb[0].mxu0
        %2607 = vmatprep.mubr.f32.mxu0 0.0
        %2608 = vmatmul.mubr.f32.gmra.mrb[0].mxu0 %v2521
        %v2609 = vpop.f32.mrb[0].mxu0
        %v2610 = vadd.f32 0.0, %v2609
        %v2611 = vpop.f32.mrb[0].mxu0
        %2612 = vdwg.mxu0
        %v2614 = vsel %vm1401, %v622, 0
        %v2617 = vsel %vm1401, %v623, 0
        %v2620 = vsel %vm1401, %v624, 0
        %v2623 = vsel %vm1401, %v625, 0
        %v2626 = vsel %vm1401, %v626, 0
        %v2629 = vsel %vm1462, %v685, 0
        %2631 = vmatprep.subr.mxu0 0.0
        %2632 = vmatpush1.msra.mxu0 %v2629
        %2633 = vmatprep.subr.mxu0 0.0
        %2634 = vmatpush1.msra.mxu0 0.0
        %2635 = vmatprep.subr.mxu0 0.0
        %2636 = vmatpush1.msra.mxu0 0.0
        %2637 = vmatprep.subr.mxu0 0.0
        %2638 = vmatpush1.msra.mxu0 0.0
        %2639 = vmatprep.subr.mxu0 0.0
        %2640 = vmatpush1.msra.mxu0 0.0
        %2641 = vmatprep.subr.mxu0 0.0
        %2642 = vmatpush1.msra.mxu0 0.0
        %2643 = vmatprep.subr.mxu0 0.0
        %2644 = vmatpush1.msra.mxu0 0.0
        %2645 = vmatprep.subr.mxu0 0.0
        %2646 = vmatpush1.msra.mxu0 0.0
        %2647 = vmatprep.subr.mxu0 0.0
        %2648 = vmatpush1.msra.mxu0 0.0
        %2649 = vmatprep.subr.mxu0 0.0
        %2650 = vmatpush1.msra.mxu0 0.0
        %2651 = vmatprep.subr.mxu0 0.0
        %2652 = vmatpush1.msra.mxu0 0.0
        %2653 = vmatprep.subr.mxu0 0.0
        %2654 = vmatpush1.msra.mxu0 0.0
        %2655 = vmatprep.subr.mxu0 0.0
        %2656 = vmatpush1.msra.mxu0 0.0
        %2657 = vmatprep.subr.mxu0 0.0
        %2658 = vmatpush1.msra.mxu0 0.0
        %2659 = vmatprep.subr.mxu0 0.0
        %2660 = vmatpush1.msra.mxu0 0.0
        %2661 = vmatprep.subr.mxu0 0.0
        %2662 = vmatpush1.msra.mxu0 0.0
        %2663 = vmatprep.subr.mxu0 0.0
        %2664 = vmatpush1.msra.mxu0 0.0
        %2665 = vmatprep.subr.mxu0 0.0
        %2666 = vmatpush1.msra.mxu0 0.0
        %2667 = vmatprep.subr.mxu0 0.0
        %2668 = vmatpush1.msra.mxu0 0.0
        %2669 = vmatprep.subr.mxu0 0.0
        %2670 = vmatpush1.msra.mxu0 0.0
        %2671 = vmatprep.subr.mxu0 0.0
        %2672 = vmatpush1.msra.mxu0 0.0
        %2673 = vmatprep.subr.mxu0 0.0
        %2674 = vmatpush1.msra.mxu0 0.0
        %2675 = vmatprep.subr.mxu0 0.0
        %2676 = vmatpush1.msra.mxu0 0.0
        %2677 = vmatprep.subr.mxu0 0.0
        %2678 = vmatpush1.msra.mxu0 0.0
        %2679 = vmatprep.subr.mxu0 0.0
        %2680 = vmatpush1.msra.mxu0 0.0
        %2681 = vmatprep.subr.mxu0 0.0
        %2682 = vmatpush1.msra.mxu0 0.0
        %2683 = vmatprep.subr.mxu0 0.0
        %2684 = vmatpush1.msra.mxu0 0.0
        %2685 = vmatprep.subr.mxu0 0.0
        %2686 = vmatpush1.msra.mxu0 0.0
        %2687 = vmatprep.subr.mxu0 0.0
        %2688 = vmatpush1.msra.mxu0 0.0
        %2689 = vmatprep.subr.mxu0 0.0
        %2690 = vmatpush1.msra.mxu0 0.0
        %2691 = vmatprep.subr.mxu0 0.0
        %2692 = vmatpush1.msra.mxu0 0.0
        %2693 = vmatprep.subr.mxu0 0.0
        %2694 = vmatpush1.msra.mxu0 0.0
        %2695 = vmatprep.mubr.f32.mxu0 0.0
        %2696 = vmatmul.mubr.f32.gmra.mrb[0].mxu0 %v2614
        %v2697 = vpop.f32.mrb[0].mxu0
        %v2698 = vadd.f32 %v2590, %v2697
        %v2699 = vpop.f32.mrb[0].mxu0
        %2700 = vmatprep.mubr.f32.mxu0 0.0
        %2701 = vmatmul.mubr.f32.gmra.mrb[0].mxu0 %v2617
        %v2702 = vpop.f32.mrb[0].mxu0
        %v2703 = vadd.f32 %v2595, %v2702
        %v2704 = vpop.f32.mrb[0].mxu0
        %2705 = vmatprep.mubr.f32.mxu0 0.0
        %2706 = vmatmul.mubr.f32.gmra.mrb[0].mxu0 %v2620
        %v2707 = vpop.f32.mrb[0].mxu0
        %v2708 = vadd.f32 %v2600, %v2707
        %v2709 = vpop.f32.mrb[0].mxu0
        %2710 = vmatprep.mubr.f32.mxu0 0.0
        %2711 = vmatmul.mubr.f32.gmra.mrb[0].mxu0 %v2623
        %v2712 = vpop.f32.mrb[0].mxu0
        %v2713 = vadd.f32 %v2605, %v2712
        %v2714 = vpop.f32.mrb[0].mxu0
        %2715 = vmatprep.mubr.f32.mxu0 0.0
        %2716 = vmatmul.mubr.f32.gmra.mrb[0].mxu0 %v2626
        %v2717 = vpop.f32.mrb[0].mxu0
        %v2718 = vadd.f32 %v2610, %v2717
        %v2719 = vpop.f32.mrb[0].mxu0
        %2720 = vdwg.mxu0
        %v2722 = vlaneseq
        %v2723 = vshrl.u32 %v2722, 7
        %v2724 = vsub.s32 0, %v2723
        %v2725 = vrot.slane %v688, %v2724
        %v2727 = vadd.f32 %v2698, %v2725
        %v2728 = vadd.f32 %v2703, %v2725
        %v2729 = vadd.f32 %v2708, %v2725
        %v2730 = vadd.f32 %v2713, %v2725
        %v2731 = vadd.f32 %v2718, %v2725
        %v2732 = vmax.f32 %v2727, 0.0
        %v2733 = vmax.f32 %v2728, 0.0
        %v2734 = vmax.f32 %v2729, 0.0
        %v2735 = vmax.f32 %v2730, 0.0
        %v2736 = vmax.f32 %v2731, 0.0
        %v2738 = vlaneseq
        %v2739 = vshrl.u32 %v2738, 7
        %v2740 = vsub.s32 0, %v2739
        %v2741 = vrot.slane %v691, %v2740
        %v2744 = vsel %vm2507, %v2732, 0
        %v2747 = vsel %vm2507, %v2733, 0
        %v2750 = vsel %vm2507, %v2734, 0
        %v2753 = vsel %vm2507, %v2735, 0
        %v2756 = vsel %vm2507, %v2736, 0
        %2758 = vmatprep.subr.mxu0 0.0
        %2759 = vmatpush1.msra.mxu0 %v689
        %2760 = vmatprep.subr.mxu0 0.0
        %2761 = vmatpush1.msra.mxu0 %v690
        %2762 = vmatprep.subr.mxu0 0.0
        %2763 = vmatpush1.msra.mxu0 0.0
        %2764 = vmatprep.subr.mxu0 0.0
        %2765 = vmatpush1.msra.mxu0 0.0
        %2766 = vmatprep.subr.mxu0 0.0
        %2767 = vmatpush1.msra.mxu0 0.0
        %2768 = vmatprep.subr.mxu0 0.0
        %2769 = vmatpush1.msra.mxu0 0.0
        %2770 = vmatprep.subr.mxu0 0.0
        %2771 = vmatpush1.msra.mxu0 0.0
        %2772 = vmatprep.subr.mxu0 0.0
        %2773 = vmatpush1.msra.mxu0 0.0
        %2774 = vmatprep.subr.mxu0 0.0
        %2775 = vmatpush1.msra.mxu0 0.0
        %2776 = vmatprep.subr.mxu0 0.0
        %2777 = vmatpush1.msra.mxu0 0.0
        %2778 = vmatprep.subr.mxu0 0.0
        %2779 = vmatpush1.msra.mxu0 0.0
        %2780 = vmatprep.subr.mxu0 0.0
        %2781 = vmatpush1.msra.mxu0 0.0
        %2782 = vmatprep.subr.mxu0 0.0
        %2783 = vmatpush1.msra.mxu0 0.0
        %2784 = vmatprep.subr.mxu0 0.0
        %2785 = vmatpush1.msra.mxu0 0.0
        %2786 = vmatprep.subr.mxu0 0.0
        %2787 = vmatpush1.msra.mxu0 0.0
        %2788 = vmatprep.subr.mxu0 0.0
        %2789 = vmatpush1.msra.mxu0 0.0
        %2790 = vmatprep.subr.mxu0 0.0
        %2791 = vmatpush1.msra.mxu0 0.0
        %2792 = vmatprep.subr.mxu0 0.0
        %2793 = vmatpush1.msra.mxu0 0.0
        %2794 = vmatprep.subr.mxu0 0.0
        %2795 = vmatpush1.msra.mxu0 0.0
        %2796 = vmatprep.subr.mxu0 0.0
        %2797 = vmatpush1.msra.mxu0 0.0
        %2798 = vmatprep.subr.mxu0 0.0
        %2799 = vmatpush1.msra.mxu0 0.0
        %2800 = vmatprep.subr.mxu0 0.0
        %2801 = vmatpush1.msra.mxu0 0.0
        %2802 = vmatprep.subr.mxu0 0.0
        %2803 = vmatpush1.msra.mxu0 0.0
        %2804 = vmatprep.subr.mxu0 0.0
        %2805 = vmatpush1.msra.mxu0 0.0
        %2806 = vmatprep.subr.mxu0 0.0
        %2807 = vmatpush1.msra.mxu0 0.0
        %2808 = vmatprep.subr.mxu0 0.0
        %2809 = vmatpush1.msra.mxu0 0.0
        %2810 = vmatprep.subr.mxu0 0.0
        %2811 = vmatpush1.msra.mxu0 0.0
        %2812 = vmatprep.subr.mxu0 0.0
        %2813 = vmatpush1.msra.mxu0 0.0
        %2814 = vmatprep.subr.mxu0 0.0
        %2815 = vmatpush1.msra.mxu0 0.0
        %2816 = vmatprep.subr.mxu0 0.0
        %2817 = vmatpush1.msra.mxu0 0.0
        %2818 = vmatprep.subr.mxu0 0.0
        %2819 = vmatpush1.msra.mxu0 0.0
        %2820 = vmatprep.subr.mxu0 0.0
        %2821 = vmatpush1.msra.mxu0 0.0
        %2822 = vmatprep.mubr.f32.mxu0 0.0
        %2823 = vmatmul.mubr.f32.gmra.mrb[0].mxu0 %v2744
        %v2824 = vpop.f32.mrb[0].mxu0
        %v2825 = vadd.f32 %v2741, %v2824
        %v2826 = vpop.f32.mrb[0].mxu0
        %2827 = vmatprep.mubr.f32.mxu0 0.0
        %2828 = vmatmul.mubr.f32.gmra.mrb[0].mxu0 %v2747
        %v2829 = vpop.f32.mrb[0].mxu0
        %v2830 = vadd.f32 %v2741, %v2829
        %v2831 = vpop.f32.mrb[0].mxu0
        %2832 = vmatprep.mubr.f32.mxu0 0.0
        %2833 = vmatmul.mubr.f32.gmra.mrb[0].mxu0 %v2750
        %v2834 = vpop.f32.mrb[0].mxu0
        %v2835 = vadd.f32 %v2741, %v2834
        %v2836 = vpop.f32.mrb[0].mxu0
        %2837 = vmatprep.mubr.f32.mxu0 0.0
        %2838 = vmatmul.mubr.f32.gmra.mrb[0].mxu0 %v2753
        %v2839 = vpop.f32.mrb[0].mxu0
        %v2840 = vadd.f32 %v2741, %v2839
        %v2841 = vpop.f32.mrb[0].mxu0
        %2842 = vmatprep.mubr.f32.mxu0 0.0
        %2843 = vmatmul.mubr.f32.gmra.mrb[0].mxu0 %v2756
        %v2844 = vpop.f32.mrb[0].mxu0
        %v2845 = vadd.f32 %v2741, %v2844
        %v2846 = vpop.f32.mrb[0].mxu0
        %2847 = vdwg.mxu0
        %v2848 = vmax.f32 %v2825, 0.0
        %v2849 = vmax.f32 %v2830, 0.0
        %v2850 = vmax.f32 %v2835, 0.0
        %v2851 = vmax.f32 %v2840, 0.0
        %v2852 = vmax.f32 %v2845, 0.0
        %v2854 = vlaneseq
        %v2855 = vshrl.u32 %v2854, 7
        %v2856 = vsub.s32 0, %v2855
        %v2857 = vrot.slane %v694, %v2856
        %v2860 = vsel %vm2507, %v2848, 0
        %v2863 = vsel %vm2507, %v2849, 0
        %v2866 = vsel %vm2507, %v2850, 0
        %v2869 = vsel %vm2507, %v2851, 0
        %v2872 = vsel %vm2507, %v2852, 0
        %2874 = vmatprep.subr.mxu0 0.0
        %2875 = vmatpush1.msra.mxu0 %v692
        %2876 = vmatprep.subr.mxu0 0.0
        %2877 = vmatpush1.msra.mxu0 %v693
        %2878 = vmatprep.subr.mxu0 0.0
        %2879 = vmatpush1.msra.mxu0 0.0
        %2880 = vmatprep.subr.mxu0 0.0
        %2881 = vmatpush1.msra.mxu0 0.0
        %2882 = vmatprep.subr.mxu0 0.0
        %2883 = vmatpush1.msra.mxu0 0.0
        %2884 = vmatprep.subr.mxu0 0.0
        %2885 = vmatpush1.msra.mxu0 0.0
        %2886 = vmatprep.subr.mxu0 0.0
        %2887 = vmatpush1.msra.mxu0 0.0
        %2888 = vmatprep.subr.mxu0 0.0
        %2889 = vmatpush1.msra.mxu0 0.0
        %2890 = vmatprep.subr.mxu0 0.0
        %2891 = vmatpush1.msra.mxu0 0.0
        %2892 = vmatprep.subr.mxu0 0.0
        %2893 = vmatpush1.msra.mxu0 0.0
        %2894 = vmatprep.subr.mxu0 0.0
        %2895 = vmatpush1.msra.mxu0 0.0
        %2896 = vmatprep.subr.mxu0 0.0
        %2897 = vmatpush1.msra.mxu0 0.0
        %2898 = vmatprep.subr.mxu0 0.0
        %2899 = vmatpush1.msra.mxu0 0.0
        %2900 = vmatprep.subr.mxu0 0.0
        %2901 = vmatpush1.msra.mxu0 0.0
        %2902 = vmatprep.subr.mxu0 0.0
        %2903 = vmatpush1.msra.mxu0 0.0
        %2904 = vmatprep.subr.mxu0 0.0
        %2905 = vmatpush1.msra.mxu0 0.0
        %2906 = vmatprep.subr.mxu0 0.0
        %2907 = vmatpush1.msra.mxu0 0.0
        %2908 = vmatprep.subr.mxu0 0.0
        %2909 = vmatpush1.msra.mxu0 0.0
        %2910 = vmatprep.subr.mxu0 0.0
        %2911 = vmatpush1.msra.mxu0 0.0
        %2912 = vmatprep.subr.mxu0 0.0
        %2913 = vmatpush1.msra.mxu0 0.0
        %2914 = vmatprep.subr.mxu0 0.0
        %2915 = vmatpush1.msra.mxu0 0.0
        %2916 = vmatprep.subr.mxu0 0.0
        %2917 = vmatpush1.msra.mxu0 0.0
        %2918 = vmatprep.subr.mxu0 0.0
        %2919 = vmatpush1.msra.mxu0 0.0
        %2920 = vmatprep.subr.mxu0 0.0
        %2921 = vmatpush1.msra.mxu0 0.0
        %2922 = vmatprep.subr.mxu0 0.0
        %2923 = vmatpush1.msra.mxu0 0.0
        %2924 = vmatprep.subr.mxu0 0.0
        %2925 = vmatpush1.msra.mxu0 0.0
        %2926 = vmatprep.subr.mxu0 0.0
        %2927 = vmatpush1.msra.mxu0 0.0
        %2928 = vmatprep.subr.mxu0 0.0
        %2929 = vmatpush1.msra.mxu0 0.0
        %2930 = vmatprep.subr.mxu0 0.0
        %2931 = vmatpush1.msra.mxu0 0.0
        %2932 = vmatprep.subr.mxu0 0.0
        %2933 = vmatpush1.msra.mxu0 0.0
        %2934 = vmatprep.subr.mxu0 0.0
        %2935 = vmatpush1.msra.mxu0 0.0
        %2936 = vmatprep.subr.mxu0 0.0
        %2937 = vmatpush1.msra.mxu0 0.0
        %2938 = vmatprep.mubr.f32.mxu0 0.0
        %2939 = vmatmul.mubr.f32.gmra.mrb[0].mxu0 %v2860
        %v2940 = vpop.f32.mrb[0].mxu0
        %v2941 = vadd.f32 %v2857, %v2940
        %v2942 = vpop.f32.mrb[0].mxu0
        %2943 = vmatprep.mubr.f32.mxu0 0.0
        %2944 = vmatmul.mubr.f32.gmra.mrb[0].mxu0 %v2863
        %v2945 = vpop.f32.mrb[0].mxu0
        %v2946 = vadd.f32 %v2857, %v2945
        %v2947 = vpop.f32.mrb[0].mxu0
        %2948 = vmatprep.mubr.f32.mxu0 0.0
        %2949 = vmatmul.mubr.f32.gmra.mrb[0].mxu0 %v2866
        %v2950 = vpop.f32.mrb[0].mxu0
        %v2951 = vadd.f32 %v2857, %v2950
        %v2952 = vpop.f32.mrb[0].mxu0
        %2953 = vmatprep.mubr.f32.mxu0 0.0
        %2954 = vmatmul.mubr.f32.gmra.mrb[0].mxu0 %v2869
        %v2955 = vpop.f32.mrb[0].mxu0
        %v2956 = vadd.f32 %v2857, %v2955
        %v2957 = vpop.f32.mrb[0].mxu0
        %2958 = vmatprep.mubr.f32.mxu0 0.0
        %2959 = vmatmul.mubr.f32.gmra.mrb[0].mxu0 %v2872
        %v2960 = vpop.f32.mrb[0].mxu0
        %v2961 = vadd.f32 %v2857, %v2960
        %v2962 = vpop.f32.mrb[0].mxu0
        %2963 = vdwg.mxu0
        %v2964 = vadd.f32 %v622, %v2941
        %v2965 = vadd.f32 %v623, %v2946
        %v2966 = vadd.f32 %v624, %v2951
        %v2967 = vadd.f32 %v625, %v2956
        %v2968 = vadd.f32 %v626, %v2961
        %2969 = vst.msk [vmem:[%s608] sm:$0xff] %vm1401, %v2964
        %2970 = vst.msk [vmem:[%s608 + $0x8] sm:$0xff] %vm1401, %v2965
        %2971 = vst.msk [vmem:[%s608 + $0x10] sm:$0xff] %vm1401, %v2966
        %2972 = vst.msk [vmem:[%s608 + $0x18] sm:$0xff] %vm1401, %v2967
        %2973 = vst.msk [vmem:[%s608 + $0x20] sm:$0xff] %vm1401, %v2968
        %2974 = vmatprep.subr.mxu0 0.0
        %2975 = vmatpush1.msra.mxu0 %v2964
        %2976 = vmatprep.subr.mxu0 0.0
        %2977 = vmatpush1.msra.mxu0 %v2965
        %2978 = vmatprep.subr.mxu0 0.0
        %2979 = vmatpush1.msra.mxu0 %v2966
        %2980 = vmatprep.subr.mxu0 0.0
        %2981 = vmatpush1.msra.mxu0 %v2967
        %2982 = vmatprep.subr.mxu0 0.0
        %2983 = vmatpush1.msra.mxu0 %v2968
        %2984 = vmatprep.subr.mxu0 0.0
        %2985 = vmatpush1.msra.mxu0 0.0
        %2986 = vmatprep.subr.mxu0 0.0
        %2987 = vmatpush1.msra.mxu0 0.0
        %2988 = vmatprep.subr.mxu0 0.0
        %2989 = vmatpush1.msra.mxu0 0.0
        %2990 = vmatprep.subr.mxu0 0.0
        %2991 = vmatpush1.msra.mxu0 0.0
        %2992 = vmatprep.subr.mxu0 0.0
        %2993 = vmatpush1.msra.mxu0 0.0
        %2994 = vmatprep.subr.mxu0 0.0
        %2995 = vmatpush1.msra.mxu0 0.0
        %2996 = vmatprep.subr.mxu0 0.0
        %2997 = vmatpush1.msra.mxu0 0.0
        %2998 = vmatprep.subr.mxu0 0.0
        %2999 = vmatpush1.msra.mxu0 0.0
        %3000 = vmatprep.subr.mxu0 0.0
        %3001 = vmatpush1.msra.mxu0 0.0
        %3002 = vmatprep.subr.mxu0 0.0
        %3003 = vmatpush1.msra.mxu0 0.0
        %3004 = vmatprep.subr.mxu0 0.0
        %3005 = vmatpush1.msra.mxu0 0.0
        %3006 = vmatprep.subr.mxu0 0.0
        %3007 = vmatpush1.msra.mxu0 0.0
        %3008 = vmatprep.subr.mxu0 0.0
        %3009 = vmatpush1.msra.mxu0 0.0
        %3010 = vmatprep.subr.mxu0 0.0
        %3011 = vmatpush1.msra.mxu0 0.0
        %3012 = vmatprep.subr.mxu0 0.0
        %3013 = vmatpush1.msra.mxu0 0.0
        %3014 = vmatprep.subr.mxu0 0.0
        %3015 = vmatpush1.msra.mxu0 0.0
        %3016 = vmatprep.subr.mxu0 0.0
        %3017 = vmatpush1.msra.mxu0 0.0
        %3018 = vmatprep.subr.mxu0 0.0
        %3019 = vmatpush1.msra.mxu0 0.0
        %3020 = vmatprep.subr.mxu0 0.0
        %3021 = vmatpush1.msra.mxu0 0.0
        %3022 = vmatprep.subr.mxu0 0.0
        %3023 = vmatpush1.msra.mxu0 0.0
        %3024 = vmatprep.subr.mxu0 0.0
        %3025 = vmatpush1.msra.mxu0 0.0
        %3026 = vmatprep.subr.mxu0 0.0
        %3027 = vmatpush1.msra.mxu0 0.0
        %3028 = vmatprep.subr.mxu0 0.0
        %3029 = vmatpush1.msra.mxu0 0.0
        %3030 = vmatprep.subr.mxu0 0.0
        %3031 = vmatpush1.msra.mxu0 0.0
        %3032 = vmatprep.subr.mxu0 0.0
        %3033 = vmatpush1.msra.mxu0 0.0
        %3034 = vmatprep.subr.mxu0 0.0
        %3035 = vmatpush1.msra.mxu0 0.0
        %3036 = vmatprep.subr.mxu0 0.0
        %3037 = vmatpush1.msra.mxu0 0.0
        %3038 = vmatprep.mubr.f32.mxu0 0.0
        %3039 = vmatmul.mubr.f32.gmra.mrb[0].mxu0 %v952
        %v3040 = vpop.f32.mrb[0].mxu0
        %v3041 = vadd.f32 0.0, %v3040
        %v3042 = vpop.f32.mrb[0].mxu0
        %3043 = vmatprep.mubr.f32.mxu0 0.0
        %3044 = vmatmul.mubr.f32.gmra.mrb[0].mxu0 %v955
        %v3045 = vpop.f32.mrb[0].mxu0
        %v3046 = vadd.f32 0.0, %v3045
        %v3047 = vpop.f32.mrb[0].mxu0
        %3048 = vmatprep.mubr.f32.mxu0 0.0
        %3049 = vmatmul.mubr.f32.gmra.mrb[0].mxu0 %v958
        %v3050 = vpop.f32.mrb[0].mxu0
        %v3051 = vadd.f32 0.0, %v3050
        %v3052 = vpop.f32.mrb[0].mxu0
        %3053 = vmatprep.mubr.f32.mxu0 0.0
        %3054 = vmatmul.mubr.f32.gmra.mrb[0].mxu0 %v961
        %v3055 = vpop.f32.mrb[0].mxu0
        %v3056 = vadd.f32 0.0, %v3055
        %v3057 = vpop.f32.mrb[0].mxu0
        %3058 = vmatprep.mubr.f32.mxu0 0.0
        %3059 = vmatmul.mubr.f32.gmra.mrb[0].mxu0 %v964
        %v3060 = vpop.f32.mrb[0].mxu0
        %v3061 = vadd.f32 0.0, %v3060
        %v3062 = vpop.f32.mrb[0].mxu0
        %3063 = vmatprep.mubr.f32.mxu0 0.0
        %3064 = vmatmul.mubr.f32.gmra.mrb[0].mxu0 %v967
        %v3065 = vpop.f32.mrb[0].mxu0
        %v3066 = vadd.f32 0.0, %v3065
        %v3067 = vpop.f32.mrb[0].mxu0
        %3068 = vmatprep.mubr.f32.mxu0 0.0
        %3069 = vmatmul.mubr.f32.gmra.mrb[0].mxu0 %v970
        %v3070 = vpop.f32.mrb[0].mxu0
        %v3071 = vadd.f32 0.0, %v3070
        %v3072 = vpop.f32.mrb[0].mxu0
        %3073 = vmatprep.mubr.f32.mxu0 0.0
        %3074 = vmatmul.mubr.f32.gmra.mrb[0].mxu0 %v973
        %v3075 = vpop.f32.mrb[0].mxu0
        %v3076 = vadd.f32 0.0, %v3075
        %v3077 = vpop.f32.mrb[0].mxu0
        %3078 = vmatprep.mubr.f32.mxu0 0.0
        %3079 = vmatmul.mubr.f32.gmra.mrb[0].mxu0 %v976
        %v3080 = vpop.f32.mrb[0].mxu0
        %v3081 = vadd.f32 0.0, %v3080
        %v3082 = vpop.f32.mrb[0].mxu0
        %3083 = vmatprep.mubr.f32.mxu0 0.0
        %3084 = vmatmul.mubr.f32.gmra.mrb[0].mxu0 %v979
        %v3085 = vpop.f32.mrb[0].mxu0
        %v3086 = vadd.f32 0.0, %v3085
        %v3087 = vpop.f32.mrb[0].mxu0
        %3088 = vmatprep.mubr.f32.mxu0 0.0
        %3089 = vmatmul.mubr.f32.gmra.mrb[0].mxu0 %v982
        %v3090 = vpop.f32.mrb[0].mxu0
        %v3091 = vadd.f32 0.0, %v3090
        %v3092 = vpop.f32.mrb[0].mxu0
        %3093 = vmatprep.mubr.f32.mxu0 0.0
        %3094 = vmatmul.mubr.f32.gmra.mrb[0].mxu0 %v985
        %v3095 = vpop.f32.mrb[0].mxu0
        %v3096 = vadd.f32 0.0, %v3095
        %v3097 = vpop.f32.mrb[0].mxu0
        %3098 = vmatprep.mubr.f32.mxu0 0.0
        %3099 = vmatmul.mubr.f32.gmra.mrb[0].mxu0 %v988
        %v3100 = vpop.f32.mrb[0].mxu0
        %v3101 = vadd.f32 0.0, %v3100
        %v3102 = vpop.f32.mrb[0].mxu0
        %3103 = vmatprep.mubr.f32.mxu0 0.0
        %3104 = vmatmul.mubr.f32.gmra.mrb[0].mxu0 %v991
        %v3105 = vpop.f32.mrb[0].mxu0
        %v3106 = vadd.f32 0.0, %v3105
        %v3107 = vpop.f32.mrb[0].mxu0
        %3108 = vmatprep.mubr.f32.mxu0 0.0
        %3109 = vmatmul.mubr.f32.gmra.mrb[0].mxu0 %v994
        %v3110 = vpop.f32.mrb[0].mxu0
        %v3111 = vadd.f32 0.0, %v3110
        %v3112 = vpop.f32.mrb[0].mxu0
        %3113 = vmatprep.mubr.f32.mxu0 0.0
        %3114 = vmatmul.mubr.f32.gmra.mrb[0].mxu0 %v997
        %v3115 = vpop.f32.mrb[0].mxu0
        %v3116 = vadd.f32 0.0, %v3115
        %v3117 = vpop.f32.mrb[0].mxu0
        %3118 = vmatprep.mubr.f32.mxu0 0.0
        %3119 = vmatmul.mubr.f32.gmra.mrb[0].mxu0 %v1000
        %v3120 = vpop.f32.mrb[0].mxu0
        %v3121 = vadd.f32 0.0, %v3120
        %v3122 = vpop.f32.mrb[0].mxu0
        %3123 = vmatprep.mubr.f32.mxu0 0.0
        %3124 = vmatmul.mubr.f32.gmra.mrb[0].mxu0 %v1003
        %v3125 = vpop.f32.mrb[0].mxu0
        %v3126 = vadd.f32 0.0, %v3125
        %v3127 = vpop.f32.mrb[0].mxu0
        %3128 = vmatprep.mubr.f32.mxu0 0.0
        %3129 = vmatmul.mubr.f32.gmra.mrb[0].mxu0 %v1006
        %v3130 = vpop.f32.mrb[0].mxu0
        %v3131 = vadd.f32 0.0, %v3130
        %v3132 = vpop.f32.mrb[0].mxu0
        %3133 = vmatprep.mubr.f32.mxu0 0.0
        %3134 = vmatmul.mubr.f32.gmra.mrb[0].mxu0 %v1009
        %v3135 = vpop.f32.mrb[0].mxu0
        %v3136 = vadd.f32 0.0, %v3135
        %v3137 = vpop.f32.mrb[0].mxu0
        %3138 = vdwg.mxu0
        %3139 = vmatprep.subr.mxu0 0.0
        %3140 = vmatpush1.msra.mxu0 %v2964
        %3141 = vmatprep.subr.mxu0 0.0
        %3142 = vmatpush1.msra.mxu0 %v2965
        %3143 = vmatprep.subr.mxu0 0.0
        %3144 = vmatpush1.msra.mxu0 %v2966
        %3145 = vmatprep.subr.mxu0 0.0
        %3146 = vmatpush1.msra.mxu0 %v2967
        %3147 = vmatprep.subr.mxu0 0.0
        %3148 = vmatpush1.msra.mxu0 %v2968
        %3149 = vmatprep.subr.mxu0 0.0
        %3150 = vmatpush1.msra.mxu0 0.0
        %3151 = vmatprep.subr.mxu0 0.0
        %3152 = vmatpush1.msra.mxu0 0.0
        %3153 = vmatprep.subr.mxu0 0.0
        %3154 = vmatpush1.msra.mxu0 0.0
        %3155 = vmatprep.subr.mxu0 0.0
        %3156 = vmatpush1.msra.mxu0 0.0
        %3157 = vmatprep.subr.mxu0 0.0
        %3158 = vmatpush1.msra.mxu0 0.0
        %3159 = vmatprep.subr.mxu0 0.0
        %3160 = vmatpush1.msra.mxu0 0.0
        %3161 = vmatprep.subr.mxu0 0.0
        %3162 = vmatpush1.msra.mxu0 0.0
        %3163 = vmatprep.subr.mxu0 0.0
        %3164 = vmatpush1.msra.mxu0 0.0
        %3165 = vmatprep.subr.mxu0 0.0
        %3166 = vmatpush1.msra.mxu0 0.0
        %3167 = vmatprep.subr.mxu0 0.0
        %3168 = vmatpush1.msra.mxu0 0.0
        %3169 = vmatprep.subr.mxu0 0.0
        %3170 = vmatpush1.msra.mxu0 0.0
        %3171 = vmatprep.subr.mxu0 0.0
        %3172 = vmatpush1.msra.mxu0 0.0
        %3173 = vmatprep.subr.mxu0 0.0
        %3174 = vmatpush1.msra.mxu0 0.0
        %3175 = vmatprep.subr.mxu0 0.0
        %3176 = vmatpush1.msra.mxu0 0.0
        %3177 = vmatprep.subr.mxu0 0.0
        %3178 = vmatpush1.msra.mxu0 0.0
        %3179 = vmatprep.subr.mxu0 0.0
        %3180 = vmatpush1.msra.mxu0 0.0
        %3181 = vmatprep.subr.mxu0 0.0
        %3182 = vmatpush1.msra.mxu0 0.0
        %3183 = vmatprep.subr.mxu0 0.0
        %3184 = vmatpush1.msra.mxu0 0.0
        %3185 = vmatprep.subr.mxu0 0.0
        %3186 = vmatpush1.msra.mxu0 0.0
        %3187 = vmatprep.subr.mxu0 0.0
        %3188 = vmatpush1.msra.mxu0 0.0
        %3189 = vmatprep.subr.mxu0 0.0
        %3190 = vmatpush1.msra.mxu0 0.0
        %3191 = vmatprep.subr.mxu0 0.0
        %3192 = vmatpush1.msra.mxu0 0.0
        %3193 = vmatprep.subr.mxu0 0.0
        %3194 = vmatpush1.msra.mxu0 0.0
        %3195 = vmatprep.subr.mxu0 0.0
        %3196 = vmatpush1.msra.mxu0 0.0
        %3197 = vmatprep.subr.mxu0 0.0
        %3198 = vmatpush1.msra.mxu0 0.0
        %3199 = vmatprep.subr.mxu0 0.0
        %3200 = vmatpush1.msra.mxu0 0.0
        %3201 = vmatprep.subr.mxu0 0.0
        %3202 = vmatpush1.msra.mxu0 0.0
        %3203 = vmatprep.mubr.f32.mxu0 0.0
        %3204 = vmatmul.mubr.f32.gmra.mrb[0].mxu0 %v1177
        %v3205 = vpop.f32.mrb[0].mxu0
        %v3206 = vadd.f32 0.0, %v3205
        %v3207 = vpop.f32.mrb[0].mxu0
        %3208 = vmatprep.mubr.f32.mxu0 0.0
        %3209 = vmatmul.mubr.f32.gmra.mrb[0].mxu0 %v1180
        %v3210 = vpop.f32.mrb[0].mxu0
        %v3211 = vadd.f32 0.0, %v3210
        %v3212 = vpop.f32.mrb[0].mxu0
        %3213 = vmatprep.mubr.f32.mxu0 0.0
        %3214 = vmatmul.mubr.f32.gmra.mrb[0].mxu0 %v1183
        %v3215 = vpop.f32.mrb[0].mxu0
        %v3216 = vadd.f32 0.0, %v3215
        %v3217 = vpop.f32.mrb[0].mxu0
        %3218 = vmatprep.mubr.f32.mxu0 0.0
        %3219 = vmatmul.mubr.f32.gmra.mrb[0].mxu0 %v1186
        %v3220 = vpop.f32.mrb[0].mxu0
        %v3221 = vadd.f32 0.0, %v3220
        %v3222 = vpop.f32.mrb[0].mxu0
        %3223 = vmatprep.mubr.f32.mxu0 0.0
        %3224 = vmatmul.mubr.f32.gmra.mrb[0].mxu0 %v1189
        %v3225 = vpop.f32.mrb[0].mxu0
        %v3226 = vadd.f32 0.0, %v3225
        %v3227 = vpop.f32.mrb[0].mxu0
        %3228 = vmatprep.mubr.f32.mxu0 0.0
        %3229 = vmatmul.mubr.f32.gmra.mrb[0].mxu0 %v1192
        %v3230 = vpop.f32.mrb[0].mxu0
        %v3231 = vadd.f32 0.0, %v3230
        %v3232 = vpop.f32.mrb[0].mxu0
        %3233 = vmatprep.mubr.f32.mxu0 0.0
        %3234 = vmatmul.mubr.f32.gmra.mrb[0].mxu0 %v1195
        %v3235 = vpop.f32.mrb[0].mxu0
        %v3236 = vadd.f32 0.0, %v3235
        %v3237 = vpop.f32.mrb[0].mxu0
        %3238 = vmatprep.mubr.f32.mxu0 0.0
        %3239 = vmatmul.mubr.f32.gmra.mrb[0].mxu0 %v1198
        %v3240 = vpop.f32.mrb[0].mxu0
        %v3241 = vadd.f32 0.0, %v3240
        %v3242 = vpop.f32.mrb[0].mxu0
        %3243 = vmatprep.mubr.f32.mxu0 0.0
        %3244 = vmatmul.mubr.f32.gmra.mrb[0].mxu0 %v1201
        %v3245 = vpop.f32.mrb[0].mxu0
        %v3246 = vadd.f32 0.0, %v3245
        %v3247 = vpop.f32.mrb[0].mxu0
        %3248 = vmatprep.mubr.f32.mxu0 0.0
        %3249 = vmatmul.mubr.f32.gmra.mrb[0].mxu0 %v1204
        %v3250 = vpop.f32.mrb[0].mxu0
        %v3251 = vadd.f32 0.0, %v3250
        %v3252 = vpop.f32.mrb[0].mxu0
        %3253 = vmatprep.mubr.f32.mxu0 0.0
        %3254 = vmatmul.mubr.f32.gmra.mrb[0].mxu0 %v1207
        %v3255 = vpop.f32.mrb[0].mxu0
        %v3256 = vadd.f32 0.0, %v3255
        %v3257 = vpop.f32.mrb[0].mxu0
        %3258 = vmatprep.mubr.f32.mxu0 0.0
        %3259 = vmatmul.mubr.f32.gmra.mrb[0].mxu0 %v1210
        %v3260 = vpop.f32.mrb[0].mxu0
        %v3261 = vadd.f32 0.0, %v3260
        %v3262 = vpop.f32.mrb[0].mxu0
        %3263 = vmatprep.mubr.f32.mxu0 0.0
        %3264 = vmatmul.mubr.f32.gmra.mrb[0].mxu0 %v1213
        %v3265 = vpop.f32.mrb[0].mxu0
        %v3266 = vadd.f32 0.0, %v3265
        %v3267 = vpop.f32.mrb[0].mxu0
        %3268 = vmatprep.mubr.f32.mxu0 0.0
        %3269 = vmatmul.mubr.f32.gmra.mrb[0].mxu0 %v1216
        %v3270 = vpop.f32.mrb[0].mxu0
        %v3271 = vadd.f32 0.0, %v3270
        %v3272 = vpop.f32.mrb[0].mxu0
        %3273 = vmatprep.mubr.f32.mxu0 0.0
        %3274 = vmatmul.mubr.f32.gmra.mrb[0].mxu0 %v1219
        %v3275 = vpop.f32.mrb[0].mxu0
        %v3276 = vadd.f32 0.0, %v3275
        %v3277 = vpop.f32.mrb[0].mxu0
        %3278 = vmatprep.mubr.f32.mxu0 0.0
        %3279 = vmatmul.mubr.f32.gmra.mrb[0].mxu0 %v1222
        %v3280 = vpop.f32.mrb[0].mxu0
        %v3281 = vadd.f32 0.0, %v3280
        %v3282 = vpop.f32.mrb[0].mxu0
        %3283 = vmatprep.mubr.f32.mxu0 0.0
        %3284 = vmatmul.mubr.f32.gmra.mrb[0].mxu0 %v1225
        %v3285 = vpop.f32.mrb[0].mxu0
        %v3286 = vadd.f32 0.0, %v3285
        %v3287 = vpop.f32.mrb[0].mxu0
        %3288 = vmatprep.mubr.f32.mxu0 0.0
        %3289 = vmatmul.mubr.f32.gmra.mrb[0].mxu0 %v1228
        %v3290 = vpop.f32.mrb[0].mxu0
        %v3291 = vadd.f32 0.0, %v3290
        %v3292 = vpop.f32.mrb[0].mxu0
        %3293 = vmatprep.mubr.f32.mxu0 0.0
        %3294 = vmatmul.mubr.f32.gmra.mrb[0].mxu0 %v1231
        %v3295 = vpop.f32.mrb[0].mxu0
        %v3296 = vadd.f32 0.0, %v3295
        %v3297 = vpop.f32.mrb[0].mxu0
        %3298 = vmatprep.mubr.f32.mxu0 0.0
        %3299 = vmatmul.mubr.f32.gmra.mrb[0].mxu0 %v1234
        %v3300 = vpop.f32.mrb[0].mxu0
        %v3301 = vadd.f32 0.0, %v3300
        %v3302 = vpop.f32.mrb[0].mxu0
        %3303 = vdwg.mxu0
        %v3305 = vsel %vm1401, %v3206, 0
        %v3308 = vsel %vm1401, %v3211, 0
        %v3311 = vsel %vm1401, %v3216, 0
        %v3314 = vsel %vm1401, %v3221, 0
        %v3317 = vsel %vm1401, %v3226, 0
        %v3320 = vsel %vm1401, %v3231, 0
        %v3323 = vsel %vm1401, %v3236, 0
        %v3326 = vsel %vm1401, %v3241, 0
        %v3329 = vsel %vm1401, %v3246, 0
        %v3332 = vsel %vm1401, %v3251, 0
        %v3335 = vsel %vm1401, %v3256, 0
        %v3338 = vsel %vm1401, %v3261, 0
        %v3341 = vsel %vm1401, %v3266, 0
        %v3344 = vsel %vm1401, %v3271, 0
        %v3347 = vsel %vm1401, %v3276, 0
        %v3350 = vsel %vm1401, %v3281, 0
        %v3353 = vsel %vm1401, %v3286, 0
        %v3356 = vsel %vm1401, %v3291, 0
        %v3359 = vsel %vm1401, %v3296, 0
        %v3362 = vsel %vm1401, %v3301, 0
        %3364 = vmatprep.subr.mxu0 0.0
        %3365 = vmatpush1.msra.mxu0 %v1464
        %3366 = vmatprep.subr.mxu0 0.0
        %3367 = vmatpush1.msra.mxu0 0.0
        %3368 = vmatprep.subr.mxu0 0.0
        %3369 = vmatpush1.msra.mxu0 0.0
        %3370 = vmatprep.subr.mxu0 0.0
        %3371 = vmatpush1.msra.mxu0 0.0
        %3372 = vmatprep.subr.mxu0 0.0
        %3373 = vmatpush1.msra.mxu0 0.0
        %3374 = vmatprep.subr.mxu0 0.0
        %3375 = vmatpush1.msra.mxu0 0.0
        %3376 = vmatprep.subr.mxu0 0.0
        %3377 = vmatpush1.msra.mxu0 0.0
        %3378 = vmatprep.subr.mxu0 0.0
        %3379 = vmatpush1.msra.mxu0 0.0
        %3380 = vmatprep.subr.mxu0 0.0
        %3381 = vmatpush1.msra.mxu0 0.0
        %3382 = vmatprep.subr.mxu0 0.0
        %3383 = vmatpush1.msra.mxu0 0.0
        %3384 = vmatprep.subr.mxu0 0.0
        %3385 = vmatpush1.msra.mxu0 0.0
        %3386 = vmatprep.subr.mxu0 0.0
        %3387 = vmatpush1.msra.mxu0 0.0
        %3388 = vmatprep.subr.mxu0 0.0
        %3389 = vmatpush1.msra.mxu0 0.0
        %3390 = vmatprep.subr.mxu0 0.0
        %3391 = vmatpush1.msra.mxu0 0.0
        %3392 = vmatprep.subr.mxu0 0.0
        %3393 = vmatpush1.msra.mxu0 0.0
        %3394 = vmatprep.subr.mxu0 0.0
        %3395 = vmatpush1.msra.mxu0 0.0
        %3396 = vmatprep.subr.mxu0 0.0
        %3397 = vmatpush1.msra.mxu0 0.0
        %3398 = vmatprep.subr.mxu0 0.0
        %3399 = vmatpush1.msra.mxu0 0.0
        %3400 = vmatprep.subr.mxu0 0.0
        %3401 = vmatpush1.msra.mxu0 0.0
        %3402 = vmatprep.subr.mxu0 0.0
        %3403 = vmatpush1.msra.mxu0 0.0
        %3404 = vmatprep.subr.mxu0 0.0
        %3405 = vmatpush1.msra.mxu0 0.0
        %3406 = vmatprep.subr.mxu0 0.0
        %3407 = vmatpush1.msra.mxu0 0.0
        %3408 = vmatprep.subr.mxu0 0.0
        %3409 = vmatpush1.msra.mxu0 0.0
        %3410 = vmatprep.subr.mxu0 0.0
        %3411 = vmatpush1.msra.mxu0 0.0
        %3412 = vmatprep.subr.mxu0 0.0
        %3413 = vmatpush1.msra.mxu0 0.0
        %3414 = vmatprep.subr.mxu0 0.0
        %3415 = vmatpush1.msra.mxu0 0.0
        %3416 = vmatprep.subr.mxu0 0.0
        %3417 = vmatpush1.msra.mxu0 0.0
        %3418 = vmatprep.subr.mxu0 0.0
        %3419 = vmatpush1.msra.mxu0 0.0
        %3420 = vmatprep.subr.mxu0 0.0
        %3421 = vmatpush1.msra.mxu0 0.0
        %3422 = vmatprep.subr.mxu0 0.0
        %3423 = vmatpush1.msra.mxu0 0.0
        %3424 = vmatprep.subr.mxu0 0.0
        %3425 = vmatpush1.msra.mxu0 0.0
        %3426 = vmatprep.subr.mxu0 0.0
        %3427 = vmatpush1.msra.mxu0 0.0
        %3428 = vmatprep.mubr.f32.mxu0 0.0
        %3429 = vmatmul.mubr.f32.gmra.mrb[0].mxu0 %v3305
        %v3430 = vpop.f32.mrb[0].mxu0
        %v3431 = vadd.f32 0.0, %v3430
        %v3432 = vpop.f32.mrb[0].mxu0
        %3433 = vmatprep.mubr.f32.mxu0 0.0
        %3434 = vmatmul.mubr.f32.gmra.mrb[0].mxu0 %v3308
        %v3435 = vpop.f32.mrb[0].mxu0
        %v3436 = vadd.f32 0.0, %v3435
        %v3437 = vpop.f32.mrb[0].mxu0
        %3438 = vmatprep.mubr.f32.mxu0 0.0
        %3439 = vmatmul.mubr.f32.gmra.mrb[0].mxu0 %v3311
        %v3440 = vpop.f32.mrb[0].mxu0
        %v3441 = vadd.f32 0.0, %v3440
        %v3442 = vpop.f32.mrb[0].mxu0
        %3443 = vmatprep.mubr.f32.mxu0 0.0
        %3444 = vmatmul.mubr.f32.gmra.mrb[0].mxu0 %v3314
        %v3445 = vpop.f32.mrb[0].mxu0
        %v3446 = vadd.f32 0.0, %v3445
        %v3447 = vpop.f32.mrb[0].mxu0
        %3448 = vmatprep.mubr.f32.mxu0 0.0
        %3449 = vmatmul.mubr.f32.gmra.mrb[0].mxu0 %v3317
        %v3450 = vpop.f32.mrb[0].mxu0
        %v3451 = vadd.f32 0.0, %v3450
        %v3452 = vpop.f32.mrb[0].mxu0
        %3453 = vmatprep.mubr.f32.mxu0 0.0
        %3454 = vmatmul.mubr.f32.gmra.mrb[0].mxu0 %v3320
        %v3455 = vpop.f32.mrb[0].mxu0
        %v3456 = vadd.f32 0.0, %v3455
        %v3457 = vpop.f32.mrb[0].mxu0
        %3458 = vmatprep.mubr.f32.mxu0 0.0
        %3459 = vmatmul.mubr.f32.gmra.mrb[0].mxu0 %v3323
        %v3460 = vpop.f32.mrb[0].mxu0
        %v3461 = vadd.f32 0.0, %v3460
        %v3462 = vpop.f32.mrb[0].mxu0
        %3463 = vmatprep.mubr.f32.mxu0 0.0
        %3464 = vmatmul.mubr.f32.gmra.mrb[0].mxu0 %v3326
        %v3465 = vpop.f32.mrb[0].mxu0
        %v3466 = vadd.f32 0.0, %v3465
        %v3467 = vpop.f32.mrb[0].mxu0
        %3468 = vmatprep.mubr.f32.mxu0 0.0
        %3469 = vmatmul.mubr.f32.gmra.mrb[0].mxu0 %v3329
        %v3470 = vpop.f32.mrb[0].mxu0
        %v3471 = vadd.f32 0.0, %v3470
        %v3472 = vpop.f32.mrb[0].mxu0
        %3473 = vmatprep.mubr.f32.mxu0 0.0
        %3474 = vmatmul.mubr.f32.gmra.mrb[0].mxu0 %v3332
        %v3475 = vpop.f32.mrb[0].mxu0
        %v3476 = vadd.f32 0.0, %v3475
        %v3477 = vpop.f32.mrb[0].mxu0
        %3478 = vmatprep.mubr.f32.mxu0 0.0
        %3479 = vmatmul.mubr.f32.gmra.mrb[0].mxu0 %v3335
        %v3480 = vpop.f32.mrb[0].mxu0
        %v3481 = vadd.f32 0.0, %v3480
        %v3482 = vpop.f32.mrb[0].mxu0
        %3483 = vmatprep.mubr.f32.mxu0 0.0
        %3484 = vmatmul.mubr.f32.gmra.mrb[0].mxu0 %v3338
        %v3485 = vpop.f32.mrb[0].mxu0
        %v3486 = vadd.f32 0.0, %v3485
        %v3487 = vpop.f32.mrb[0].mxu0
        %3488 = vmatprep.mubr.f32.mxu0 0.0
        %3489 = vmatmul.mubr.f32.gmra.mrb[0].mxu0 %v3341
        %v3490 = vpop.f32.mrb[0].mxu0
        %v3491 = vadd.f32 0.0, %v3490
        %v3492 = vpop.f32.mrb[0].mxu0
        %3493 = vmatprep.mubr.f32.mxu0 0.0
        %3494 = vmatmul.mubr.f32.gmra.mrb[0].mxu0 %v3344
        %v3495 = vpop.f32.mrb[0].mxu0
        %v3496 = vadd.f32 0.0, %v3495
        %v3497 = vpop.f32.mrb[0].mxu0
        %3498 = vmatprep.mubr.f32.mxu0 0.0
        %3499 = vmatmul.mubr.f32.gmra.mrb[0].mxu0 %v3347
        %v3500 = vpop.f32.mrb[0].mxu0
        %v3501 = vadd.f32 0.0, %v3500
        %v3502 = vpop.f32.mrb[0].mxu0
        %3503 = vmatprep.mubr.f32.mxu0 0.0
        %3504 = vmatmul.mubr.f32.gmra.mrb[0].mxu0 %v3350
        %v3505 = vpop.f32.mrb[0].mxu0
        %v3506 = vadd.f32 0.0, %v3505
        %v3507 = vpop.f32.mrb[0].mxu0
        %3508 = vmatprep.mubr.f32.mxu0 0.0
        %3509 = vmatmul.mubr.f32.gmra.mrb[0].mxu0 %v3353
        %v3510 = vpop.f32.mrb[0].mxu0
        %v3511 = vadd.f32 0.0, %v3510
        %v3512 = vpop.f32.mrb[0].mxu0
        %3513 = vmatprep.mubr.f32.mxu0 0.0
        %3514 = vmatmul.mubr.f32.gmra.mrb[0].mxu0 %v3356
        %v3515 = vpop.f32.mrb[0].mxu0
        %v3516 = vadd.f32 0.0, %v3515
        %v3517 = vpop.f32.mrb[0].mxu0
        %3518 = vmatprep.mubr.f32.mxu0 0.0
        %3519 = vmatmul.mubr.f32.gmra.mrb[0].mxu0 %v3359
        %v3520 = vpop.f32.mrb[0].mxu0
        %v3521 = vadd.f32 0.0, %v3520
        %v3522 = vpop.f32.mrb[0].mxu0
        %3523 = vmatprep.mubr.f32.mxu0 0.0
        %3524 = vmatmul.mubr.f32.gmra.mrb[0].mxu0 %v3362
        %v3525 = vpop.f32.mrb[0].mxu0
        %v3526 = vadd.f32 0.0, %v3525
        %v3527 = vpop.f32.mrb[0].mxu0
        %3528 = vdwg.mxu0
        %v3530 = vsel %vm1401, %v3041, 0
        %v3533 = vsel %vm1401, %v3046, 0
        %v3536 = vsel %vm1401, %v3051, 0
        %v3539 = vsel %vm1401, %v3056, 0
        %v3542 = vsel %vm1401, %v3061, 0
        %v3545 = vsel %vm1401, %v3066, 0
        %v3548 = vsel %vm1401, %v3071, 0
        %v3551 = vsel %vm1401, %v3076, 0
        %v3554 = vsel %vm1401, %v3081, 0
        %v3557 = vsel %vm1401, %v3086, 0
        %v3560 = vsel %vm1401, %v3091, 0
        %v3563 = vsel %vm1401, %v3096, 0
        %v3566 = vsel %vm1401, %v3101, 0
        %v3569 = vsel %vm1401, %v3106, 0
        %v3572 = vsel %vm1401, %v3111, 0
        %v3575 = vsel %vm1401, %v3116, 0
        %v3578 = vsel %vm1401, %v3121, 0
        %v3581 = vsel %vm1401, %v3126, 0
        %v3584 = vsel %vm1401, %v3131, 0
        %v3587 = vsel %vm1401, %v3136, 0
        %3589 = vmatprep.subr.mxu0 0.0
        %3590 = vmatpush1.msra.mxu0 %v1692
        %3591 = vmatprep.subr.mxu0 0.0
        %3592 = vmatpush1.msra.mxu0 0.0
        %3593 = vmatprep.subr.mxu0 0.0
        %3594 = vmatpush1.msra.mxu0 0.0
        %3595 = vmatprep.subr.mxu0 0.0
        %3596 = vmatpush1.msra.mxu0 0.0
        %3597 = vmatprep.subr.mxu0 0.0
        %3598 = vmatpush1.msra.mxu0 0.0
        %3599 = vmatprep.subr.mxu0 0.0
        %3600 = vmatpush1.msra.mxu0 0.0
        %3601 = vmatprep.subr.mxu0 0.0
        %3602 = vmatpush1.msra.mxu0 0.0
        %3603 = vmatprep.subr.mxu0 0.0
        %3604 = vmatpush1.msra.mxu0 0.0
        %3605 = vmatprep.subr.mxu0 0.0
        %3606 = vmatpush1.msra.mxu0 0.0
        %3607 = vmatprep.subr.mxu0 0.0
        %3608 = vmatpush1.msra.mxu0 0.0
        %3609 = vmatprep.subr.mxu0 0.0
        %3610 = vmatpush1.msra.mxu0 0.0
        %3611 = vmatprep.subr.mxu0 0.0
        %3612 = vmatpush1.msra.mxu0 0.0
        %3613 = vmatprep.subr.mxu0 0.0
        %3614 = vmatpush1.msra.mxu0 0.0
        %3615 = vmatprep.subr.mxu0 0.0
        %3616 = vmatpush1.msra.mxu0 0.0
        %3617 = vmatprep.subr.mxu0 0.0
        %3618 = vmatpush1.msra.mxu0 0.0
        %3619 = vmatprep.subr.mxu0 0.0
        %3620 = vmatpush1.msra.mxu0 0.0
        %3621 = vmatprep.subr.mxu0 0.0
        %3622 = vmatpush1.msra.mxu0 0.0
        %3623 = vmatprep.subr.mxu0 0.0
        %3624 = vmatpush1.msra.mxu0 0.0
        %3625 = vmatprep.subr.mxu0 0.0
        %3626 = vmatpush1.msra.mxu0 0.0
        %3627 = vmatprep.subr.mxu0 0.0
        %3628 = vmatpush1.msra.mxu0 0.0
        %3629 = vmatprep.subr.mxu0 0.0
        %3630 = vmatpush1.msra.mxu0 0.0
        %3631 = vmatprep.subr.mxu0 0.0
        %3632 = vmatpush1.msra.mxu0 0.0
        %3633 = vmatprep.subr.mxu0 0.0
        %3634 = vmatpush1.msra.mxu0 0.0
        %3635 = vmatprep.subr.mxu0 0.0
        %3636 = vmatpush1.msra.mxu0 0.0
        %3637 = vmatprep.subr.mxu0 0.0
        %3638 = vmatpush1.msra.mxu0 0.0
        %3639 = vmatprep.subr.mxu0 0.0
        %3640 = vmatpush1.msra.mxu0 0.0
        %3641 = vmatprep.subr.mxu0 0.0
        %3642 = vmatpush1.msra.mxu0 0.0
        %3643 = vmatprep.subr.mxu0 0.0
        %3644 = vmatpush1.msra.mxu0 0.0
        %3645 = vmatprep.subr.mxu0 0.0
        %3646 = vmatpush1.msra.mxu0 0.0
        %3647 = vmatprep.subr.mxu0 0.0
        %3648 = vmatpush1.msra.mxu0 0.0
        %3649 = vmatprep.subr.mxu0 0.0
        %3650 = vmatpush1.msra.mxu0 0.0
        %3651 = vmatprep.subr.mxu0 0.0
        %3652 = vmatpush1.msra.mxu0 0.0
        %3653 = vmatprep.mubr.f32.mxu0 0.0
        %3654 = vmatmul.mubr.f32.gmra.mrb[0].mxu0 %v3530
        %v3655 = vpop.f32.mrb[0].mxu0
        %v3656 = vadd.f32 %v3431, %v3655
        %v3657 = vpop.f32.mrb[0].mxu0
        %3658 = vmatprep.mubr.f32.mxu0 0.0
        %3659 = vmatmul.mubr.f32.gmra.mrb[0].mxu0 %v3533
        %v3660 = vpop.f32.mrb[0].mxu0
        %v3661 = vadd.f32 %v3436, %v3660
        %v3662 = vpop.f32.mrb[0].mxu0
        %3663 = vmatprep.mubr.f32.mxu0 0.0
        %3664 = vmatmul.mubr.f32.gmra.mrb[0].mxu0 %v3536
        %v3665 = vpop.f32.mrb[0].mxu0
        %v3666 = vadd.f32 %v3441, %v3665
        %v3667 = vpop.f32.mrb[0].mxu0
        %3668 = vmatprep.mubr.f32.mxu0 0.0
        %3669 = vmatmul.mubr.f32.gmra.mrb[0].mxu0 %v3539
        %v3670 = vpop.f32.mrb[0].mxu0
        %v3671 = vadd.f32 %v3446, %v3670
        %v3672 = vpop.f32.mrb[0].mxu0
        %3673 = vmatprep.mubr.f32.mxu0 0.0
        %3674 = vmatmul.mubr.f32.gmra.mrb[0].mxu0 %v3542
        %v3675 = vpop.f32.mrb[0].mxu0
        %v3676 = vadd.f32 %v3451, %v3675
        %v3677 = vpop.f32.mrb[0].mxu0
        %3678 = vmatprep.mubr.f32.mxu0 0.0
        %3679 = vmatmul.mubr.f32.gmra.mrb[0].mxu0 %v3545
        %v3680 = vpop.f32.mrb[0].mxu0
        %v3681 = vadd.f32 %v3456, %v3680
        %v3682 = vpop.f32.mrb[0].mxu0
        %3683 = vmatprep.mubr.f32.mxu0 0.0
        %3684 = vmatmul.mubr.f32.gmra.mrb[0].mxu0 %v3548
        %v3685 = vpop.f32.mrb[0].mxu0
        %v3686 = vadd.f32 %v3461, %v3685
        %v3687 = vpop.f32.mrb[0].mxu0
        %3688 = vmatprep.mubr.f32.mxu0 0.0
        %3689 = vmatmul.mubr.f32.gmra.mrb[0].mxu0 %v3551
        %v3690 = vpop.f32.mrb[0].mxu0
        %v3691 = vadd.f32 %v3466, %v3690
        %v3692 = vpop.f32.mrb[0].mxu0
        %3693 = vmatprep.mubr.f32.mxu0 0.0
        %3694 = vmatmul.mubr.f32.gmra.mrb[0].mxu0 %v3554
        %v3695 = vpop.f32.mrb[0].mxu0
        %v3696 = vadd.f32 %v3471, %v3695
        %v3697 = vpop.f32.mrb[0].mxu0
        %3698 = vmatprep.mubr.f32.mxu0 0.0
        %3699 = vmatmul.mubr.f32.gmra.mrb[0].mxu0 %v3557
        %v3700 = vpop.f32.mrb[0].mxu0
        %v3701 = vadd.f32 %v3476, %v3700
        %v3702 = vpop.f32.mrb[0].mxu0
        %3703 = vmatprep.mubr.f32.mxu0 0.0
        %3704 = vmatmul.mubr.f32.gmra.mrb[0].mxu0 %v3560
        %v3705 = vpop.f32.mrb[0].mxu0
        %v3706 = vadd.f32 %v3481, %v3705
        %v3707 = vpop.f32.mrb[0].mxu0
        %3708 = vmatprep.mubr.f32.mxu0 0.0
        %3709 = vmatmul.mubr.f32.gmra.mrb[0].mxu0 %v3563
        %v3710 = vpop.f32.mrb[0].mxu0
        %v3711 = vadd.f32 %v3486, %v3710
        %v3712 = vpop.f32.mrb[0].mxu0
        %3713 = vmatprep.mubr.f32.mxu0 0.0
        %3714 = vmatmul.mubr.f32.gmra.mrb[0].mxu0 %v3566
        %v3715 = vpop.f32.mrb[0].mxu0
        %v3716 = vadd.f32 %v3491, %v3715
        %v3717 = vpop.f32.mrb[0].mxu0
        %3718 = vmatprep.mubr.f32.mxu0 0.0
        %3719 = vmatmul.mubr.f32.gmra.mrb[0].mxu0 %v3569
        %v3720 = vpop.f32.mrb[0].mxu0
        %v3721 = vadd.f32 %v3496, %v3720
        %v3722 = vpop.f32.mrb[0].mxu0
        %3723 = vmatprep.mubr.f32.mxu0 0.0
        %3724 = vmatmul.mubr.f32.gmra.mrb[0].mxu0 %v3572
        %v3725 = vpop.f32.mrb[0].mxu0
        %v3726 = vadd.f32 %v3501, %v3725
        %v3727 = vpop.f32.mrb[0].mxu0
        %3728 = vmatprep.mubr.f32.mxu0 0.0
        %3729 = vmatmul.mubr.f32.gmra.mrb[0].mxu0 %v3575
        %v3730 = vpop.f32.mrb[0].mxu0
        %v3731 = vadd.f32 %v3506, %v3730
        %v3732 = vpop.f32.mrb[0].mxu0
        %3733 = vmatprep.mubr.f32.mxu0 0.0
        %3734 = vmatmul.mubr.f32.gmra.mrb[0].mxu0 %v3578
        %v3735 = vpop.f32.mrb[0].mxu0
        %v3736 = vadd.f32 %v3511, %v3735
        %v3737 = vpop.f32.mrb[0].mxu0
        %3738 = vmatprep.mubr.f32.mxu0 0.0
        %3739 = vmatmul.mubr.f32.gmra.mrb[0].mxu0 %v3581
        %v3740 = vpop.f32.mrb[0].mxu0
        %v3741 = vadd.f32 %v3516, %v3740
        %v3742 = vpop.f32.mrb[0].mxu0
        %3743 = vmatprep.mubr.f32.mxu0 0.0
        %3744 = vmatmul.mubr.f32.gmra.mrb[0].mxu0 %v3584
        %v3745 = vpop.f32.mrb[0].mxu0
        %v3746 = vadd.f32 %v3521, %v3745
        %v3747 = vpop.f32.mrb[0].mxu0
        %3748 = vmatprep.mubr.f32.mxu0 0.0
        %3749 = vmatmul.mubr.f32.gmra.mrb[0].mxu0 %v3587
        %v3750 = vpop.f32.mrb[0].mxu0
        %v3751 = vadd.f32 %v3526, %v3750
        %v3752 = vpop.f32.mrb[0].mxu0
        %3753 = vdwg.mxu0
        %v3754 = vadd.f32 %v3656, %v1863
        %v3755 = vadd.f32 %v3661, %v1863
        %v3756 = vadd.f32 %v3666, %v1863
        %v3757 = vadd.f32 %v3671, %v1863
        %v3758 = vadd.f32 %v3676, %v1863
        %v3759 = vadd.f32 %v3681, %v1863
        %v3760 = vadd.f32 %v3686, %v1863
        %v3761 = vadd.f32 %v3691, %v1863
        %v3762 = vadd.f32 %v3696, %v1863
        %v3763 = vadd.f32 %v3701, %v1863
        %v3764 = vadd.f32 %v3706, %v1863
        %v3765 = vadd.f32 %v3711, %v1863
        %v3766 = vadd.f32 %v3716, %v1863
        %v3767 = vadd.f32 %v3721, %v1863
        %v3768 = vadd.f32 %v3726, %v1863
        %v3769 = vadd.f32 %v3731, %v1863
        %v3770 = vadd.f32 %v3736, %v1863
        %v3771 = vadd.f32 %v3741, %v1863
        %v3772 = vadd.f32 %v3746, %v1863
        %v3773 = vadd.f32 %v3751, %v1863
        %v3774 = vmax.f32 %v3754, 0.0
        %v3775 = vmax.f32 %v3755, 0.0
        %v3776 = vmax.f32 %v3756, 0.0
        %v3777 = vmax.f32 %v3757, 0.0
        %v3778 = vmax.f32 %v3758, 0.0
        %v3779 = vmax.f32 %v3759, 0.0
        %v3780 = vmax.f32 %v3760, 0.0
        %v3781 = vmax.f32 %v3761, 0.0
        %v3782 = vmax.f32 %v3762, 0.0
        %v3783 = vmax.f32 %v3763, 0.0
        %v3784 = vmax.f32 %v3764, 0.0
        %v3785 = vmax.f32 %v3765, 0.0
        %v3786 = vmax.f32 %v3766, 0.0
        %v3787 = vmax.f32 %v3767, 0.0
        %v3788 = vmax.f32 %v3768, 0.0
        %v3789 = vmax.f32 %v3769, 0.0
        %v3790 = vmax.f32 %v3770, 0.0
        %v3791 = vmax.f32 %v3771, 0.0
        %v3792 = vmax.f32 %v3772, 0.0
        %v3793 = vmax.f32 %v3773, 0.0
        %v3795 = vsel %vm1911, %v3774, 0
        %v3798 = vsel %vm1911, %v3775, 0
        %v3801 = vsel %vm1911, %v3776, 0
        %v3804 = vsel %vm1911, %v3777, 0
        %v3807 = vsel %vm1911, %v3778, 0
        %v3810 = vsel %vm1911, %v3779, 0
        %v3813 = vsel %vm1911, %v3780, 0
        %v3816 = vsel %vm1911, %v3781, 0
        %v3819 = vsel %vm1911, %v3782, 0
        %v3822 = vsel %vm1911, %v3783, 0
        %v3825 = vsel %vm1911, %v3784, 0
        %v3828 = vsel %vm1911, %v3785, 0
        %v3831 = vsel %vm1911, %v3786, 0
        %v3834 = vsel %vm1911, %v3787, 0
        %v3837 = vsel %vm1911, %v3788, 0
        %v3840 = vsel %vm1911, %v3789, 0
        %v3843 = vsel %vm1911, %v3790, 0
        %v3846 = vsel %vm1911, %v3791, 0
        %v3849 = vsel %vm1911, %v3792, 0
        %v3852 = vsel %vm1911, %v3793, 0
        %3854 = vmatprep.subr.mxu0 0.0
        %3855 = vmatpush1.msra.mxu0 %v680
        %3856 = vmatprep.subr.mxu0 0.0
        %3857 = vmatpush1.msra.mxu0 %v681
        %3858 = vmatprep.subr.mxu0 0.0
        %3859 = vmatpush1.msra.mxu0 %v682
        %3860 = vmatprep.subr.mxu0 0.0
        %3861 = vmatpush1.msra.mxu0 %v683
        %3862 = vmatprep.subr.mxu0 0.0
        %3863 = vmatpush1.msra.mxu0 0.0
        %3864 = vmatprep.subr.mxu0 0.0
        %3865 = vmatpush1.msra.mxu0 0.0
        %3866 = vmatprep.subr.mxu0 0.0
        %3867 = vmatpush1.msra.mxu0 0.0
        %3868 = vmatprep.subr.mxu0 0.0
        %3869 = vmatpush1.msra.mxu0 0.0
        %3870 = vmatprep.subr.mxu0 0.0
        %3871 = vmatpush1.msra.mxu0 0.0
        %3872 = vmatprep.subr.mxu0 0.0
        %3873 = vmatpush1.msra.mxu0 0.0
        %3874 = vmatprep.subr.mxu0 0.0
        %3875 = vmatpush1.msra.mxu0 0.0
        %3876 = vmatprep.subr.mxu0 0.0
        %3877 = vmatpush1.msra.mxu0 0.0
        %3878 = vmatprep.subr.mxu0 0.0
        %3879 = vmatpush1.msra.mxu0 0.0
        %3880 = vmatprep.subr.mxu0 0.0
        %3881 = vmatpush1.msra.mxu0 0.0
        %3882 = vmatprep.subr.mxu0 0.0
        %3883 = vmatpush1.msra.mxu0 0.0
        %3884 = vmatprep.subr.mxu0 0.0
        %3885 = vmatpush1.msra.mxu0 0.0
        %3886 = vmatprep.subr.mxu0 0.0
        %3887 = vmatpush1.msra.mxu0 0.0
        %3888 = vmatprep.subr.mxu0 0.0
        %3889 = vmatpush1.msra.mxu0 0.0
        %3890 = vmatprep.subr.mxu0 0.0
        %3891 = vmatpush1.msra.mxu0 0.0
        %3892 = vmatprep.subr.mxu0 0.0
        %3893 = vmatpush1.msra.mxu0 0.0
        %3894 = vmatprep.subr.mxu0 0.0
        %3895 = vmatpush1.msra.mxu0 0.0
        %3896 = vmatprep.subr.mxu0 0.0
        %3897 = vmatpush1.msra.mxu0 0.0
        %3898 = vmatprep.subr.mxu0 0.0
        %3899 = vmatpush1.msra.mxu0 0.0
        %3900 = vmatprep.subr.mxu0 0.0
        %3901 = vmatpush1.msra.mxu0 0.0
        %3902 = vmatprep.subr.mxu0 0.0
        %3903 = vmatpush1.msra.mxu0 0.0
        %3904 = vmatprep.subr.mxu0 0.0
        %3905 = vmatpush1.msra.mxu0 0.0
        %3906 = vmatprep.subr.mxu0 0.0
        %3907 = vmatpush1.msra.mxu0 0.0
        %3908 = vmatprep.subr.mxu0 0.0
        %3909 = vmatpush1.msra.mxu0 0.0
        %3910 = vmatprep.subr.mxu0 0.0
        %3911 = vmatpush1.msra.mxu0 0.0
        %3912 = vmatprep.subr.mxu0 0.0
        %3913 = vmatpush1.msra.mxu0 0.0
        %3914 = vmatprep.subr.mxu0 0.0
        %3915 = vmatpush1.msra.mxu0 0.0
        %3916 = vmatprep.subr.mxu0 0.0
        %3917 = vmatpush1.msra.mxu0 0.0
        %3918 = vmatprep.mubr.f32.mxu0 0.0
        %3919 = vmatmul.mubr.f32.gmra.mrb[0].mxu0 %v3795
        %v3920 = vpop.f32.mrb[0].mxu0
        %v3921 = vadd.f32 %v1909, %v3920
        %v3922 = vpop.f32.mrb[0].mxu0
        %3923 = vmatprep.mubr.f32.mxu0 0.0
        %3924 = vmatmul.mubr.f32.gmra.mrb[0].mxu0 %v3798
        %v3925 = vpop.f32.mrb[0].mxu0
        %v3926 = vadd.f32 %v1909, %v3925
        %v3927 = vpop.f32.mrb[0].mxu0
        %3928 = vmatprep.mubr.f32.mxu0 0.0
        %3929 = vmatmul.mubr.f32.gmra.mrb[0].mxu0 %v3801
        %v3930 = vpop.f32.mrb[0].mxu0
        %v3931 = vadd.f32 %v1909, %v3930
        %v3932 = vpop.f32.mrb[0].mxu0
        %3933 = vmatprep.mubr.f32.mxu0 0.0
        %3934 = vmatmul.mubr.f32.gmra.mrb[0].mxu0 %v3804
        %v3935 = vpop.f32.mrb[0].mxu0
        %v3936 = vadd.f32 %v1909, %v3935
        %v3937 = vpop.f32.mrb[0].mxu0
        %3938 = vmatprep.mubr.f32.mxu0 0.0
        %3939 = vmatmul.mubr.f32.gmra.mrb[0].mxu0 %v3807
        %v3940 = vpop.f32.mrb[0].mxu0
        %v3941 = vadd.f32 %v1909, %v3940
        %v3942 = vpop.f32.mrb[0].mxu0
        %3943 = vmatprep.mubr.f32.mxu0 0.0
        %3944 = vmatmul.mubr.f32.gmra.mrb[0].mxu0 %v3810
        %v3945 = vpop.f32.mrb[0].mxu0
        %v3946 = vadd.f32 %v1909, %v3945
        %v3947 = vpop.f32.mrb[0].mxu0
        %3948 = vmatprep.mubr.f32.mxu0 0.0
        %3949 = vmatmul.mubr.f32.gmra.mrb[0].mxu0 %v3813
        %v3950 = vpop.f32.mrb[0].mxu0
        %v3951 = vadd.f32 %v1909, %v3950
        %v3952 = vpop.f32.mrb[0].mxu0
        %3953 = vmatprep.mubr.f32.mxu0 0.0
        %3954 = vmatmul.mubr.f32.gmra.mrb[0].mxu0 %v3816
        %v3955 = vpop.f32.mrb[0].mxu0
        %v3956 = vadd.f32 %v1909, %v3955
        %v3957 = vpop.f32.mrb[0].mxu0
        %3958 = vmatprep.mubr.f32.mxu0 0.0
        %3959 = vmatmul.mubr.f32.gmra.mrb[0].mxu0 %v3819
        %v3960 = vpop.f32.mrb[0].mxu0
        %v3961 = vadd.f32 %v1909, %v3960
        %v3962 = vpop.f32.mrb[0].mxu0
        %3963 = vmatprep.mubr.f32.mxu0 0.0
        %3964 = vmatmul.mubr.f32.gmra.mrb[0].mxu0 %v3822
        %v3965 = vpop.f32.mrb[0].mxu0
        %v3966 = vadd.f32 %v1909, %v3965
        %v3967 = vpop.f32.mrb[0].mxu0
        %3968 = vmatprep.mubr.f32.mxu0 0.0
        %3969 = vmatmul.mubr.f32.gmra.mrb[0].mxu0 %v3825
        %v3970 = vpop.f32.mrb[0].mxu0
        %v3971 = vadd.f32 %v1909, %v3970
        %v3972 = vpop.f32.mrb[0].mxu0
        %3973 = vmatprep.mubr.f32.mxu0 0.0
        %3974 = vmatmul.mubr.f32.gmra.mrb[0].mxu0 %v3828
        %v3975 = vpop.f32.mrb[0].mxu0
        %v3976 = vadd.f32 %v1909, %v3975
        %v3977 = vpop.f32.mrb[0].mxu0
        %3978 = vmatprep.mubr.f32.mxu0 0.0
        %3979 = vmatmul.mubr.f32.gmra.mrb[0].mxu0 %v3831
        %v3980 = vpop.f32.mrb[0].mxu0
        %v3981 = vadd.f32 %v1909, %v3980
        %v3982 = vpop.f32.mrb[0].mxu0
        %3983 = vmatprep.mubr.f32.mxu0 0.0
        %3984 = vmatmul.mubr.f32.gmra.mrb[0].mxu0 %v3834
        %v3985 = vpop.f32.mrb[0].mxu0
        %v3986 = vadd.f32 %v1909, %v3985
        %v3987 = vpop.f32.mrb[0].mxu0
        %3988 = vmatprep.mubr.f32.mxu0 0.0
        %3989 = vmatmul.mubr.f32.gmra.mrb[0].mxu0 %v3837
        %v3990 = vpop.f32.mrb[0].mxu0
        %v3991 = vadd.f32 %v1909, %v3990
        %v3992 = vpop.f32.mrb[0].mxu0
        %3993 = vmatprep.mubr.f32.mxu0 0.0
        %3994 = vmatmul.mubr.f32.gmra.mrb[0].mxu0 %v3840
        %v3995 = vpop.f32.mrb[0].mxu0
        %v3996 = vadd.f32 %v1909, %v3995
        %v3997 = vpop.f32.mrb[0].mxu0
        %3998 = vmatprep.mubr.f32.mxu0 0.0
        %3999 = vmatmul.mubr.f32.gmra.mrb[0].mxu0 %v3843
        %v4000 = vpop.f32.mrb[0].mxu0
        %v4001 = vadd.f32 %v1909, %v4000
        %v4002 = vpop.f32.mrb[0].mxu0
        %4003 = vmatprep.mubr.f32.mxu0 0.0
        %4004 = vmatmul.mubr.f32.gmra.mrb[0].mxu0 %v3846
        %v4005 = vpop.f32.mrb[0].mxu0
        %v4006 = vadd.f32 %v1909, %v4005
        %v4007 = vpop.f32.mrb[0].mxu0
        %4008 = vmatprep.mubr.f32.mxu0 0.0
        %4009 = vmatmul.mubr.f32.gmra.mrb[0].mxu0 %v3849
        %v4010 = vpop.f32.mrb[0].mxu0
        %v4011 = vadd.f32 %v1909, %v4010
        %v4012 = vpop.f32.mrb[0].mxu0
        %4013 = vmatprep.mubr.f32.mxu0 0.0
        %4014 = vmatmul.mubr.f32.gmra.mrb[0].mxu0 %v3852
        %v4015 = vpop.f32.mrb[0].mxu0
        %v4016 = vadd.f32 %v1909, %v4015
        %v4017 = vpop.f32.mrb[0].mxu0
        %4018 = vdwg.mxu0
        %v4019 = vmax.f32 %v3921, 0.0
        %v4020 = vmax.f32 %v3926, 0.0
        %v4021 = vmax.f32 %v3931, 0.0
        %v4022 = vmax.f32 %v3936, 0.0
        %v4023 = vmax.f32 %v3941, 0.0
        %v4024 = vmax.f32 %v3946, 0.0
        %v4025 = vmax.f32 %v3951, 0.0
        %v4026 = vmax.f32 %v3956, 0.0
        %v4027 = vmax.f32 %v3961, 0.0
        %v4028 = vmax.f32 %v3966, 0.0
        %v4029 = vmax.f32 %v3971, 0.0
        %v4030 = vmax.f32 %v3976, 0.0
        %v4031 = vmax.f32 %v3981, 0.0
        %v4032 = vmax.f32 %v3986, 0.0
        %v4033 = vmax.f32 %v3991, 0.0
        %v4034 = vmax.f32 %v3996, 0.0
        %v4035 = vmax.f32 %v4001, 0.0
        %v4036 = vmax.f32 %v4006, 0.0
        %v4037 = vmax.f32 %v4011, 0.0
        %v4038 = vmax.f32 %v4016, 0.0
        %v4039 = vmul.f32 %v4019, %v852
        %v4040 = vmul.f32 %v4020, %v857
        %v4041 = vmul.f32 %v4021, %v862
        %v4042 = vmul.f32 %v4022, %v867
        %v4043 = vmul.f32 %v4023, %v872
        %v4044 = vmul.f32 %v4024, %v877
        %v4045 = vmul.f32 %v4025, %v882
        %v4046 = vmul.f32 %v4026, %v887
        %v4047 = vmul.f32 %v4027, %v892
        %v4048 = vmul.f32 %v4028, %v897
        %v4049 = vmul.f32 %v4029, %v902
        %v4050 = vmul.f32 %v4030, %v907
        %v4051 = vmul.f32 %v4031, %v912
        %v4052 = vmul.f32 %v4032, %v917
        %v4053 = vmul.f32 %v4033, %v922
        %v4054 = vmul.f32 %v4034, %v927
        %v4055 = vmul.f32 %v4035, %v932
        %v4056 = vmul.f32 %v4036, %v937
        %v4057 = vmul.f32 %v4037, %v942
        %v4058 = vmul.f32 %v4038, %v947
        %v4060 = vsel %vm1911, %v4039, 0
        %v4063 = vsel %vm1911, %v4040, 0
        %v4066 = vsel %vm1911, %v4041, 0
        %v4069 = vsel %vm1911, %v4042, 0
        %v4072 = vsel %vm1911, %v4043, 0
        %v4075 = vsel %vm1911, %v4044, 0
        %v4078 = vsel %vm1911, %v4045, 0
        %v4081 = vsel %vm1911, %v4046, 0
        %v4084 = vsel %vm1911, %v4047, 0
        %v4087 = vsel %vm1911, %v4048, 0
        %v4090 = vsel %vm1911, %v4049, 0
        %v4093 = vsel %vm1911, %v4050, 0
        %v4096 = vsel %vm1911, %v4051, 0
        %v4099 = vsel %vm1911, %v4052, 0
        %v4102 = vsel %vm1911, %v4053, 0
        %v4105 = vsel %vm1911, %v4054, 0
        %v4108 = vsel %vm1911, %v4055, 0
        %v4111 = vsel %vm1911, %v4056, 0
        %v4114 = vsel %vm1911, %v4057, 0
        %v4117 = vsel %vm1911, %v4058, 0
        %4119 = vmatprep.subr.mxu0 0.0
        %4120 = vmatpush1.msra.mxu0 %v695
        %4121 = vmatprep.subr.mxu0 0.0
        %4122 = vmatpush1.msra.mxu0 %v696
        %4123 = vmatprep.subr.mxu0 0.0
        %4124 = vmatpush1.msra.mxu0 %v697
        %4125 = vmatprep.subr.mxu0 0.0
        %4126 = vmatpush1.msra.mxu0 %v698
        %4127 = vmatprep.subr.mxu0 0.0
        %4128 = vmatpush1.msra.mxu0 0.0
        %4129 = vmatprep.subr.mxu0 0.0
        %4130 = vmatpush1.msra.mxu0 0.0
        %4131 = vmatprep.subr.mxu0 0.0
        %4132 = vmatpush1.msra.mxu0 0.0
        %4133 = vmatprep.subr.mxu0 0.0
        %4134 = vmatpush1.msra.mxu0 0.0
        %4135 = vmatprep.subr.mxu0 0.0
        %4136 = vmatpush1.msra.mxu0 0.0
        %4137 = vmatprep.subr.mxu0 0.0
        %4138 = vmatpush1.msra.mxu0 0.0
        %4139 = vmatprep.subr.mxu0 0.0
        %4140 = vmatpush1.msra.mxu0 0.0
        %4141 = vmatprep.subr.mxu0 0.0
        %4142 = vmatpush1.msra.mxu0 0.0
        %4143 = vmatprep.subr.mxu0 0.0
        %4144 = vmatpush1.msra.mxu0 0.0
        %4145 = vmatprep.subr.mxu0 0.0
        %4146 = vmatpush1.msra.mxu0 0.0
        %4147 = vmatprep.subr.mxu0 0.0
        %4148 = vmatpush1.msra.mxu0 0.0
        %4149 = vmatprep.subr.mxu0 0.0
        %4150 = vmatpush1.msra.mxu0 0.0
        %4151 = vmatprep.subr.mxu0 0.0
        %4152 = vmatpush1.msra.mxu0 0.0
        %4153 = vmatprep.subr.mxu0 0.0
        %4154 = vmatpush1.msra.mxu0 0.0
        %4155 = vmatprep.subr.mxu0 0.0
        %4156 = vmatpush1.msra.mxu0 0.0
        %4157 = vmatprep.subr.mxu0 0.0
        %4158 = vmatpush1.msra.mxu0 0.0
        %4159 = vmatprep.subr.mxu0 0.0
        %4160 = vmatpush1.msra.mxu0 0.0
        %4161 = vmatprep.subr.mxu0 0.0
        %4162 = vmatpush1.msra.mxu0 0.0
        %4163 = vmatprep.subr.mxu0 0.0
        %4164 = vmatpush1.msra.mxu0 0.0
        %4165 = vmatprep.subr.mxu0 0.0
        %4166 = vmatpush1.msra.mxu0 0.0
        %4167 = vmatprep.subr.mxu0 0.0
        %4168 = vmatpush1.msra.mxu0 0.0
        %4169 = vmatprep.subr.mxu0 0.0
        %4170 = vmatpush1.msra.mxu0 0.0
        %4171 = vmatprep.subr.mxu0 0.0
        %4172 = vmatpush1.msra.mxu0 0.0
        %4173 = vmatprep.subr.mxu0 0.0
        %4174 = vmatpush1.msra.mxu0 0.0
        %4175 = vmatprep.subr.mxu0 0.0
        %4176 = vmatpush1.msra.mxu0 0.0
        %4177 = vmatprep.subr.mxu0 0.0
        %4178 = vmatpush1.msra.mxu0 0.0
        %4179 = vmatprep.subr.mxu0 0.0
        %4180 = vmatpush1.msra.mxu0 0.0
        %4181 = vmatprep.subr.mxu0 0.0
        %4182 = vmatpush1.msra.mxu0 0.0
        %4183 = vmatprep.mubr.f32.mxu0 0.0
        %4184 = vmatmul.mubr.f32.gmra.mrb[0].mxu0 %v4060
        %v4185 = vpop.f32.mrb[0].mxu0
        %v4186 = vadd.f32 0.0, %v4185
        %v4187 = vpop.f32.mrb[0].mxu0
        %4188 = vmatprep.mubr.f32.mxu0 0.0
        %4189 = vmatmul.mubr.f32.gmra.mrb[0].mxu0 %v4063
        %v4190 = vpop.f32.mrb[0].mxu0
        %v4191 = vadd.f32 0.0, %v4190
        %v4192 = vpop.f32.mrb[0].mxu0
        %4193 = vmatprep.mubr.f32.mxu0 0.0
        %4194 = vmatmul.mubr.f32.gmra.mrb[0].mxu0 %v4066
        %v4195 = vpop.f32.mrb[0].mxu0
        %v4196 = vadd.f32 0.0, %v4195
        %v4197 = vpop.f32.mrb[0].mxu0
        %4198 = vmatprep.mubr.f32.mxu0 0.0
        %4199 = vmatmul.mubr.f32.gmra.mrb[0].mxu0 %v4069
        %v4200 = vpop.f32.mrb[0].mxu0
        %v4201 = vadd.f32 0.0, %v4200
        %v4202 = vpop.f32.mrb[0].mxu0
        %4203 = vmatprep.mubr.f32.mxu0 0.0
        %4204 = vmatmul.mubr.f32.gmra.mrb[0].mxu0 %v4072
        %v4205 = vpop.f32.mrb[0].mxu0
        %v4206 = vadd.f32 0.0, %v4205
        %v4207 = vpop.f32.mrb[0].mxu0
        %4208 = vmatprep.mubr.f32.mxu0 0.0
        %4209 = vmatmul.mubr.f32.gmra.mrb[0].mxu0 %v4075
        %v4210 = vpop.f32.mrb[0].mxu0
        %v4211 = vadd.f32 0.0, %v4210
        %v4212 = vpop.f32.mrb[0].mxu0
        %4213 = vmatprep.mubr.f32.mxu0 0.0
        %4214 = vmatmul.mubr.f32.gmra.mrb[0].mxu0 %v4078
        %v4215 = vpop.f32.mrb[0].mxu0
        %v4216 = vadd.f32 0.0, %v4215
        %v4217 = vpop.f32.mrb[0].mxu0
        %4218 = vmatprep.mubr.f32.mxu0 0.0
        %4219 = vmatmul.mubr.f32.gmra.mrb[0].mxu0 %v4081
        %v4220 = vpop.f32.mrb[0].mxu0
        %v4221 = vadd.f32 0.0, %v4220
        %v4222 = vpop.f32.mrb[0].mxu0
        %4223 = vmatprep.mubr.f32.mxu0 0.0
        %4224 = vmatmul.mubr.f32.gmra.mrb[0].mxu0 %v4084
        %v4225 = vpop.f32.mrb[0].mxu0
        %v4226 = vadd.f32 0.0, %v4225
        %v4227 = vpop.f32.mrb[0].mxu0
        %4228 = vmatprep.mubr.f32.mxu0 0.0
        %4229 = vmatmul.mubr.f32.gmra.mrb[0].mxu0 %v4087
        %v4230 = vpop.f32.mrb[0].mxu0
        %v4231 = vadd.f32 0.0, %v4230
        %v4232 = vpop.f32.mrb[0].mxu0
        %4233 = vmatprep.mubr.f32.mxu0 0.0
        %4234 = vmatmul.mubr.f32.gmra.mrb[0].mxu0 %v4090
        %v4235 = vpop.f32.mrb[0].mxu0
        %v4236 = vadd.f32 0.0, %v4235
        %v4237 = vpop.f32.mrb[0].mxu0
        %4238 = vmatprep.mubr.f32.mxu0 0.0
        %4239 = vmatmul.mubr.f32.gmra.mrb[0].mxu0 %v4093
        %v4240 = vpop.f32.mrb[0].mxu0
        %v4241 = vadd.f32 0.0, %v4240
        %v4242 = vpop.f32.mrb[0].mxu0
        %4243 = vmatprep.mubr.f32.mxu0 0.0
        %4244 = vmatmul.mubr.f32.gmra.mrb[0].mxu0 %v4096
        %v4245 = vpop.f32.mrb[0].mxu0
        %v4246 = vadd.f32 0.0, %v4245
        %v4247 = vpop.f32.mrb[0].mxu0
        %4248 = vmatprep.mubr.f32.mxu0 0.0
        %4249 = vmatmul.mubr.f32.gmra.mrb[0].mxu0 %v4099
        %v4250 = vpop.f32.mrb[0].mxu0
        %v4251 = vadd.f32 0.0, %v4250
        %v4252 = vpop.f32.mrb[0].mxu0
        %4253 = vmatprep.mubr.f32.mxu0 0.0
        %4254 = vmatmul.mubr.f32.gmra.mrb[0].mxu0 %v4102
        %v4255 = vpop.f32.mrb[0].mxu0
        %v4256 = vadd.f32 0.0, %v4255
        %v4257 = vpop.f32.mrb[0].mxu0
        %4258 = vmatprep.mubr.f32.mxu0 0.0
        %4259 = vmatmul.mubr.f32.gmra.mrb[0].mxu0 %v4105
        %v4260 = vpop.f32.mrb[0].mxu0
        %v4261 = vadd.f32 0.0, %v4260
        %v4262 = vpop.f32.mrb[0].mxu0
        %4263 = vmatprep.mubr.f32.mxu0 0.0
        %4264 = vmatmul.mubr.f32.gmra.mrb[0].mxu0 %v4108
        %v4265 = vpop.f32.mrb[0].mxu0
        %v4266 = vadd.f32 0.0, %v4265
        %v4267 = vpop.f32.mrb[0].mxu0
        %4268 = vmatprep.mubr.f32.mxu0 0.0
        %4269 = vmatmul.mubr.f32.gmra.mrb[0].mxu0 %v4111
        %v4270 = vpop.f32.mrb[0].mxu0
        %v4271 = vadd.f32 0.0, %v4270
        %v4272 = vpop.f32.mrb[0].mxu0
        %4273 = vmatprep.mubr.f32.mxu0 0.0
        %4274 = vmatmul.mubr.f32.gmra.mrb[0].mxu0 %v4114
        %v4275 = vpop.f32.mrb[0].mxu0
        %v4276 = vadd.f32 0.0, %v4275
        %v4277 = vpop.f32.mrb[0].mxu0
        %4278 = vmatprep.mubr.f32.mxu0 0.0
        %4279 = vmatmul.mubr.f32.gmra.mrb[0].mxu0 %v4117
        %v4280 = vpop.f32.mrb[0].mxu0
        %v4281 = vadd.f32 0.0, %v4280
        %v4282 = vpop.f32.mrb[0].mxu0
        %4283 = vdwg.mxu0
        %4284 = vmatprep.subr.mxu0 0.0
        %4285 = vmatpush1.msra.mxu0 %v4186
        %4286 = vmatprep.subr.mxu0 0.0
        %4287 = vmatpush1.msra.mxu0 %v4191
        %4288 = vmatprep.subr.mxu0 0.0
        %4289 = vmatpush1.msra.mxu0 %v4196
        %4290 = vmatprep.subr.mxu0 0.0
        %4291 = vmatpush1.msra.mxu0 %v4201
        %4292 = vmatprep.subr.mxu0 0.0
        %4293 = vmatpush1.msra.mxu0 %v4206
        %4294 = vmatprep.subr.mxu0 0.0
        %4295 = vmatpush1.msra.mxu0 %v4211
        %4296 = vmatprep.subr.mxu0 0.0
        %4297 = vmatpush1.msra.mxu0 %v4216
        %4298 = vmatprep.subr.mxu0 0.0
        %4299 = vmatpush1.msra.mxu0 %v4221
        %4300 = vmatprep.subr.mxu0 0.0
        %4301 = vmatpush1.msra.mxu0 %v4226
        %4302 = vmatprep.subr.mxu0 0.0
        %4303 = vmatpush1.msra.mxu0 %v4231
        %4304 = vmatprep.subr.mxu0 0.0
        %4305 = vmatpush1.msra.mxu0 %v4236
        %4306 = vmatprep.subr.mxu0 0.0
        %4307 = vmatpush1.msra.mxu0 %v4241
        %4308 = vmatprep.subr.mxu0 0.0
        %4309 = vmatpush1.msra.mxu0 %v4246
        %4310 = vmatprep.subr.mxu0 0.0
        %4311 = vmatpush1.msra.mxu0 %v4251
        %4312 = vmatprep.subr.mxu0 0.0
        %4313 = vmatpush1.msra.mxu0 %v4256
        %4314 = vmatprep.subr.mxu0 0.0
        %4315 = vmatpush1.msra.mxu0 %v4261
        %4316 = vmatprep.subr.mxu0 0.0
        %4317 = vmatpush1.msra.mxu0 %v4266
        %4318 = vmatprep.subr.mxu0 0.0
        %4319 = vmatpush1.msra.mxu0 %v4271
        %4320 = vmatprep.subr.mxu0 0.0
        %4321 = vmatpush1.msra.mxu0 %v4276
        %4322 = vmatprep.subr.mxu0 0.0
        %4323 = vmatpush1.msra.mxu0 %v4281
        %4324 = vmatprep.subr.mxu0 0.0
        %4325 = vmatpush1.msra.mxu0 0.0
        %4326 = vmatprep.subr.mxu0 0.0
        %4327 = vmatpush1.msra.mxu0 0.0
        %4328 = vmatprep.subr.mxu0 0.0
        %4329 = vmatpush1.msra.mxu0 0.0
        %4330 = vmatprep.subr.mxu0 0.0
        %4331 = vmatpush1.msra.mxu0 0.0
        %4332 = vmatprep.subr.mxu0 0.0
        %4333 = vmatpush1.msra.mxu0 0.0
        %4334 = vmatprep.subr.mxu0 0.0
        %4335 = vmatpush1.msra.mxu0 0.0
        %4336 = vmatprep.subr.mxu0 0.0
        %4337 = vmatpush1.msra.mxu0 0.0
        %4338 = vmatprep.subr.mxu0 0.0
        %4339 = vmatpush1.msra.mxu0 0.0
        %4340 = vmatprep.subr.mxu0 0.0
        %4341 = vmatpush1.msra.mxu0 0.0
        %4342 = vmatprep.subr.mxu0 0.0
        %4343 = vmatpush1.msra.mxu0 0.0
        %4344 = vmatprep.subr.mxu0 0.0
        %4345 = vmatpush1.msra.mxu0 0.0
        %4346 = vmatprep.subr.mxu0 0.0
        %4347 = vmatpush1.msra.mxu0 0.0
        %4348 = vmatprep.mubr.f32.mxu0 %v2403
        %4349 = vmatmul.mubr.f32.gmra.mrb[0].mxu0 %v667
        %v4350 = vpop.f32.mrb[0].mxu0
        %v4351 = vadd.f32 0.0, %v4350
        %v4352 = vpop.f32.mrb[0].mxu0
        %4353 = vmatprep.mubr.f32.mxu0 %v2406
        %4354 = vmatmul.mubr.f32.gmra.mrb[0].mxu0 %v669
        %v4355 = vpop.f32.mrb[0].mxu0
        %v4356 = vadd.f32 0.0, %v4355
        %v4357 = vpop.f32.mrb[0].mxu0
        %4358 = vmatprep.mubr.f32.mxu0 %v2409
        %4359 = vmatmul.mubr.f32.gmra.mrb[0].mxu0 %v671
        %v4360 = vpop.f32.mrb[0].mxu0
        %v4361 = vadd.f32 0.0, %v4360
        %v4362 = vpop.f32.mrb[0].mxu0
        %4363 = vmatprep.mubr.f32.mxu0 %v2412
        %4364 = vmatmul.mubr.f32.gmra.mrb[0].mxu0 %v673
        %v4365 = vpop.f32.mrb[0].mxu0
        %v4366 = vadd.f32 0.0, %v4365
        %v4367 = vpop.f32.mrb[0].mxu0
        %4368 = vmatprep.mubr.f32.mxu0 %v2415
        %4369 = vmatmul.mubr.f32.gmra.mrb[0].mxu0 %v675
        %v4370 = vpop.f32.mrb[0].mxu0
        %v4371 = vadd.f32 0.0, %v4370
        %v4372 = vpop.f32.mrb[0].mxu0
        %4373 = vdwg.mxu0
        %v4375 = vsel %vm2507, %v4351, 0
        %v4378 = vsel %vm2507, %v4356, 0
        %v4381 = vsel %vm2507, %v4361, 0
        %v4384 = vsel %vm2507, %v4366, 0
        %v4387 = vsel %vm2507, %v4371, 0
        %4389 = vmatprep.subr.mxu0 0.0
        %4390 = vmatpush1.msra.mxu0 %v686
        %4391 = vmatprep.subr.mxu0 0.0
        %4392 = vmatpush1.msra.mxu0 %v687
        %4393 = vmatprep.subr.mxu0 0.0
        %4394 = vmatpush1.msra.mxu0 0.0
        %4395 = vmatprep.subr.mxu0 0.0
        %4396 = vmatpush1.msra.mxu0 0.0
        %4397 = vmatprep.subr.mxu0 0.0
        %4398 = vmatpush1.msra.mxu0 0.0
        %4399 = vmatprep.subr.mxu0 0.0
        %4400 = vmatpush1.msra.mxu0 0.0
        %4401 = vmatprep.subr.mxu0 0.0
        %4402 = vmatpush1.msra.mxu0 0.0
        %4403 = vmatprep.subr.mxu0 0.0
        %4404 = vmatpush1.msra.mxu0 0.0
        %4405 = vmatprep.subr.mxu0 0.0
        %4406 = vmatpush1.msra.mxu0 0.0
        %4407 = vmatprep.subr.mxu0 0.0
        %4408 = vmatpush1.msra.mxu0 0.0
        %4409 = vmatprep.subr.mxu0 0.0
        %4410 = vmatpush1.msra.mxu0 0.0
        %4411 = vmatprep.subr.mxu0 0.0
        %4412 = vmatpush1.msra.mxu0 0.0
        %4413 = vmatprep.subr.mxu0 0.0
        %4414 = vmatpush1.msra.mxu0 0.0
        %4415 = vmatprep.subr.mxu0 0.0
        %4416 = vmatpush1.msra.mxu0 0.0
        %4417 = vmatprep.subr.mxu0 0.0
        %4418 = vmatpush1.msra.mxu0 0.0
        %4419 = vmatprep.subr.mxu0 0.0
        %4420 = vmatpush1.msra.mxu0 0.0
        %4421 = vmatprep.subr.mxu0 0.0
        %4422 = vmatpush1.msra.mxu0 0.0
        %4423 = vmatprep.subr.mxu0 0.0
        %4424 = vmatpush1.msra.mxu0 0.0
        %4425 = vmatprep.subr.mxu0 0.0
        %4426 = vmatpush1.msra.mxu0 0.0
        %4427 = vmatprep.subr.mxu0 0.0
        %4428 = vmatpush1.msra.mxu0 0.0
        %4429 = vmatprep.subr.mxu0 0.0
        %4430 = vmatpush1.msra.mxu0 0.0
        %4431 = vmatprep.subr.mxu0 0.0
        %4432 = vmatpush1.msra.mxu0 0.0
        %4433 = vmatprep.subr.mxu0 0.0
        %4434 = vmatpush1.msra.mxu0 0.0
        %4435 = vmatprep.subr.mxu0 0.0
        %4436 = vmatpush1.msra.mxu0 0.0
        %4437 = vmatprep.subr.mxu0 0.0
        %4438 = vmatpush1.msra.mxu0 0.0
        %4439 = vmatprep.subr.mxu0 0.0
        %4440 = vmatpush1.msra.mxu0 0.0
        %4441 = vmatprep.subr.mxu0 0.0
        %4442 = vmatpush1.msra.mxu0 0.0
        %4443 = vmatprep.subr.mxu0 0.0
        %4444 = vmatpush1.msra.mxu0 0.0
        %4445 = vmatprep.subr.mxu0 0.0
        %4446 = vmatpush1.msra.mxu0 0.0
        %4447 = vmatprep.subr.mxu0 0.0
        %4448 = vmatpush1.msra.mxu0 0.0
        %4449 = vmatprep.subr.mxu0 0.0
        %4450 = vmatpush1.msra.mxu0 0.0
        %4451 = vmatprep.subr.mxu0 0.0
        %4452 = vmatpush1.msra.mxu0 0.0
        %4453 = vmatprep.mubr.f32.mxu0 0.0
        %4454 = vmatmul.mubr.f32.gmra.mrb[0].mxu0 %v4375
        %v4455 = vpop.f32.mrb[0].mxu0
        %v4456 = vadd.f32 0.0, %v4455
        %v4457 = vpop.f32.mrb[0].mxu0
        %4458 = vmatprep.mubr.f32.mxu0 0.0
        %4459 = vmatmul.mubr.f32.gmra.mrb[0].mxu0 %v4378
        %v4460 = vpop.f32.mrb[0].mxu0
        %v4461 = vadd.f32 0.0, %v4460
        %v4462 = vpop.f32.mrb[0].mxu0
        %4463 = vmatprep.mubr.f32.mxu0 0.0
        %4464 = vmatmul.mubr.f32.gmra.mrb[0].mxu0 %v4381
        %v4465 = vpop.f32.mrb[0].mxu0
        %v4466 = vadd.f32 0.0, %v4465
        %v4467 = vpop.f32.mrb[0].mxu0
        %4468 = vmatprep.mubr.f32.mxu0 0.0
        %4469 = vmatmul.mubr.f32.gmra.mrb[0].mxu0 %v4384
        %v4470 = vpop.f32.mrb[0].mxu0
        %v4471 = vadd.f32 0.0, %v4470
        %v4472 = vpop.f32.mrb[0].mxu0
        %4473 = vmatprep.mubr.f32.mxu0 0.0
        %4474 = vmatmul.mubr.f32.gmra.mrb[0].mxu0 %v4387
        %v4475 = vpop.f32.mrb[0].mxu0
        %v4476 = vadd.f32 0.0, %v4475
        %v4477 = vpop.f32.mrb[0].mxu0
        %4478 = vdwg.mxu0
        %v4480 = vsel %vm1401, %v2964, 0
        %v4483 = vsel %vm1401, %v2965, 0
        %v4486 = vsel %vm1401, %v2966, 0
        %v4489 = vsel %vm1401, %v2967, 0
        %v4492 = vsel %vm1401, %v2968, 0
        %4494 = vmatprep.subr.mxu0 0.0
        %4495 = vmatpush1.msra.mxu0 %v2629
        %4496 = vmatprep.subr.mxu0 0.0
        %4497 = vmatpush1.msra.mxu0 0.0
        %4498 = vmatprep.subr.mxu0 0.0
        %4499 = vmatpush1.msra.mxu0 0.0
        %4500 = vmatprep.subr.mxu0 0.0
        %4501 = vmatpush1.msra.mxu0 0.0
        %4502 = vmatprep.subr.mxu0 0.0
        %4503 = vmatpush1.msra.mxu0 0.0
        %4504 = vmatprep.subr.mxu0 0.0
        %4505 = vmatpush1.msra.mxu0 0.0
        %4506 = vmatprep.subr.mxu0 0.0
        %4507 = vmatpush1.msra.mxu0 0.0
        %4508 = vmatprep.subr.mxu0 0.0
        %4509 = vmatpush1.msra.mxu0 0.0
        %4510 = vmatprep.subr.mxu0 0.0
        %4511 = vmatpush1.msra.mxu0 0.0
        %4512 = vmatprep.subr.mxu0 0.0
        %4513 = vmatpush1.msra.mxu0 0.0
        %4514 = vmatprep.subr.mxu0 0.0
        %4515 = vmatpush1.msra.mxu0 0.0
        %4516 = vmatprep.subr.mxu0 0.0
        %4517 = vmatpush1.msra.mxu0 0.0
        %4518 = vmatprep.subr.mxu0 0.0
        %4519 = vmatpush1.msra.mxu0 0.0
        %4520 = vmatprep.subr.mxu0 0.0
        %4521 = vmatpush1.msra.mxu0 0.0
        %4522 = vmatprep.subr.mxu0 0.0
        %4523 = vmatpush1.msra.mxu0 0.0
        %4524 = vmatprep.subr.mxu0 0.0
        %4525 = vmatpush1.msra.mxu0 0.0
        %4526 = vmatprep.subr.mxu0 0.0
        %4527 = vmatpush1.msra.mxu0 0.0
        %4528 = vmatprep.subr.mxu0 0.0
        %4529 = vmatpush1.msra.mxu0 0.0
        %4530 = vmatprep.subr.mxu0 0.0
        %4531 = vmatpush1.msra.mxu0 0.0
        %4532 = vmatprep.subr.mxu0 0.0
        %4533 = vmatpush1.msra.mxu0 0.0
        %4534 = vmatprep.subr.mxu0 0.0
        %4535 = vmatpush1.msra.mxu0 0.0
        %4536 = vmatprep.subr.mxu0 0.0
        %4537 = vmatpush1.msra.mxu0 0.0
        %4538 = vmatprep.subr.mxu0 0.0
        %4539 = vmatpush1.msra.mxu0 0.0
        %4540 = vmatprep.subr.mxu0 0.0
        %4541 = vmatpush1.msra.mxu0 0.0
        %4542 = vmatprep.subr.mxu0 0.0
        %4543 = vmatpush1.msra.mxu0 0.0
        %4544 = vmatprep.subr.mxu0 0.0
        %4545 = vmatpush1.msra.mxu0 0.0
        %4546 = vmatprep.subr.mxu0 0.0
        %4547 = vmatpush1.msra.mxu0 0.0
        %4548 = vmatprep.subr.mxu0 0.0
        %4549 = vmatpush1.msra.mxu0 0.0
        %4550 = vmatprep.subr.mxu0 0.0
        %4551 = vmatpush1.msra.mxu0 0.0
        %4552 = vmatprep.subr.mxu0 0.0
        %4553 = vmatpush1.msra.mxu0 0.0
        %4554 = vmatprep.subr.mxu0 0.0
        %4555 = vmatpush1.msra.mxu0 0.0
        %4556 = vmatprep.subr.mxu0 0.0
        %4557 = vmatpush1.msra.mxu0 0.0
        %4558 = vmatprep.mubr.f32.mxu0 0.0
        %4559 = vmatmul.mubr.f32.gmra.mrb[0].mxu0 %v4480
        %v4560 = vpop.f32.mrb[0].mxu0
        %v4561 = vadd.f32 %v4456, %v4560
        %v4562 = vpop.f32.mrb[0].mxu0
        %4563 = vmatprep.mubr.f32.mxu0 0.0
        %4564 = vmatmul.mubr.f32.gmra.mrb[0].mxu0 %v4483
        %v4565 = vpop.f32.mrb[0].mxu0
        %v4566 = vadd.f32 %v4461, %v4565
        %v4567 = vpop.f32.mrb[0].mxu0
        %4568 = vmatprep.mubr.f32.mxu0 0.0
        %4569 = vmatmul.mubr.f32.gmra.mrb[0].mxu0 %v4486
        %v4570 = vpop.f32.mrb[0].mxu0
        %v4571 = vadd.f32 %v4466, %v4570
        %v4572 = vpop.f32.mrb[0].mxu0
        %4573 = vmatprep.mubr.f32.mxu0 0.0
        %4574 = vmatmul.mubr.f32.gmra.mrb[0].mxu0 %v4489
        %v4575 = vpop.f32.mrb[0].mxu0
        %v4576 = vadd.f32 %v4471, %v4575
        %v4577 = vpop.f32.mrb[0].mxu0
        %4578 = vmatprep.mubr.f32.mxu0 0.0
        %4579 = vmatmul.mubr.f32.gmra.mrb[0].mxu0 %v4492
        %v4580 = vpop.f32.mrb[0].mxu0
        %v4581 = vadd.f32 %v4476, %v4580
        %v4582 = vpop.f32.mrb[0].mxu0
        %4583 = vdwg.mxu0
        %v4584 = vadd.f32 %v4561, %v2725
        %v4585 = vadd.f32 %v4566, %v2725
        %v4586 = vadd.f32 %v4571, %v2725
        %v4587 = vadd.f32 %v4576, %v2725
        %v4588 = vadd.f32 %v4581, %v2725
        %v4589 = vmax.f32 %v4584, 0.0
        %v4590 = vmax.f32 %v4585, 0.0
        %v4591 = vmax.f32 %v4586, 0.0
        %v4592 = vmax.f32 %v4587, 0.0
        %v4593 = vmax.f32 %v4588, 0.0
        %v4595 = vsel %vm2507, %v4589, 0
        %v4598 = vsel %vm2507, %v4590, 0
        %v4601 = vsel %vm2507, %v4591, 0
        %v4604 = vsel %vm2507, %v4592, 0
        %v4607 = vsel %vm2507, %v4593, 0
        %4609 = vmatprep.subr.mxu0 0.0
        %4610 = vmatpush1.msra.mxu0 %v689
        %4611 = vmatprep.subr.mxu0 0.0
        %4612 = vmatpush1.msra.mxu0 %v690
        %4613 = vmatprep.subr.mxu0 0.0
        %4614 = vmatpush1.msra.mxu0 0.0
        %4615 = vmatprep.subr.mxu0 0.0
        %4616 = vmatpush1.msra.mxu0 0.0
        %4617 = vmatprep.subr.mxu0 0.0
        %4618 = vmatpush1.msra.mxu0 0.0
        %4619 = vmatprep.subr.mxu0 0.0
        %4620 = vmatpush1.msra.mxu0 0.0
        %4621 = vmatprep.subr.mxu0 0.0
        %4622 = vmatpush1.msra.mxu0 0.0
        %4623 = vmatprep.subr.mxu0 0.0
        %4624 = vmatpush1.msra.mxu0 0.0
        %4625 = vmatprep.subr.mxu0 0.0
        %4626 = vmatpush1.msra.mxu0 0.0
        %4627 = vmatprep.subr.mxu0 0.0
        %4628 = vmatpush1.msra.mxu0 0.0
        %4629 = vmatprep.subr.mxu0 0.0
        %4630 = vmatpush1.msra.mxu0 0.0
        %4631 = vmatprep.subr.mxu0 0.0
        %4632 = vmatpush1.msra.mxu0 0.0
        %4633 = vmatprep.subr.mxu0 0.0
        %4634 = vmatpush1.msra.mxu0 0.0
        %4635 = vmatprep.subr.mxu0 0.0
        %4636 = vmatpush1.msra.mxu0 0.0
        %4637 = vmatprep.subr.mxu0 0.0
        %4638 = vmatpush1.msra.mxu0 0.0
        %4639 = vmatprep.subr.mxu0 0.0
        %4640 = vmatpush1.msra.mxu0 0.0
        %4641 = vmatprep.subr.mxu0 0.0
        %4642 = vmatpush1.msra.mxu0 0.0
        %4643 = vmatprep.subr.mxu0 0.0
        %4644 = vmatpush1.msra.mxu0 0.0
        %4645 = vmatprep.subr.mxu0 0.0
        %4646 = vmatpush1.msra.mxu0 0.0
        %4647 = vmatprep.subr.mxu0 0.0
        %4648 = vmatpush1.msra.mxu0 0.0
        %4649 = vmatprep.subr.mxu0 0.0
        %4650 = vmatpush1.msra.mxu0 0.0
        %4651 = vmatprep.subr.mxu0 0.0
        %4652 = vmatpush1.msra.mxu0 0.0
        %4653 = vmatprep.subr.mxu0 0.0
        %4654 = vmatpush1.msra.mxu0 0.0
        %4655 = vmatprep.subr.mxu0 0.0
        %4656 = vmatpush1.msra.mxu0 0.0
        %4657 = vmatprep.subr.mxu0 0.0
        %4658 = vmatpush1.msra.mxu0 0.0
        %4659 = vmatprep.subr.mxu0 0.0
        %4660 = vmatpush1.msra.mxu0 0.0
        %4661 = vmatprep.subr.mxu0 0.0
        %4662 = vmatpush1.msra.mxu0 0.0
        %4663 = vmatprep.subr.mxu0 0.0
        %4664 = vmatpush1.msra.mxu0 0.0
        %4665 = vmatprep.subr.mxu0 0.0
        %4666 = vmatpush1.msra.mxu0 0.0
        %4667 = vmatprep.subr.mxu0 0.0
        %4668 = vmatpush1.msra.mxu0 0.0
        %4669 = vmatprep.subr.mxu0 0.0
        %4670 = vmatpush1.msra.mxu0 0.0
        %4671 = vmatprep.subr.mxu0 0.0
        %4672 = vmatpush1.msra.mxu0 0.0
        %4673 = vmatprep.mubr.f32.mxu0 0.0
        %4674 = vmatmul.mubr.f32.gmra.mrb[0].mxu0 %v4595
        %v4675 = vpop.f32.mrb[0].mxu0
        %v4676 = vadd.f32 %v2741, %v4675
        %v4677 = vpop.f32.mrb[0].mxu0
        %4678 = vmatprep.mubr.f32.mxu0 0.0
        %4679 = vmatmul.mubr.f32.gmra.mrb[0].mxu0 %v4598
        %v4680 = vpop.f32.mrb[0].mxu0
        %v4681 = vadd.f32 %v2741, %v4680
        %v4682 = vpop.f32.mrb[0].mxu0
        %4683 = vmatprep.mubr.f32.mxu0 0.0
        %4684 = vmatmul.mubr.f32.gmra.mrb[0].mxu0 %v4601
        %v4685 = vpop.f32.mrb[0].mxu0
        %v4686 = vadd.f32 %v2741, %v4685
        %v4687 = vpop.f32.mrb[0].mxu0
        %4688 = vmatprep.mubr.f32.mxu0 0.0
        %4689 = vmatmul.mubr.f32.gmra.mrb[0].mxu0 %v4604
        %v4690 = vpop.f32.mrb[0].mxu0
        %v4691 = vadd.f32 %v2741, %v4690
        %v4692 = vpop.f32.mrb[0].mxu0
        %4693 = vmatprep.mubr.f32.mxu0 0.0
        %4694 = vmatmul.mubr.f32.gmra.mrb[0].mxu0 %v4607
        %v4695 = vpop.f32.mrb[0].mxu0
        %v4696 = vadd.f32 %v2741, %v4695
        %v4697 = vpop.f32.mrb[0].mxu0
        %4698 = vdwg.mxu0
        %v4699 = vmax.f32 %v4676, 0.0
        %v4700 = vmax.f32 %v4681, 0.0
        %v4701 = vmax.f32 %v4686, 0.0
        %v4702 = vmax.f32 %v4691, 0.0
        %v4703 = vmax.f32 %v4696, 0.0
        %v4705 = vsel %vm2507, %v4699, 0
        %v4708 = vsel %vm2507, %v4700, 0
        %v4711 = vsel %vm2507, %v4701, 0
        %v4714 = vsel %vm2507, %v4702, 0
        %v4717 = vsel %vm2507, %v4703, 0
        %4719 = vmatprep.subr.mxu0 0.0
        %4720 = vmatpush1.msra.mxu0 %v692
        %4721 = vmatprep.subr.mxu0 0.0
        %4722 = vmatpush1.msra.mxu0 %v693
        %4723 = vmatprep.subr.mxu0 0.0
        %4724 = vmatpush1.msra.mxu0 0.0
        %4725 = vmatprep.subr.mxu0 0.0
        %4726 = vmatpush1.msra.mxu0 0.0
        %4727 = vmatprep.subr.mxu0 0.0
        %4728 = vmatpush1.msra.mxu0 0.0
        %4729 = vmatprep.subr.mxu0 0.0
        %4730 = vmatpush1.msra.mxu0 0.0
        %4731 = vmatprep.subr.mxu0 0.0
        %4732 = vmatpush1.msra.mxu0 0.0
        %4733 = vmatprep.subr.mxu0 0.0
        %4734 = vmatpush1.msra.mxu0 0.0
        %4735 = vmatprep.subr.mxu0 0.0
        %4736 = vmatpush1.msra.mxu0 0.0
        %4737 = vmatprep.subr.mxu0 0.0
        %4738 = vmatpush1.msra.mxu0 0.0
        %4739 = vmatprep.subr.mxu0 0.0
        %4740 = vmatpush1.msra.mxu0 0.0
        %4741 = vmatprep.subr.mxu0 0.0
        %4742 = vmatpush1.msra.mxu0 0.0
        %4743 = vmatprep.subr.mxu0 0.0
        %4744 = vmatpush1.msra.mxu0 0.0
        %4745 = vmatprep.subr.mxu0 0.0
        %4746 = vmatpush1.msra.mxu0 0.0
        %4747 = vmatprep.subr.mxu0 0.0
        %4748 = vmatpush1.msra.mxu0 0.0
        %4749 = vmatprep.subr.mxu0 0.0
        %4750 = vmatpush1.msra.mxu0 0.0
        %4751 = vmatprep.subr.mxu0 0.0
        %4752 = vmatpush1.msra.mxu0 0.0
        %4753 = vmatprep.subr.mxu0 0.0
        %4754 = vmatpush1.msra.mxu0 0.0
        %4755 = vmatprep.subr.mxu0 0.0
        %4756 = vmatpush1.msra.mxu0 0.0
        %4757 = vmatprep.subr.mxu0 0.0
        %4758 = vmatpush1.msra.mxu0 0.0
        %4759 = vmatprep.subr.mxu0 0.0
        %4760 = vmatpush1.msra.mxu0 0.0
        %4761 = vmatprep.subr.mxu0 0.0
        %4762 = vmatpush1.msra.mxu0 0.0
        %4763 = vmatprep.subr.mxu0 0.0
        %4764 = vmatpush1.msra.mxu0 0.0
        %4765 = vmatprep.subr.mxu0 0.0
        %4766 = vmatpush1.msra.mxu0 0.0
        %4767 = vmatprep.subr.mxu0 0.0
        %4768 = vmatpush1.msra.mxu0 0.0
        %4769 = vmatprep.subr.mxu0 0.0
        %4770 = vmatpush1.msra.mxu0 0.0
        %4771 = vmatprep.subr.mxu0 0.0
        %4772 = vmatpush1.msra.mxu0 0.0
        %4773 = vmatprep.subr.mxu0 0.0
        %4774 = vmatpush1.msra.mxu0 0.0
        %4775 = vmatprep.subr.mxu0 0.0
        %4776 = vmatpush1.msra.mxu0 0.0
        %4777 = vmatprep.subr.mxu0 0.0
        %4778 = vmatpush1.msra.mxu0 0.0
        %4779 = vmatprep.subr.mxu0 0.0
        %4780 = vmatpush1.msra.mxu0 0.0
        %4781 = vmatprep.subr.mxu0 0.0
        %4782 = vmatpush1.msra.mxu0 0.0
        %4783 = vmatprep.mubr.f32.mxu0 0.0
        %4784 = vmatmul.mubr.f32.gmra.mrb[0].mxu0 %v4705
        %v4785 = vpop.f32.mrb[0].mxu0
        %v4786 = vadd.f32 %v2857, %v4785
        %v4787 = vpop.f32.mrb[0].mxu0
        %4788 = vmatprep.mubr.f32.mxu0 0.0
        %4789 = vmatmul.mubr.f32.gmra.mrb[0].mxu0 %v4708
        %v4790 = vpop.f32.mrb[0].mxu0
        %v4791 = vadd.f32 %v2857, %v4790
        %v4792 = vpop.f32.mrb[0].mxu0
        %4793 = vmatprep.mubr.f32.mxu0 0.0
        %4794 = vmatmul.mubr.f32.gmra.mrb[0].mxu0 %v4711
        %v4795 = vpop.f32.mrb[0].mxu0
        %v4796 = vadd.f32 %v2857, %v4795
        %v4797 = vpop.f32.mrb[0].mxu0
        %4798 = vmatprep.mubr.f32.mxu0 0.0
        %4799 = vmatmul.mubr.f32.gmra.mrb[0].mxu0 %v4714
        %v4800 = vpop.f32.mrb[0].mxu0
        %v4801 = vadd.f32 %v2857, %v4800
        %v4802 = vpop.f32.mrb[0].mxu0
        %4803 = vmatprep.mubr.f32.mxu0 0.0
        %4804 = vmatmul.mubr.f32.gmra.mrb[0].mxu0 %v4717
        %v4805 = vpop.f32.mrb[0].mxu0
        %v4806 = vadd.f32 %v2857, %v4805
        %v4807 = vpop.f32.mrb[0].mxu0
        %4808 = vdwg.mxu0
        %v4809 = vadd.f32 %v2964, %v4786
        %v4810 = vadd.f32 %v2965, %v4791
        %v4811 = vadd.f32 %v2966, %v4796
        %v4812 = vadd.f32 %v2967, %v4801
        %v4813 = vadd.f32 %v2968, %v4806
        %s4814 = scalar_lea.vmem %s608, 40 [#allocation2]
        %4815 = vst.msk [vmem:[%s4814] sm:$0xff] %vm1401, %v4809
        %4816 = vst.msk [vmem:[%s4814 + $0x8] sm:$0xff] %vm1401, %v4810
        %4817 = vst.msk [vmem:[%s4814 + $0x10] sm:$0xff] %vm1401, %v4811
        %4818 = vst.msk [vmem:[%s4814 + $0x18] sm:$0xff] %vm1401, %v4812
        %4819 = vst.msk [vmem:[%s4814 + $0x20] sm:$0xff] %vm1401, %v4813
        %s4820 = sand.u32 %s447, 1
        %s4821 = sand.u32 %s447, 1
        %s4822 = smul.addr %s4821, 80
        %s4823 = scalar_lea.vmem [#allocation2], %s4822
        // Predicated region
        $region97: #{mlp_decoder_forward.1} parent=95 // pred_check
          %p4824 = pneg %p457
        $region98: #{mlp_decoder_forward.1} parent=95 // pred_check_branch
          %4826 = sbr.rel (%p4824) target = $region100
        $region99: #{mlp_decoder_forward.1} parent=95 // pred_region
          %s4827 = smul.u32 5, %s30
          %s4828 = smul.addr %s4827, 8
          %s4829 = scalar_lea.vmem %s19, %s4828
          // Predicated region
          $region101: #{mlp_decoder_forward.1} parent=99 // pred_check
            _
          $region102: #{mlp_decoder_forward.1} parent=99 // pred_check_branch
            %4831 = sbr.rel (0) target = $region104
          $region103: #{mlp_decoder_forward.1} parent=99 // pred_region
            // Predicated region
            $region105: #{mlp_decoder_forward.1} parent=103 // pred_check
              _
            $region106: #{mlp_decoder_forward.1} parent=103 // pred_check_branch
              %4833 = sbr.rel (0) target = $region108
            $region107: #{mlp_decoder_forward.1} parent=103 // pred_region
              // Predicated region
              $region120: #{mlp_decoder_forward.1} parent=107 // pred_check
                _
              $region121: #{mlp_decoder_forward.1} parent=107 // pred_check_branch
                %4866 = sbr.rel (0) target = $region123
              $region122: #{mlp_decoder_forward.1} parent=107 // pred_region
                loop: start=0, step=1, limit=1
                $region124: #{mlp_decoder_forward.1} parent=122 // loop_pre_header
                  _
                $region125: #{mlp_decoder_forward.1} parent=122 // loop_header
                  %s4868 = sphi 0, %s4872
                  %p4869 = scmp.ge.s32.totalorder %s4868, 1
                  %s4873 = sphi %s4823, %s4823
                  %s4874 = sphi %s4829, %s4829
                $region126: #{mlp_decoder_forward.1} parent=122 // loop_header_branch
                  %4871 = sbr.rel (%p4869) target = $region130
                $region127: #{mlp_decoder_forward.1} parent=122 // loop_body
                  %v4875 = vld [vmem:[%s4873] sm:$0xff]
                  %4876 = vst [vmem:[%s4874] sm:$0xff] %v4875
                  %v4877 = vld [vmem:[%s4873 + $0x8] sm:$0xff]
                  %4878 = vst [vmem:[%s4874 + $0x8] sm:$0xff] %v4877
                  %v4879 = vld [vmem:[%s4873 + $0x10] sm:$0xff]
                  %4880 = vst [vmem:[%s4874 + $0x10] sm:$0xff] %v4879
                  %v4881 = vld [vmem:[%s4873 + $0x18] sm:$0xff]
                  %4882 = vst [vmem:[%s4874 + $0x18] sm:$0xff] %v4881
                  %v4883 = vld [vmem:[%s4873 + $0x20] sm:$0xff]
                  %4884 = vst [vmem:[%s4874 + $0x20] sm:$0xff] %v4883
                  %v4885 = vld [vmem:[%s4873 + $0x28] sm:$0xff]
                  %4886 = vst [vmem:[%s4874 + $0x50] sm:$0xff] %v4885
                  %v4887 = vld [vmem:[%s4873 + $0x30] sm:$0xff]
                  %4888 = vst [vmem:[%s4874 + $0x58] sm:$0xff] %v4887
                  %v4889 = vld [vmem:[%s4873 + $0x38] sm:$0xff]
                  %4890 = vst [vmem:[%s4874 + $0x60] sm:$0xff] %v4889
                  %v4891 = vld [vmem:[%s4873 + $0x40] sm:$0xff]
                  %4892 = vst [vmem:[%s4874 + $0x68] sm:$0xff] %v4891
                  %v4893 = vld [vmem:[%s4873 + $0x48] sm:$0xff]
                  %4894 = vst [vmem:[%s4874 + $0x70] sm:$0xff] %v4893
                $region128: #{mlp_decoder_forward.1} parent=122 // loop_footer
                  %s4872 = sadd.s32 1, %s4868
                $region129: #{mlp_decoder_forward.1} parent=122 // loop_footer_branch
                  %4867 = sbr.rel target = $region125
                $region130: #{mlp_decoder_forward.1} parent=122 // loop_exit
                  _
              $region123: #{mlp_decoder_forward.1} parent=107 // pred_fallthru
                _
              // Predicated region
              $region131: #{mlp_decoder_forward.1} parent=107 // pred_check
                _
              $region132: #{mlp_decoder_forward.1} parent=107 // pred_check_branch
                %4896 = sbr.rel target = $region134
              $region133: #{mlp_decoder_forward.1} parent=107 // pred_region
                _
              $region134: #{mlp_decoder_forward.1} parent=107 // pred_fallthru
                _
            $region108: #{mlp_decoder_forward.1} parent=103 // pred_fallthru
              _
            // Predicated region
            $region109: #{mlp_decoder_forward.1} parent=103 // pred_check
              _
            $region110: #{mlp_decoder_forward.1} parent=103 // pred_check_branch
              %4835 = sbr.rel target = $region112
            $region111: #{mlp_decoder_forward.1} parent=103 // pred_region
              loop: start=0, step=1, limit=1
              $region113: #{mlp_decoder_forward.1} parent=111 // loop_pre_header
                _
              $region114: #{mlp_decoder_forward.1} parent=111 // loop_header
                %s4838 = sphi 0, %s4842
                %p4839 = scmp.ge.s32.totalorder %s4838, 1
                %s4843 = sphi %s4823, %s4823
                %s4844 = sphi %s4829, %s4829
              $region115: #{mlp_decoder_forward.1} parent=111 // loop_header_branch
                %4841 = sbr.rel (%p4839) target = $region119
              $region116: #{mlp_decoder_forward.1} parent=111 // loop_body
                %v4845 = vld [vmem:[%s4843] sm:$0xff]
                %4846 = vst [vmem:[%s4844] sm:$0xff] %v4845
                %v4847 = vld [vmem:[%s4843 + $0x8] sm:$0xff]
                %4848 = vst [vmem:[%s4844 + $0x8] sm:$0xff] %v4847
                %v4849 = vld [vmem:[%s4843 + $0x10] sm:$0xff]
                %4850 = vst [vmem:[%s4844 + $0x10] sm:$0xff] %v4849
                %v4851 = vld [vmem:[%s4843 + $0x18] sm:$0xff]
                %4852 = vst [vmem:[%s4844 + $0x18] sm:$0xff] %v4851
                %v4853 = vld [vmem:[%s4843 + $0x20] sm:$0xff]
                %4854 = vst [vmem:[%s4844 + $0x20] sm:$0xff] %v4853
                %v4855 = vld [vmem:[%s4843 + $0x28] sm:$0xff]
                %4856 = vst [vmem:[%s4844 + $0x50] sm:$0xff] %v4855
                %v4857 = vld [vmem:[%s4843 + $0x30] sm:$0xff]
                %4858 = vst [vmem:[%s4844 + $0x58] sm:$0xff] %v4857
                %v4859 = vld [vmem:[%s4843 + $0x38] sm:$0xff]
                %4860 = vst [vmem:[%s4844 + $0x60] sm:$0xff] %v4859
                %v4861 = vld [vmem:[%s4843 + $0x40] sm:$0xff]
                %4862 = vst [vmem:[%s4844 + $0x68] sm:$0xff] %v4861
                %v4863 = vld [vmem:[%s4843 + $0x48] sm:$0xff]
                %4864 = vst [vmem:[%s4844 + $0x70] sm:$0xff] %v4863
              $region117: #{mlp_decoder_forward.1} parent=111 // loop_footer
                %s4842 = sadd.s32 1, %s4838
              $region118: #{mlp_decoder_forward.1} parent=111 // loop_footer_branch
                %4837 = sbr.rel target = $region114
              $region119: #{mlp_decoder_forward.1} parent=111 // loop_exit
                _
            $region112: #{mlp_decoder_forward.1} parent=103 // pred_fallthru
              _
          $region104: #{mlp_decoder_forward.1} parent=99 // pred_fallthru
            _
          %4897 = vnop
        $region100: #{mlp_decoder_forward.1} parent=95 // pred_fallthru
          _
      $region96: #{mlp_decoder_forward.1} parent=5 // pred_fallthru
        _
      %p4898 = scmp.le.s32.totalorder 2, %s25
      // Predicated region
      $region135: #{mlp_decoder_forward.1} parent=5 // pred_check
        %p4899 = pneg %p4898
      $region136: #{mlp_decoder_forward.1} parent=5 // pred_check_branch
        %4901 = sbr.rel (%p4899) target = $region138
      $region137: #{mlp_decoder_forward.1} parent=5 // pred_region
        %s4902 = ssub.s32 %s25, 2
        // Predicated region
        $region139: #{mlp_decoder_forward.1} parent=137 // pred_check
          %p4903 = pneg %p463
        $region140: #{mlp_decoder_forward.1} parent=137 // pred_check_branch
          %4905 = sbr.rel (%p4903) target = $region142
        $region141: #{mlp_decoder_forward.1} parent=137 // pred_region
          %s4906 = sand.u32 %s448, 1
          %s4907 = sand.u32 %s448, 1
          %s4908 = smul.addr %s4907, 80
          %s4909 = scalar_lea.vmem [#allocation2], %s4908
        $region142: #{mlp_decoder_forward.1} parent=137 // pred_fallthru
          _
      $region138: #{mlp_decoder_forward.1} parent=5 // pred_fallthru
        _
    $region6: #{mlp_decoder_forward.1} parent=1 // loop_footer
      %s29 = sadd.s32 1, %s25
    $region7: #{mlp_decoder_forward.1} parent=1 // loop_footer_branch
      %24 = sbr.rel target = $region3
    $region8: #{mlp_decoder_forward.1} parent=1 // loop_exit
      _

</llo_original>
